<compile_context>
chip_gen: v7x
topology: tpu7x:2x2x1
jax: 0.10.0
libtpu: 0.0.40
codegen_flags: <defaults>
</compile_context>

<pallas_src>
import functools

import jax
import jax.numpy as jnp
from jax.experimental import pallas as pl
from jax.experimental.pallas import tpu as pltpu

_EPS = 1e-5  # nn.LayerNorm default


def _layer_norm(y, gamma, beta):
    mu = jnp.mean(y, axis=-1, keepdims=True)
    var = jnp.mean(jnp.square(y - mu), axis=-1, keepdims=True)
    return (y - mu) * jax.lax.rsqrt(var + _EPS) * gamma + beta


def _encoder_layer_kernel(x_ref, wqkv_ref, wmh_ref, wff_ref, vec_ref, o_ref,
                          *, seq_len, n_heads, dim_attn):
    T, H, A = seq_len, n_heads, dim_attn
    M, D = x_ref.shape            # M = B_TILE * T rows per grid step
    bt = M // T

    x = x_ref[...].astype(jnp.float32)                                   # (M, D)

    # --- fused Q/K/V projection for every head: one MXU matmul ----------------
    qkv = jnp.dot(x, wqkv_ref[...], preferred_element_type=jnp.float32)  # (M, H*(2A+D))
    qkv3 = qkv.reshape(bt, T, H * (2 * A + D))

    scale = 1.0 / (float(A) ** 0.5)
    heads = []
    for h in range(H):                                                   # H small & static
        q = qkv3[:, :, h * A:(h + 1) * A]                                # (bt, T, A)
        k = qkv3[:, :, H * A + h * A:H * A + (h + 1) * A]                # (bt, T, A)
        v = qkv3[:, :, 2 * H * A + h * D:2 * H * A + (h + 1) * D]        # (bt, T, D)
        # contract on the last axis of both operands -> no explicit transpose
        s = jnp.einsum('bta,bsa->bts', q, k,
                       preferred_element_type=jnp.float32) * scale       # (bt, T, T)
        m = jnp.max(s, axis=-1, keepdims=True)
        p = jnp.exp(s - m)
        p = p * pl.reciprocal(jnp.sum(p, axis=-1, keepdims=True), approx=False)
        heads.append(jnp.einsum('bts,bsd->btd', p, v,
                                preferred_element_type=jnp.float32))     # (bt, T, D)
    cat = heads[0] if H == 1 else jnp.concatenate(heads, axis=-1)        # (bt, T, H*D)
    a = jnp.dot(cat.reshape(M, H * D), wmh_ref[...],
                preferred_element_type=jnp.float32)                      # (M, D)

    # packed small vectors: rows = [fc2_b, fc1_b, g1, b1, g2, b2]
    fc2_b, fc1_b = vec_ref[0:1, :], vec_ref[1:2, :]
    g1, b1 = vec_ref[2:3, :], vec_ref[3:4, :]
    g2, b2 = vec_ref[4:5, :], vec_ref[5:6, :]

    # --- residual + LayerNorm 1 ------------------------------------------------
    y = _layer_norm(x + a, g1, b1)

    # --- position-wise FF: fc1(ELU(fc2(y))) ------------------------------------
    h2 = jnp.dot(y, wff_ref[0], preferred_element_type=jnp.float32) + fc2_b
    h2 = jnp.where(h2 > 0, h2, jnp.exp(h2) - 1.0)                        # ELU(alpha=1)
    a2 = jnp.dot(h2, wff_ref[1], preferred_element_type=jnp.float32) + fc1_b

    # --- residual + LayerNorm 2 ------------------------------------------------
    z = _layer_norm(y + a2, g2, b2)
    o_ref[...] = z.astype(o_ref.dtype)


def _pick_b_tile(B, T):
    """Batch-tile heuristic: >=128 MXU rows per step, keep >=2 parallel grid steps."""
    divs = [d for d in range(1, B + 1) if B % d == 0]
    cand = [d for d in divs if d * T >= 128]
    bt = cand[0] if cand else divs[-1]
    if B // bt < 2:                       # leave work for both v7x TensorCores if possible
        smaller = [d for d in divs if d < bt and d * T >= 64]
        if smaller:
            bt = smaller[-1]
    return bt


def prepare_params(params):
    """One-time weight fusion / permutation (hoisted out of the per-call path)."""
    H, D, A = params["wq"].shape
    # Fold the PyTorch stack(dim=-1).flatten(2) interleave into a row permutation of the
    # multi-head output projection: contiguous row h*D + d <- interleaved row d*H + h.
    r = jnp.arange(H * D)
    wmh_perm = params["wmh"][(r % D) * H + (r // D)]                     # (H*D, D)
    # Single fused Q/K/V weight, columns = [Q_0..Q_{H-1} | K_0..K_{H-1} | V_0..V_{H-1}].
    wqkv = jnp.concatenate(
        [params["wq"][h] for h in range(H)] +
        [params["wk"][h] for h in range(H)] +
        [params["wv"][h] for h in range(H)], axis=1)                     # (D, H*(2A+D))
    wff = jnp.stack([params["fc2_w"], params["fc1_w"]], axis=0)          # (2, D, D)
    vecs = jnp.concatenate([params["fc2_b"], params["fc1_b"],
                            params["g1"], params["b1"],
                            params["g2"], params["b2"]], axis=0)         # (6, D)
    return {"wqkv": wqkv, "wmh": wmh_perm, "wff": wff, "vecs": vecs,
            "n_heads": int(H), "dim_attn": int(A), "dim_val": int(D)}


def time_step_encoder_layer(x, prep, b_tile=None):
    """x: (B, T, D) float32; prep: output of prepare_params."""
    B, T, D = x.shape
    H, A = prep["n_heads"], prep["dim_attn"]
    bt = b_tile if b_tile is not None else _pick_b_tile(B, T)
    assert B % bt == 0, "batch must be divisible by the batch tile"
    rows = bt * T

    kernel = functools.partial(_encoder_layer_kernel,
                               seq_len=T, n_heads=H, dim_attn=A)
    full = lambda arr: pl.BlockSpec(arr.shape, lambda b: (0,) * arr.ndim)

    x2d = x.reshape(B * T, D)   # free row-major view; kernel works on (bt*T, D) slabs
    out2d = pl.pallas_call(
        kernel,
        out_shape=jax.ShapeDtypeStruct((B * T, D), x.dtype),
        grid_spec=pltpu.PrefetchScalarGridSpec(
            num_scalar_prefetch=0,
            grid=(B // bt,),
            in_specs=[
                pl.BlockSpec((rows, D), lambda b: (b, 0)),   # x slab
                full(prep["wqkv"]),                          # (D, H*(2A+D))
                full(prep["wmh"]),                           # (H*D, D)
                full(prep["wff"]),                           # (2, D, D)
                full(prep["vecs"]),                          # (6, D)
            ],
            out_specs=pl.BlockSpec((rows, D), lambda b: (b, 0)),
        ),
        compiler_params=pltpu.CompilerParams(
            dimension_semantics=("parallel",)),
    )(x2d, prep["wqkv"], prep["wmh"], prep["wff"], prep["vecs"])
    return out2d.reshape(B, T, D)


def init_params(key, dim_val, dim_attn, n_heads):
    """Deterministic synthetic parameters (weights stored as (in, out))."""
    ks = jax.random.split(key, 8)
    s = 0.1
    return {
        "wq": s * jax.random.normal(ks[0], (n_heads, dim_val, dim_attn), jnp.float32),
        "wk": s * jax.random.normal(ks[1], (n_heads, dim_val, dim_attn), jnp.float32),
        "wv": s * jax.random.normal(ks[2], (n_heads, dim_val, dim_val), jnp.float32),
        "wmh": s * jax.random.normal(ks[3], (n_heads * dim_val, dim_val), jnp.float32),
        "fc1_w": s * jax.random.normal(ks[4], (dim_val, dim_val), jnp.float32),
        "fc1_b": s * jax.random.normal(ks[5], (1, dim_val), jnp.float32),
        "fc2_w": s * jax.random.normal(ks[6], (dim_val, dim_val), jnp.float32),
        "fc2_b": s * jax.random.normal(ks[7], (1, dim_val), jnp.float32),
        "g1": jnp.ones((1, dim_val), jnp.float32),
        "b1": jnp.zeros((1, dim_val), jnp.float32),
        "g2": jnp.ones((1, dim_val), jnp.float32),
        "b2": jnp.zeros((1, dim_val), jnp.float32),
    }


def reference_forward(x, params):
    """Pure-JAX reference with identical PyTorch semantics (for verification)."""
    H, D, A = params["wq"].shape
    heads = []
    for h in range(H):
        q = x @ params["wq"][h]
        k = x @ params["wk"][h]
        v = x @ params["wv"][h]
        s = (q @ jnp.swapaxes(k, -1, -2)) / jnp.sqrt(jnp.float32(A))
        p = jax.nn.softmax(s, axis=-1)
        heads.append(p @ v)
    a = jnp.stack(heads, axis=-1).reshape(x.shape[0], x.shape[1], D * H)  # interleaved
    a = a @ params["wmh"]
    ln = lambda y, g, b: (y - y.mean(-1, keepdims=True)) / jnp.sqrt(
        y.var(-1, keepdims=True) + _EPS) * g + b
    y = ln(x + a, params["g1"], params["b1"])
    h2 = y @ params["fc2_w"] + params["fc2_b"]
    h2 = jnp.where(h2 > 0, h2, jnp.exp(h2) - 1.0)
    a2 = h2 @ params["fc1_w"] + params["fc1_b"]
    return ln(y + a2, params["g2"], params["b2"])


if __name__ == "__main__":
    B, T, dim_val, dim_attn, n_heads = 16, 16, 32, 32, 2
    key = jax.random.PRNGKey(0)
    kx, kp = jax.random.split(key)
    x = jax.random.normal(kx, (B, T, dim_val), jnp.float32)
    params = init_params(kp, dim_val, dim_attn, n_heads)
    prep = prepare_params(params)          # one-time fusion/permutation of weights

    out = jax.block_until_ready(time_step_encoder_layer(x, prep))

    ref = reference_forward(x, params)
    assert out.shape == (B, T, dim_val)
    assert jnp.allclose(out, ref, atol=1e-4, rtol=1e-4), "mismatch vs JAX reference"
    print("KERNEL_OK")
</pallas_src>

<mosaic_0001>
module attributes {stable_mosaic.version = 11 : i64} {
  func.func @_encoder_layer_kernel(%arg0: i32, %arg1: memref<128x32xf32, #tpu.memory_space<vmem>>, %arg2: memref<32x192xf32, #tpu.memory_space<vmem>>, %arg3: memref<64x32xf32, #tpu.memory_space<vmem>>, %arg4: memref<2x32x32xf32, #tpu.memory_space<vmem>>, %arg5: memref<6x32xf32, #tpu.memory_space<vmem>>, %arg6: memref<128x32xf32, #tpu.memory_space<vmem>>) attributes {dimension_semantics = [#tpu.dimension_semantics<parallel>], iteration_bounds = array<i64: 2>, scalar_prefetch = 0 : i64, scratch_operands = 0 : i64, tpu.core_type = #tpu.core_type<tc>, window_params = [{transform_indices = @transform_0, window_bounds = array<i64: 128, 32>}, {pipeline_mode = #tpu.pipeline_mode<synchronous>, transform_indices = @transform_1, window_bounds = array<i64: 32, 192>}, {pipeline_mode = #tpu.pipeline_mode<synchronous>, transform_indices = @transform_2, window_bounds = array<i64: 64, 32>}, {pipeline_mode = #tpu.pipeline_mode<synchronous>, transform_indices = @transform_3, window_bounds = array<i64: 2, 32, 32>}, {pipeline_mode = #tpu.pipeline_mode<synchronous>, transform_indices = @transform_4, window_bounds = array<i64: 6, 32>}, {transform_indices = @transform_5, window_bounds = array<i64: 128, 32>}]} {
    %c0 = arith.constant 0 : index
    %c0_0 = arith.constant 0 : index
    %0 = vector.load %arg1[%c0, %c0_0] : memref<128x32xf32, #tpu.memory_space<vmem>>, vector<128x32xf32>
    %c0_1 = arith.constant 0 : index
    %c0_2 = arith.constant 0 : index
    %1 = vector.load %arg2[%c0_1, %c0_2] : memref<32x192xf32, #tpu.memory_space<vmem>>, vector<32x192xf32>
    %cst = arith.constant dense<0.000000e+00> : vector<128x192xf32>
    %2 = tpu.matmul %0, %1, %cst {dimension_numbers = #tpu.dot_dimension_numbers<[1], [0], [0], [1], [0, 0, 1, 1], [], []>} : vector<128x32xf32>, vector<32x192xf32>, vector<128x192xf32> -> vector<128x192xf32>
    %3 = vector.shape_cast %2 : vector<128x192xf32> to vector<8x16x192xf32>
    %4 = vector.extract_strided_slice %3 {offsets = [0, 0, 0], sizes = [8, 16, 32], strides = [1, 1, 1]} : vector<8x16x192xf32> to vector<8x16x32xf32>
    %5 = vector.extract_strided_slice %3 {offsets = [0, 0, 64], sizes = [8, 16, 32], strides = [1, 1, 1]} : vector<8x16x192xf32> to vector<8x16x32xf32>
    %6 = vector.extract_strided_slice %3 {offsets = [0, 0, 128], sizes = [8, 16, 32], strides = [1, 1, 1]} : vector<8x16x192xf32> to vector<8x16x32xf32>
    "tpu.trace_start"() <{level = 10 : i32, message = "bta,bsa->bts"}> : () -> ()
    %cst_3 = arith.constant dense<0.000000e+00> : vector<8x16x16xf32>
    %7 = tpu.matmul %4, %5, %cst_3 {dimension_numbers = #tpu.dot_dimension_numbers<[2], [2], [1], [1], [0, 0, 0, 1, 1, 1], [0], [0]>} : vector<8x16x32xf32>, vector<8x16x32xf32>, vector<8x16x16xf32> -> vector<8x16x16xf32>
    "tpu.trace_stop"() : () -> ()
    %cst_4 = arith.constant 0.176776692 : f32
    %8 = vector.broadcast %cst_4 : f32 to vector<8x16x16xf32>
    %9 = arith.mulf %7, %8 : vector<8x16x16xf32>
    %cst_5 = arith.constant dense<0xFF800000> : vector<8x16xf32>
    %10 = vector.multi_reduction <maximumf>, %9, %cst_5 [2] : vector<8x16x16xf32> to vector<8x16xf32>
    %11 = vector.shape_cast %10 : vector<8x16xf32> to vector<8x16x1xf32>
    %12 = vector.broadcast %11 : vector<8x16x1xf32> to vector<8x16x16xf32>
    %13 = arith.subf %9, %12 : vector<8x16x16xf32>
    %14 = math.exp %13 : vector<8x16x16xf32>
    %cst_6 = arith.constant dense<0.000000e+00> : vector<8x16xf32>
    %15 = vector.multi_reduction <add>, %14, %cst_6 [2] : vector<8x16x16xf32> to vector<8x16xf32>
    %16 = vector.shape_cast %15 : vector<8x16xf32> to vector<8x16x1xf32>
    %17 = tpu.reciprocal %16 : vector<8x16x1xf32> -> vector<8x16x1xf32>
    %18 = vector.broadcast %17 : vector<8x16x1xf32> to vector<8x16x16xf32>
    %19 = arith.mulf %14, %18 : vector<8x16x16xf32>
    "tpu.trace_start"() <{level = 10 : i32, message = "bts,bsd->btd"}> : () -> ()
    %cst_7 = arith.constant dense<0.000000e+00> : vector<8x16x32xf32>
    %20 = tpu.matmul %19, %6, %cst_7 {dimension_numbers = #tpu.dot_dimension_numbers<[2], [1], [1], [2], [0, 0, 0, 1, 1, 2], [0], [0]>} : vector<8x16x16xf32>, vector<8x16x32xf32>, vector<8x16x32xf32> -> vector<8x16x32xf32>
    "tpu.trace_stop"() : () -> ()
    %21 = vector.extract_strided_slice %3 {offsets = [0, 0, 32], sizes = [8, 16, 32], strides = [1, 1, 1]} : vector<8x16x192xf32> to vector<8x16x32xf32>
    %22 = vector.extract_strided_slice %3 {offsets = [0, 0, 96], sizes = [8, 16, 32], strides = [1, 1, 1]} : vector<8x16x192xf32> to vector<8x16x32xf32>
    %23 = vector.extract_strided_slice %3 {offsets = [0, 0, 160], sizes = [8, 16, 32], strides = [1, 1, 1]} : vector<8x16x192xf32> to vector<8x16x32xf32>
    "tpu.trace_start"() <{level = 10 : i32, message = "bta,bsa->bts"}> : () -> ()
    %cst_8 = arith.constant dense<0.000000e+00> : vector<8x16x16xf32>
    %24 = tpu.matmul %21, %22, %cst_8 {dimension_numbers = #tpu.dot_dimension_numbers<[2], [2], [1], [1], [0, 0, 0, 1, 1, 1], [0], [0]>} : vector<8x16x32xf32>, vector<8x16x32xf32>, vector<8x16x16xf32> -> vector<8x16x16xf32>
    "tpu.trace_stop"() : () -> ()
    %cst_9 = arith.constant 0.176776692 : f32
    %25 = vector.broadcast %cst_9 : f32 to vector<8x16x16xf32>
    %26 = arith.mulf %24, %25 : vector<8x16x16xf32>
    %cst_10 = arith.constant dense<0xFF800000> : vector<8x16xf32>
    %27 = vector.multi_reduction <maximumf>, %26, %cst_10 [2] : vector<8x16x16xf32> to vector<8x16xf32>
    %28 = vector.shape_cast %27 : vector<8x16xf32> to vector<8x16x1xf32>
    %29 = vector.broadcast %28 : vector<8x16x1xf32> to vector<8x16x16xf32>
    %30 = arith.subf %26, %29 : vector<8x16x16xf32>
    %31 = math.exp %30 : vector<8x16x16xf32>
    %cst_11 = arith.constant dense<0.000000e+00> : vector<8x16xf32>
    %32 = vector.multi_reduction <add>, %31, %cst_11 [2] : vector<8x16x16xf32> to vector<8x16xf32>
    %33 = vector.shape_cast %32 : vector<8x16xf32> to vector<8x16x1xf32>
    %34 = tpu.reciprocal %33 : vector<8x16x1xf32> -> vector<8x16x1xf32>
    %35 = vector.broadcast %34 : vector<8x16x1xf32> to vector<8x16x16xf32>
    %36 = arith.mulf %31, %35 : vector<8x16x16xf32>
    "tpu.trace_start"() <{level = 10 : i32, message = "bts,bsd->btd"}> : () -> ()
    %cst_12 = arith.constant dense<0.000000e+00> : vector<8x16x32xf32>
    %37 = tpu.matmul %36, %23, %cst_12 {dimension_numbers = #tpu.dot_dimension_numbers<[2], [1], [1], [2], [0, 0, 0, 1, 1, 2], [0], [0]>} : vector<8x16x16xf32>, vector<8x16x32xf32>, vector<8x16x32xf32> -> vector<8x16x32xf32>
    "tpu.trace_stop"() : () -> ()
    %38 = tpu.concatenate %20, %37 in 2 : vector<8x16x32xf32>, vector<8x16x32xf32> -> vector<8x16x64xf32>
    %39 = vector.shape_cast %38 : vector<8x16x64xf32> to vector<128x64xf32>
    %c0_13 = arith.constant 0 : index
    %c0_14 = arith.constant 0 : index
    %40 = vector.load %arg3[%c0_13, %c0_14] : memref<64x32xf32, #tpu.memory_space<vmem>>, vector<64x32xf32>
    %cst_15 = arith.constant dense<0.000000e+00> : vector<128x32xf32>
    %41 = tpu.matmul %39, %40, %cst_15 {dimension_numbers = #tpu.dot_dimension_numbers<[1], [0], [0], [1], [0, 0, 1, 1], [], []>} : vector<128x64xf32>, vector<64x32xf32>, vector<128x32xf32> -> vector<128x32xf32>
    %c0_16 = arith.constant 0 : index
    %c0_17 = arith.constant 0 : index
    %42 = vector.load %arg5[%c0_16, %c0_17] : memref<6x32xf32, #tpu.memory_space<vmem>>, vector<1x32xf32>
    %c1 = arith.constant 1 : index
    %c0_18 = arith.constant 0 : index
    %43 = vector.load %arg5[%c1, %c0_18] : memref<6x32xf32, #tpu.memory_space<vmem>>, vector<1x32xf32>
    %c2 = arith.constant 2 : index
    %c0_19 = arith.constant 0 : index
    %44 = vector.load %arg5[%c2, %c0_19] : memref<6x32xf32, #tpu.memory_space<vmem>>, vector<1x32xf32>
    %c3 = arith.constant 3 : index
    %c0_20 = arith.constant 0 : index
    %45 = vector.load %arg5[%c3, %c0_20] : memref<6x32xf32, #tpu.memory_space<vmem>>, vector<1x32xf32>
    %c4 = arith.constant 4 : index
    %c0_21 = arith.constant 0 : index
    %46 = vector.load %arg5[%c4, %c0_21] : memref<6x32xf32, #tpu.memory_space<vmem>>, vector<1x32xf32>
    %c5 = arith.constant 5 : index
    %c0_22 = arith.constant 0 : index
    %47 = vector.load %arg5[%c5, %c0_22] : memref<6x32xf32, #tpu.memory_space<vmem>>, vector<1x32xf32>
    %48 = arith.addf %0, %41 : vector<128x32xf32>
    %cst_23 = arith.constant dense<0.000000e+00> : vector<128xf32>
    %49 = vector.multi_reduction <add>, %48, %cst_23 [1] : vector<128x32xf32> to vector<128xf32>
    %50 = vector.shape_cast %49 : vector<128xf32> to vector<128x1xf32>
    %cst_24 = arith.constant 3.200000e+01 : f32
    %51 = vector.broadcast %cst_24 : f32 to vector<128x1xf32>
    %52 = arith.divf %50, %51 : vector<128x1xf32>
    %53 = vector.broadcast %52 : vector<128x1xf32> to vector<128x32xf32>
    %54 = arith.subf %48, %53 : vector<128x32xf32>
    %55 = arith.mulf %54, %54 : vector<128x32xf32>
    %cst_25 = arith.constant dense<0.000000e+00> : vector<128xf32>
    %56 = vector.multi_reduction <add>, %55, %cst_25 [1] : vector<128x32xf32> to vector<128xf32>
    %57 = vector.shape_cast %56 : vector<128xf32> to vector<128x1xf32>
    %cst_26 = arith.constant 3.200000e+01 : f32
    %58 = vector.broadcast %cst_26 : f32 to vector<128x1xf32>
    %59 = arith.divf %57, %58 : vector<128x1xf32>
    %60 = vector.broadcast %52 : vector<128x1xf32> to vector<128x32xf32>
    %61 = arith.subf %48, %60 : vector<128x32xf32>
    %cst_27 = arith.constant 9.99999974E-6 : f32
    %62 = vector.broadcast %cst_27 : f32 to vector<128x1xf32>
    %63 = arith.addf %59, %62 : vector<128x1xf32>
    %64 = math.rsqrt %63 : vector<128x1xf32>
    %65 = vector.broadcast %64 : vector<128x1xf32> to vector<128x32xf32>
    %66 = arith.mulf %61, %65 : vector<128x32xf32>
    %67 = vector.broadcast %44 : vector<1x32xf32> to vector<128x32xf32>
    %68 = arith.mulf %66, %67 : vector<128x32xf32>
    %69 = vector.broadcast %45 : vector<1x32xf32> to vector<128x32xf32>
    %70 = arith.addf %68, %69 : vector<128x32xf32>
    %c0_28 = arith.constant 0 : index
    %c0_29 = arith.constant 0 : index
    %c0_30 = arith.constant 0 : index
    %71 = vector.load %arg4[%c0_28, %c0_29, %c0_30] : memref<2x32x32xf32, #tpu.memory_space<vmem>>, vector<1x32x32xf32>
    %72 = vector.shape_cast %71 : vector<1x32x32xf32> to vector<32x32xf32>
    %cst_31 = arith.constant dense<0.000000e+00> : vector<128x32xf32>
    %73 = tpu.matmul %70, %72, %cst_31 {dimension_numbers = #tpu.dot_dimension_numbers<[1], [0], [0], [1], [0, 0, 1, 1], [], []>} : vector<128x32xf32>, vector<32x32xf32>, vector<128x32xf32> -> vector<128x32xf32>
    %74 = vector.broadcast %42 : vector<1x32xf32> to vector<128x32xf32>
    %75 = arith.addf %73, %74 : vector<128x32xf32>
    %cst_32 = arith.constant 0.000000e+00 : f32
    %76 = vector.broadcast %cst_32 : f32 to vector<128x32xf32>
    %77 = arith.cmpf ogt, %75, %76 : vector<128x32xf32>
    %78 = math.exp %75 : vector<128x32xf32>
    %cst_33 = arith.constant 1.000000e+00 : f32
    %79 = vector.broadcast %cst_33 : f32 to vector<128x32xf32>
    %80 = arith.subf %78, %79 : vector<128x32xf32>
    %81 = arith.select %77, %75, %80 : vector<128x32xi1>, vector<128x32xf32>
    %c1_34 = arith.constant 1 : index
    %c0_35 = arith.constant 0 : index
    %c0_36 = arith.constant 0 : index
    %82 = vector.load %arg4[%c1_34, %c0_35, %c0_36] : memref<2x32x32xf32, #tpu.memory_space<vmem>>, vector<1x32x32xf32>
    %83 = vector.shape_cast %82 : vector<1x32x32xf32> to vector<32x32xf32>
    %cst_37 = arith.constant dense<0.000000e+00> : vector<128x32xf32>
    %84 = tpu.matmul %81, %83, %cst_37 {dimension_numbers = #tpu.dot_dimension_numbers<[1], [0], [0], [1], [0, 0, 1, 1], [], []>} : vector<128x32xf32>, vector<32x32xf32>, vector<128x32xf32> -> vector<128x32xf32>
    %85 = vector.broadcast %43 : vector<1x32xf32> to vector<128x32xf32>
    %86 = arith.addf %84, %85 : vector<128x32xf32>
    %87 = arith.addf %70, %86 : vector<128x32xf32>
    %cst_38 = arith.constant dense<0.000000e+00> : vector<128xf32>
    %88 = vector.multi_reduction <add>, %87, %cst_38 [1] : vector<128x32xf32> to vector<128xf32>
    %89 = vector.shape_cast %88 : vector<128xf32> to vector<128x1xf32>
    %cst_39 = arith.constant 3.200000e+01 : f32
    %90 = vector.broadcast %cst_39 : f32 to vector<128x1xf32>
    %91 = arith.divf %89, %90 : vector<128x1xf32>
    %92 = vector.broadcast %91 : vector<128x1xf32> to vector<128x32xf32>
    %93 = arith.subf %87, %92 : vector<128x32xf32>
    %94 = arith.mulf %93, %93 : vector<128x32xf32>
    %cst_40 = arith.constant dense<0.000000e+00> : vector<128xf32>
    %95 = vector.multi_reduction <add>, %94, %cst_40 [1] : vector<128x32xf32> to vector<128xf32>
    %96 = vector.shape_cast %95 : vector<128xf32> to vector<128x1xf32>
    %cst_41 = arith.constant 3.200000e+01 : f32
    %97 = vector.broadcast %cst_41 : f32 to vector<128x1xf32>
    %98 = arith.divf %96, %97 : vector<128x1xf32>
    %99 = vector.broadcast %91 : vector<128x1xf32> to vector<128x32xf32>
    %100 = arith.subf %87, %99 : vector<128x32xf32>
    %cst_42 = arith.constant 9.99999974E-6 : f32
    %101 = vector.broadcast %cst_42 : f32 to vector<128x1xf32>
    %102 = arith.addf %98, %101 : vector<128x1xf32>
    %103 = math.rsqrt %102 : vector<128x1xf32>
    %104 = vector.broadcast %103 : vector<128x1xf32> to vector<128x32xf32>
    %105 = arith.mulf %100, %104 : vector<128x32xf32>
    %106 = vector.broadcast %46 : vector<1x32xf32> to vector<128x32xf32>
    %107 = arith.mulf %105, %106 : vector<128x32xf32>
    %108 = vector.broadcast %47 : vector<1x32xf32> to vector<128x32xf32>
    %109 = arith.addf %107, %108 : vector<128x32xf32>
    %c0_43 = arith.constant 0 : index
    %c0_44 = arith.constant 0 : index
    %110 = vector.load %arg6[%c0_43, %c0_44] : memref<128x32xf32, #tpu.memory_space<vmem>>, vector<128x32xf32>
    tpu.vector_store %arg6[%c0_43, %c0_44], %109 {strides = array<i32>} : memref<128x32xf32, #tpu.memory_space<vmem>>, vector<128x32xf32>,
    return
  }
  func.func @transform_0(%arg0: i32) -> (i32, i32) {
    %c0_i32 = arith.constant 0 : i32
    %c0_i32_0 = arith.constant 0 : i32
    return %arg0, %c0_i32 : i32, i32
  }
  func.func @transform_1(%arg0: i32) -> (i32, i32) {
    %c0_i32 = arith.constant 0 : i32
    %c0_i32_0 = arith.constant 0 : i32
    %c0_i32_1 = arith.constant 0 : i32
    return %c0_i32, %c0_i32_0 : i32, i32
  }
  func.func @transform_2(%arg0: i32) -> (i32, i32) {
    %c0_i32 = arith.constant 0 : i32
    %c0_i32_0 = arith.constant 0 : i32
    %c0_i32_1 = arith.constant 0 : i32
    return %c0_i32, %c0_i32_0 : i32, i32
  }
  func.func @transform_3(%arg0: i32) -> (i32, i32, i32) {
    %c0_i32 = arith.constant 0 : i32
    %c0_i32_0 = arith.constant 0 : i32
    %c0_i32_1 = arith.constant 0 : i32
    %c0_i32_2 = arith.constant 0 : i32
    return %c0_i32, %c0_i32_0, %c0_i32_1 : i32, i32, i32
  }
  func.func @transform_4(%arg0: i32) -> (i32, i32) {
    %c0_i32 = arith.constant 0 : i32
    %c0_i32_0 = arith.constant 0 : i32
    %c0_i32_1 = arith.constant 0 : i32
    return %c0_i32, %c0_i32_0 : i32, i32
  }
  func.func @transform_5(%arg0: i32) -> (i32, i32) {
    %c0_i32 = arith.constant 0 : i32
    %c0_i32_0 = arith.constant 0 : i32
    return %arg0, %c0_i32 : i32, i32
  }
}

</mosaic_0001>

<llo_original>
// kernel: tpu_custom_call.1
$region0: #{tpu_custom_call.1}
  #allocation0 [shape = 'u32[]', space=smem, size = 0x4, offset = 0x4, fixed_abs, tag = 'smem constant byte address 0x4 - core index']
  #allocation1 [shape = 'u32[144,128]{1,0:T(1,128)}', space=vmem, size = 0x12000, scoped, tag = 'internal scratch']
  %s0 = inlined_call_operand.vmem [shape: f32[256,32], index: 0, kind: input, shape index: {}]
  %s1 = inlined_call_operand.vmem [shape: f32[32,192], index: 1, kind: input, shape index: {}]
  %s2 = inlined_call_operand.vmem [shape: f32[64,32], index: 2, kind: input, shape index: {}]
  %s3 = inlined_call_operand.vmem [shape: f32[2,32,32], index: 3, kind: input, shape index: {}]
  %s4 = inlined_call_operand.vmem [shape: f32[6,32], index: 4, kind: input, shape index: {}]
  %s5 = inlined_call_operand.vmem [shape: f32[256,32], index: 5, kind: output, shape index: {}]
  %s6 = sld [smem:[#allocation0]]
  $region53: #{tpu_custom_call.1} parent=0
    _
  %s8 = ssub.s32 1, %s6
  %s9 = scalar_select 0, %s8, %s6
  loop: start=0, step=1, limit=4
  $region2: #{tpu_custom_call.1} parent=0 // loop_pre_header
    _
  $region3: #{tpu_custom_call.1} parent=0 // loop_header
    %s11 = sphi 0, %s15
    %p12 = scmp.ge.s32.totalorder %s11, 4
    %s21 = sphi 0, %s23
    %s24 = sphi 0, %s21
    %s25 = sphi 0, %s24
    %s41 = sphi 0, %s25
    %s45 = sphi 0, %s45
    %s47 = sphi 0, %s45
    %s48 = sphi 0, %s47
    %s62 = sphi 0, %s48
    %s66 = sphi 0, %s66
    %s68 = sphi 0, %s66
    %s69 = sphi 0, %s68
    %s83 = sphi 0, %s69
    %s87 = sphi 0, %s87
    %s89 = sphi 0, %s87
    %s90 = sphi 0, %s89
    %s104 = sphi 0, %s90
    %s108 = sphi 0, %s108
    %s110 = sphi 0, %s108
    %s111 = sphi 0, %s110
    %s125 = sphi 0, %s111
    %s131 = sphi 0, %s133
    %s134 = sphi 0, %s131
    %s135 = sphi 0, %s134
    %s151 = sphi 0, %s135
  $region4: #{tpu_custom_call.1} parent=0 // loop_header_branch
    %14 = sbr.rel (%p12) target = $region8
  $region5: #{tpu_custom_call.1} parent=0 // loop_body
    %s16 = ssub.s32 %s11, 1
    %s17 = ssub.s32 %s11, 2
    %s18 = sadd.s32 %s11, 1
    %s19 = ssub.s32 %s11, %s18
    %p20 = scmp.eq.s32.totalorder %s19, 0
    %s22 = sadd.s32 %s21, 1
    %s23 = scalar_select %p20, %s21, %s22
    %p26 = pneg %p20
    %p27 = scmp.eq.s32.totalorder %s11, 1
    %p28 = por %p26, %p27
    %p29 = scmp.ne.s32.totalorder %s21, %s24
    %p30 = scmp.eq.s32.totalorder %s11, 0
    %p31 = por %p29, %p30
    %p32 = scmp.ne.s32.totalorder %s21, %s24
    %p33 = scmp.eq.s32.totalorder %s16, 1
    %p34 = por %p32, %p33
    %p35 = scmp.ne.s32.totalorder %s24, %s25
    %p36 = scmp.eq.s32.totalorder %s16, 0
    %p37 = por %p35, %p36
    %p38 = scmp.ne.s32.totalorder %s24, %s25
    %p39 = scmp.eq.s32.totalorder %s17, 1
    %p40 = por %p38, %p39
    %p42 = scmp.ne.s32.totalorder %s25, %s41
    %p43 = scmp.eq.s32.totalorder %s17, 0
    %p44 = por %p42, %p43
    %s46 = sadd.s32 %s45, 1
    %p49 = scmp.eq.s32.totalorder %s11, 1
    %p50 = scmp.ne.s32.totalorder %s45, %s47
    %p51 = scmp.eq.s32.totalorder %s11, 0
    %p52 = por %p50, %p51
    %p53 = scmp.ne.s32.totalorder %s45, %s47
    %p54 = scmp.eq.s32.totalorder %s16, 1
    %p55 = por %p53, %p54
    %p56 = scmp.ne.s32.totalorder %s47, %s48
    %p57 = scmp.eq.s32.totalorder %s16, 0
    %p58 = por %p56, %p57
    %p59 = scmp.ne.s32.totalorder %s47, %s48
    %p60 = scmp.eq.s32.totalorder %s17, 1
    %p61 = por %p59, %p60
    %p63 = scmp.ne.s32.totalorder %s48, %s62
    %p64 = scmp.eq.s32.totalorder %s17, 0
    %p65 = por %p63, %p64
    %s67 = sadd.s32 %s66, 1
    %p70 = scmp.eq.s32.totalorder %s11, 1
    %p71 = scmp.ne.s32.totalorder %s66, %s68
    %p72 = scmp.eq.s32.totalorder %s11, 0
    %p73 = por %p71, %p72
    %p74 = scmp.ne.s32.totalorder %s66, %s68
    %p75 = scmp.eq.s32.totalorder %s16, 1
    %p76 = por %p74, %p75
    %p77 = scmp.ne.s32.totalorder %s68, %s69
    %p78 = scmp.eq.s32.totalorder %s16, 0
    %p79 = por %p77, %p78
    %p80 = scmp.ne.s32.totalorder %s68, %s69
    %p81 = scmp.eq.s32.totalorder %s17, 1
    %p82 = por %p80, %p81
    %p84 = scmp.ne.s32.totalorder %s69, %s83
    %p85 = scmp.eq.s32.totalorder %s17, 0
    %p86 = por %p84, %p85
    %s88 = sadd.s32 %s87, 1
    %p91 = scmp.eq.s32.totalorder %s11, 1
    %p92 = scmp.ne.s32.totalorder %s87, %s89
    %p93 = scmp.eq.s32.totalorder %s11, 0
    %p94 = por %p92, %p93
    %p95 = scmp.ne.s32.totalorder %s87, %s89
    %p96 = scmp.eq.s32.totalorder %s16, 1
    %p97 = por %p95, %p96
    %p98 = scmp.ne.s32.totalorder %s89, %s90
    %p99 = scmp.eq.s32.totalorder %s16, 0
    %p100 = por %p98, %p99
    %p101 = scmp.ne.s32.totalorder %s89, %s90
    %p102 = scmp.eq.s32.totalorder %s17, 1
    %p103 = por %p101, %p102
    %p105 = scmp.ne.s32.totalorder %s90, %s104
    %p106 = scmp.eq.s32.totalorder %s17, 0
    %p107 = por %p105, %p106
    %s109 = sadd.s32 %s108, 1
    %p112 = scmp.eq.s32.totalorder %s11, 1
    %p113 = scmp.ne.s32.totalorder %s108, %s110
    %p114 = scmp.eq.s32.totalorder %s11, 0
    %p115 = por %p113, %p114
    %p116 = scmp.ne.s32.totalorder %s108, %s110
    %p117 = scmp.eq.s32.totalorder %s16, 1
    %p118 = por %p116, %p117
    %p119 = scmp.ne.s32.totalorder %s110, %s111
    %p120 = scmp.eq.s32.totalorder %s16, 0
    %p121 = por %p119, %p120
    %p122 = scmp.ne.s32.totalorder %s110, %s111
    %p123 = scmp.eq.s32.totalorder %s17, 1
    %p124 = por %p122, %p123
    %p126 = scmp.ne.s32.totalorder %s111, %s125
    %p127 = scmp.eq.s32.totalorder %s17, 0
    %p128 = por %p126, %p127
    %s129 = ssub.s32 %s11, %s18
    %p130 = scmp.eq.s32.totalorder %s129, 0
    %s132 = sadd.s32 %s131, 1
    %s133 = scalar_select %p130, %s131, %s132
    %p136 = pneg %p130
    %p137 = scmp.eq.s32.totalorder %s11, 1
    %p138 = por %p136, %p137
    %p139 = scmp.ne.s32.totalorder %s131, %s134
    %p140 = scmp.eq.s32.totalorder %s11, 0
    %p141 = por %p139, %p140
    %p142 = scmp.ne.s32.totalorder %s131, %s134
    %p143 = scmp.eq.s32.totalorder %s16, 1
    %p144 = por %p142, %p143
    %p145 = scmp.ne.s32.totalorder %s134, %s135
    %p146 = scmp.eq.s32.totalorder %s16, 0
    %p147 = por %p145, %p146
    %p148 = scmp.ne.s32.totalorder %s134, %s135
    %p149 = scmp.eq.s32.totalorder %s17, 1
    %p150 = por %p148, %p149
    %p152 = scmp.ne.s32.totalorder %s135, %s151
    %p153 = scmp.eq.s32.totalorder %s17, 0
    %p154 = por %p152, %p153
    %p155 = scmp.le.s32.totalorder 1, %s11
    %p156 = scmp.lt.s32.totalorder %s11, 3
    %p157 = pnand %p155, %p156
    %p158 = pneg %p157
    // Predicated region
    $region9: #{tpu_custom_call.1} parent=5 // pred_check
      _
    $region10: #{tpu_custom_call.1} parent=5 // pred_check_branch
      %160 = sbr.rel (%p157) target = $region12
    $region11: #{tpu_custom_call.1} parent=5 // pred_region
      %s161 = ssub.s32 %s11, 1
      // Predicated region
      $region13: #{tpu_custom_call.1} parent=11 // pred_check
        %p162 = pneg %p58
      $region14: #{tpu_custom_call.1} parent=11 // pred_check_branch
        %164 = sbr.rel (%p162) target = $region16
      $region15: #{tpu_custom_call.1} parent=11 // pred_region
        _
      $region16: #{tpu_custom_call.1} parent=11 // pred_fallthru
        _
      // Predicated region
      $region17: #{tpu_custom_call.1} parent=11 // pred_check
        %p165 = pneg %p79
      $region18: #{tpu_custom_call.1} parent=11 // pred_check_branch
        %167 = sbr.rel (%p165) target = $region20
      $region19: #{tpu_custom_call.1} parent=11 // pred_region
        _
      $region20: #{tpu_custom_call.1} parent=11 // pred_fallthru
        _
      // Predicated region
      $region21: #{tpu_custom_call.1} parent=11 // pred_check
        %p168 = pneg %p100
      $region22: #{tpu_custom_call.1} parent=11 // pred_check_branch
        %170 = sbr.rel (%p168) target = $region24
      $region23: #{tpu_custom_call.1} parent=11 // pred_region
        _
      $region24: #{tpu_custom_call.1} parent=11 // pred_fallthru
        _
      // Predicated region
      $region25: #{tpu_custom_call.1} parent=11 // pred_check
        %p171 = pneg %p121
      $region26: #{tpu_custom_call.1} parent=11 // pred_check_branch
        %173 = sbr.rel (%p171) target = $region28
      $region27: #{tpu_custom_call.1} parent=11 // pred_region
        _
      $region28: #{tpu_custom_call.1} parent=11 // pred_fallthru
        _
    $region12: #{tpu_custom_call.1} parent=5 // pred_fallthru
      _
    %p174 = scmp.lt.s32.totalorder %s11, 2
    // Predicated region
    $region29: #{tpu_custom_call.1} parent=5 // pred_check
      %p175 = pneg %p174
    $region30: #{tpu_custom_call.1} parent=5 // pred_check_branch
      %177 = sbr.rel (%p175) target = $region32
    $region31: #{tpu_custom_call.1} parent=5 // pred_region
      // Predicated region
      $region33: #{tpu_custom_call.1} parent=31 // pred_check
        %p178 = pneg %p31
      $region34: #{tpu_custom_call.1} parent=31 // pred_check_branch
        %180 = sbr.rel (%p178) target = $region36
      $region35: #{tpu_custom_call.1} parent=31 // pred_region
        %s181 = smul.u32 16, %s11
        %p182 = scmp.lt.s32.totalorder %s181, 31
        %s183 = scalar_select %p182, %s181, 31
        %s184 = smul.addr %s183, 8
        %s185 = scalar_lea.vmem %s0, %s184
        %s186 = smul.u32 16, %s11
      $region36: #{tpu_custom_call.1} parent=31 // pred_fallthru
        _
    $region32: #{tpu_custom_call.1} parent=5 // pred_fallthru
      _
    %p187 = scmp.le.s32.totalorder 1, %s11
    %p188 = scmp.lt.s32.totalorder %s11, 3
    %p189 = pnand %p187, %p188
    %p190 = pneg %p189
    // Predicated region
    $region37: #{tpu_custom_call.1} parent=5 // pred_check
      _
    $region38: #{tpu_custom_call.1} parent=5 // pred_check_branch
      %192 = sbr.rel (%p189) target = $region40
    $region39: #{tpu_custom_call.1} parent=5 // pred_region
      %s193 = ssub.s32 %s11, 1
      %s194 = smul.u32 16, %s16
      %p195 = scmp.lt.s32.totalorder %s194, 31
      %s196 = scalar_select %p195, %s194, 31
      %s197 = smul.addr %s196, 8
      %s198 = scalar_lea.vmem %s0, %s197
      %p199 = pneg %p37
      %p200 = pneg %p34
      %p201 = pneg %p58
      %p202 = pneg %p55
      %p203 = pneg %p79
      %p204 = pneg %p76
      %p205 = pneg %p100
      %p206 = pneg %p97
      %p207 = pneg %p121
      %p208 = pneg %p118
      %p209 = pneg %p147
      %p210 = pneg %p144
      %s211 = smul.u32 16, %s16
      %p212 = scmp.lt.s32.totalorder %s211, 31
      %s213 = scalar_select %p212, %s211, 31
      %s214 = smul.addr %s213, 8
      %s215 = scalar_lea.vmem %s5, %s214
      %s216 = smul.u32 16, %s16
      %p217 = scmp.lt.s32.totalorder %s216, 31
      %s218 = scalar_select %p217, %s216, 31
      %s219 = smul.addr %s218, 8
      %s220 = scalar_lea.vmem %s0, %s219
      %s221 = smul.u32 16, %s16
      %s222 = smul.u32 16, %s16
      %p223 = scmp.lt.s32.totalorder %s222, 31
      %s224 = scalar_select %p223, %s222, 31
      %s225 = smul.addr %s224, 8
      %s226 = scalar_lea.vmem %s5, %s225
      %s227 = smul.u32 16, %s16
      %v228 = vld [vmem:[%s220] sm:$0xff]
      %v229 = vld [vmem:[%s220 + $0x8] sm:$0xff]
      %v230 = vld [vmem:[%s220 + $0x10] sm:$0xff]
      %v231 = vld [vmem:[%s220 + $0x18] sm:$0xff]
      %v232 = vld [vmem:[%s220 + $0x20] sm:$0xff]
      %v233 = vld [vmem:[%s220 + $0x28] sm:$0xff]
      %v234 = vld [vmem:[%s220 + $0x30] sm:$0xff]
      %v235 = vld [vmem:[%s220 + $0x38] sm:$0xff]
      %v236 = vld [vmem:[%s220 + $0x40] sm:$0xff]
      %v237 = vld [vmem:[%s220 + $0x48] sm:$0xff]
      %v238 = vld [vmem:[%s220 + $0x50] sm:$0xff]
      %v239 = vld [vmem:[%s220 + $0x58] sm:$0xff]
      %v240 = vld [vmem:[%s220 + $0x60] sm:$0xff]
      %v241 = vld [vmem:[%s220 + $0x68] sm:$0xff]
      %v242 = vld [vmem:[%s220 + $0x70] sm:$0xff]
      %v243 = vld [vmem:[%s220 + $0x78] sm:$0xff]
      %v244 = vld [vmem:[%s1] sm:$0xff]
      %v245 = vld [vmem:[%s1 + $0x8] sm:$0xff]
      %v246 = vld [vmem:[%s1 + $0x10] sm:$0xff]
      %v247 = vld [vmem:[%s1 + $0x18] sm:$0xff]
      %v248 = vld [vmem:[%s1 + $0x20] sm:$0xff]
      %v249 = vld [vmem:[%s1 + $0x28] sm:$0xff]
      %v250 = vld [vmem:[%s1 + $0x30] sm:$0xff]
      %v251 = vld [vmem:[%s1 + $0x38] sm:$0xff]
      %vm252 = vcmask 261120
      %v254 = vsel %vm252, %v228, 0
      %v257 = vsel %vm252, %v229, 0
      %v260 = vsel %vm252, %v230, 0
      %v263 = vsel %vm252, %v231, 0
      %v266 = vsel %vm252, %v232, 0
      %v269 = vsel %vm252, %v233, 0
      %v272 = vsel %vm252, %v234, 0
      %v275 = vsel %vm252, %v235, 0
      %v278 = vsel %vm252, %v236, 0
      %v281 = vsel %vm252, %v237, 0
      %v284 = vsel %vm252, %v238, 0
      %v287 = vsel %vm252, %v239, 0
      %v290 = vsel %vm252, %v240, 0
      %v293 = vsel %vm252, %v241, 0
      %v296 = vsel %vm252, %v242, 0
      %v299 = vsel %vm252, %v243, 0
      %301 = vmatprep.subr.mxu0 %v245
      %302 = vmatpush1.msra.mxu0 %v244
      %303 = vmatprep.subr.mxu0 %v247
      %304 = vmatpush1.msra.mxu0 %v246
      %305 = vmatprep.subr.mxu0 %v249
      %306 = vmatpush1.msra.mxu0 %v248
      %307 = vmatprep.subr.mxu0 %v251
      %308 = vmatpush1.msra.mxu0 %v250
      %309 = vmatprep.subr.mxu0 0.0
      %310 = vmatpush1.msra.mxu0 0.0
      %311 = vmatprep.subr.mxu0 0.0
      %312 = vmatpush1.msra.mxu0 0.0
      %313 = vmatprep.subr.mxu0 0.0
      %314 = vmatpush1.msra.mxu0 0.0
      %315 = vmatprep.subr.mxu0 0.0
      %316 = vmatpush1.msra.mxu0 0.0
      %317 = vmatprep.subr.mxu0 0.0
      %318 = vmatpush1.msra.mxu0 0.0
      %319 = vmatprep.subr.mxu0 0.0
      %320 = vmatpush1.msra.mxu0 0.0
      %321 = vmatprep.subr.mxu0 0.0
      %322 = vmatpush1.msra.mxu0 0.0
      %323 = vmatprep.subr.mxu0 0.0
      %324 = vmatpush1.msra.mxu0 0.0
      %325 = vmatprep.subr.mxu0 0.0
      %326 = vmatpush1.msra.mxu0 0.0
      %327 = vmatprep.subr.mxu0 0.0
      %328 = vmatpush1.msra.mxu0 0.0
      %329 = vmatprep.subr.mxu0 0.0
      %330 = vmatpush1.msra.mxu0 0.0
      %331 = vmatprep.subr.mxu0 0.0
      %332 = vmatpush1.msra.mxu0 0.0
      %333 = vmatprep.subr.mxu0 0.0
      %334 = vmatpush1.msra.mxu0 0.0
      %335 = vmatprep.subr.mxu0 0.0
      %336 = vmatpush1.msra.mxu0 0.0
      %337 = vmatprep.subr.mxu0 0.0
      %338 = vmatpush1.msra.mxu0 0.0
      %339 = vmatprep.subr.mxu0 0.0
      %340 = vmatpush1.msra.mxu0 0.0
      %341 = vmatprep.subr.mxu0 0.0
      %342 = vmatpush1.msra.mxu0 0.0
      %343 = vmatprep.subr.mxu0 0.0
      %344 = vmatpush1.msra.mxu0 0.0
      %345 = vmatprep.subr.mxu0 0.0
      %346 = vmatpush1.msra.mxu0 0.0
      %347 = vmatprep.subr.mxu0 0.0
      %348 = vmatpush1.msra.mxu0 0.0
      %349 = vmatprep.subr.mxu0 0.0
      %350 = vmatpush1.msra.mxu0 0.0
      %351 = vmatprep.subr.mxu0 0.0
      %352 = vmatpush1.msra.mxu0 0.0
      %353 = vmatprep.subr.mxu0 0.0
      %354 = vmatpush1.msra.mxu0 0.0
      %355 = vmatprep.subr.mxu0 0.0
      %356 = vmatpush1.msra.mxu0 0.0
      %357 = vmatprep.subr.mxu0 0.0
      %358 = vmatpush1.msra.mxu0 0.0
      %359 = vmatprep.subr.mxu0 0.0
      %360 = vmatpush1.msra.mxu0 0.0
      %361 = vmatprep.subr.mxu0 0.0
      %362 = vmatpush1.msra.mxu0 0.0
      %363 = vmatprep.subr.mxu0 0.0
      %364 = vmatpush1.msra.mxu0 0.0
      %365 = vmatprep.mubr.f32.mxu0 0.0
      %366 = vmatmul.mubr.f32.gmra.mrb[0].mxu0 %v254
      %v367 = vpop.f32.mrb[0].mxu0
      %v368 = vadd.f32 0.0, %v367
      %v369 = vpop.f32.mrb[0].mxu0
      %v370 = vadd.f32 0.0, %v369
      %371 = vmatprep.mubr.f32.mxu0 0.0
      %372 = vmatmul.mubr.f32.gmra.mrb[0].mxu0 %v257
      %v373 = vpop.f32.mrb[0].mxu0
      %v374 = vadd.f32 0.0, %v373
      %v375 = vpop.f32.mrb[0].mxu0
      %v376 = vadd.f32 0.0, %v375
      %377 = vmatprep.mubr.f32.mxu0 0.0
      %378 = vmatmul.mubr.f32.gmra.mrb[0].mxu0 %v260
      %v379 = vpop.f32.mrb[0].mxu0
      %v380 = vadd.f32 0.0, %v379
      %v381 = vpop.f32.mrb[0].mxu0
      %v382 = vadd.f32 0.0, %v381
      %383 = vmatprep.mubr.f32.mxu0 0.0
      %384 = vmatmul.mubr.f32.gmra.mrb[0].mxu0 %v263
      %v385 = vpop.f32.mrb[0].mxu0
      %v386 = vadd.f32 0.0, %v385
      %v387 = vpop.f32.mrb[0].mxu0
      %v388 = vadd.f32 0.0, %v387
      %389 = vmatprep.mubr.f32.mxu0 0.0
      %390 = vmatmul.mubr.f32.gmra.mrb[0].mxu0 %v266
      %v391 = vpop.f32.mrb[0].mxu0
      %v392 = vadd.f32 0.0, %v391
      %v393 = vpop.f32.mrb[0].mxu0
      %v394 = vadd.f32 0.0, %v393
      %395 = vmatprep.mubr.f32.mxu0 0.0
      %396 = vmatmul.mubr.f32.gmra.mrb[0].mxu0 %v269
      %v397 = vpop.f32.mrb[0].mxu0
      %v398 = vadd.f32 0.0, %v397
      %v399 = vpop.f32.mrb[0].mxu0
      %v400 = vadd.f32 0.0, %v399
      %401 = vmatprep.mubr.f32.mxu0 0.0
      %402 = vmatmul.mubr.f32.gmra.mrb[0].mxu0 %v272
      %v403 = vpop.f32.mrb[0].mxu0
      %v404 = vadd.f32 0.0, %v403
      %v405 = vpop.f32.mrb[0].mxu0
      %v406 = vadd.f32 0.0, %v405
      %407 = vmatprep.mubr.f32.mxu0 0.0
      %408 = vmatmul.mubr.f32.gmra.mrb[0].mxu0 %v275
      %v409 = vpop.f32.mrb[0].mxu0
      %v410 = vadd.f32 0.0, %v409
      %v411 = vpop.f32.mrb[0].mxu0
      %v412 = vadd.f32 0.0, %v411
      %413 = vmatprep.mubr.f32.mxu0 0.0
      %414 = vmatmul.mubr.f32.gmra.mrb[0].mxu0 %v278
      %v415 = vpop.f32.mrb[0].mxu0
      %v416 = vadd.f32 0.0, %v415
      %v417 = vpop.f32.mrb[0].mxu0
      %v418 = vadd.f32 0.0, %v417
      %419 = vmatprep.mubr.f32.mxu0 0.0
      %420 = vmatmul.mubr.f32.gmra.mrb[0].mxu0 %v281
      %v421 = vpop.f32.mrb[0].mxu0
      %v422 = vadd.f32 0.0, %v421
      %v423 = vpop.f32.mrb[0].mxu0
      %v424 = vadd.f32 0.0, %v423
      %425 = vmatprep.mubr.f32.mxu0 0.0
      %426 = vmatmul.mubr.f32.gmra.mrb[0].mxu0 %v284
      %v427 = vpop.f32.mrb[0].mxu0
      %v428 = vadd.f32 0.0, %v427
      %v429 = vpop.f32.mrb[0].mxu0
      %v430 = vadd.f32 0.0, %v429
      %431 = vmatprep.mubr.f32.mxu0 0.0
      %432 = vmatmul.mubr.f32.gmra.mrb[0].mxu0 %v287
      %v433 = vpop.f32.mrb[0].mxu0
      %v434 = vadd.f32 0.0, %v433
      %v435 = vpop.f32.mrb[0].mxu0
      %v436 = vadd.f32 0.0, %v435
      %437 = vmatprep.mubr.f32.mxu0 0.0
      %438 = vmatmul.mubr.f32.gmra.mrb[0].mxu0 %v290
      %v439 = vpop.f32.mrb[0].mxu0
      %v440 = vadd.f32 0.0, %v439
      %v441 = vpop.f32.mrb[0].mxu0
      %v442 = vadd.f32 0.0, %v441
      %443 = vmatprep.mubr.f32.mxu0 0.0
      %444 = vmatmul.mubr.f32.gmra.mrb[0].mxu0 %v293
      %v445 = vpop.f32.mrb[0].mxu0
      %v446 = vadd.f32 0.0, %v445
      %v447 = vpop.f32.mrb[0].mxu0
      %v448 = vadd.f32 0.0, %v447
      %449 = vmatprep.mubr.f32.mxu0 0.0
      %450 = vmatmul.mubr.f32.gmra.mrb[0].mxu0 %v296
      %v451 = vpop.f32.mrb[0].mxu0
      %v452 = vadd.f32 0.0, %v451
      %v453 = vpop.f32.mrb[0].mxu0
      %v454 = vadd.f32 0.0, %v453
      %455 = vmatprep.mubr.f32.mxu0 0.0
      %456 = vmatmul.mubr.f32.gmra.mrb[0].mxu0 %v299
      %v457 = vpop.f32.mrb[0].mxu0
      %v458 = vadd.f32 0.0, %v457
      %v459 = vpop.f32.mrb[0].mxu0
      %v460 = vadd.f32 0.0, %v459
      %461 = vdwg.mxu0
      %464 = vrot.lane.b32.xlu0 %v368, 64
      %v465 = vpop.permute.xlu0 %464
      %466 = vrot.lane.b32.xlu0 %v374, 64
      %v467 = vpop.permute.xlu0 %466
      %v468 = vsel %vm252, %v368, 0
      %v470 = vsel %vm252, %v374, 0
      %v472 = vsel %vm252, %v465, 0
      %v474 = vsel %vm252, %v467, 0
      %476 = vmatprep.subr.mxu0 0.0
      %477 = vmatpush1.xpose.msra.mxu0 %v472
      %478 = vmatprep.subr.mxu0 0.0
      %479 = vmatpush1.xpose.msra.mxu0 %v474
      %480 = vmatprep.subr.mxu0 0.0
      %481 = vmatpush1.xpose.msra.mxu0 0.0
      %482 = vmatprep.subr.mxu0 0.0
      %483 = vmatpush1.xpose.msra.mxu0 0.0
      %484 = vmatprep.subr.mxu0 0.0
      %485 = vmatpush1.xpose.msra.mxu0 0.0
      %486 = vmatprep.subr.mxu0 0.0
      %487 = vmatpush1.xpose.msra.mxu0 0.0
      %488 = vmatprep.subr.mxu0 0.0
      %489 = vmatpush1.xpose.msra.mxu0 0.0
      %490 = vmatprep.subr.mxu0 0.0
      %491 = vmatpush1.xpose.msra.mxu0 0.0
      %492 = vmatprep.subr.mxu0 0.0
      %493 = vmatpush1.xpose.msra.mxu0 0.0
      %494 = vmatprep.subr.mxu0 0.0
      %495 = vmatpush1.xpose.msra.mxu0 0.0
      %496 = vmatprep.subr.mxu0 0.0
      %497 = vmatpush1.xpose.msra.mxu0 0.0
      %498 = vmatprep.subr.mxu0 0.0
      %499 = vmatpush1.xpose.msra.mxu0 0.0
      %500 = vmatprep.subr.mxu0 0.0
      %501 = vmatpush1.xpose.msra.mxu0 0.0
      %502 = vmatprep.subr.mxu0 0.0
      %503 = vmatpush1.xpose.msra.mxu0 0.0
      %504 = vmatprep.subr.mxu0 0.0
      %505 = vmatpush1.xpose.msra.mxu0 0.0
      %506 = vmatprep.subr.mxu0 0.0
      %507 = vmatpush1.xpose.msra.mxu0 0.0
      %508 = vmatprep.subr.mxu0 0.0
      %509 = vmatpush1.xpose.msra.mxu0 0.0
      %510 = vmatprep.subr.mxu0 0.0
      %511 = vmatpush1.xpose.msra.mxu0 0.0
      %512 = vmatprep.subr.mxu0 0.0
      %513 = vmatpush1.xpose.msra.mxu0 0.0
      %514 = vmatprep.subr.mxu0 0.0
      %515 = vmatpush1.xpose.msra.mxu0 0.0
      %516 = vmatprep.subr.mxu0 0.0
      %517 = vmatpush1.xpose.msra.mxu0 0.0
      %518 = vmatprep.subr.mxu0 0.0
      %519 = vmatpush1.xpose.msra.mxu0 0.0
      %520 = vmatprep.subr.mxu0 0.0
      %521 = vmatpush1.xpose.msra.mxu0 0.0
      %522 = vmatprep.subr.mxu0 0.0
      %523 = vmatpush1.xpose.msra.mxu0 0.0
      %524 = vmatprep.subr.mxu0 0.0
      %525 = vmatpush1.xpose.msra.mxu0 0.0
      %526 = vmatprep.subr.mxu0 0.0
      %527 = vmatpush1.xpose.msra.mxu0 0.0
      %528 = vmatprep.subr.mxu0 0.0
      %529 = vmatpush1.xpose.msra.mxu0 0.0
      %530 = vmatprep.subr.mxu0 0.0
      %531 = vmatpush1.xpose.msra.mxu0 0.0
      %532 = vmatprep.subr.mxu0 0.0
      %533 = vmatpush1.xpose.msra.mxu0 0.0
      %534 = vmatprep.subr.mxu0 0.0
      %535 = vmatpush1.xpose.msra.mxu0 0.0
      %536 = vmatprep.subr.mxu0 0.0
      %537 = vmatpush1.xpose.msra.mxu0 0.0
      %538 = vmatprep.subr.mxu0 0.0
      %539 = vmatpush1.xpose.msra.mxu0 0.0
      %540 = vmatprep.mubr.f32.mxu0 0.0
      %541 = vmatmul.mubr.f32.gmra.mrb[0].mxu0 %v468
      %v542 = vpop.f32.mrb[0].mxu0
      %v543 = vadd.f32 0.0, %v542
      %v544 = vpop.f32.mrb[0].mxu0
      %545 = vmatprep.mubr.f32.mxu0 0.0
      %546 = vmatmul.mubr.f32.gmra.mrb[0].mxu0 %v470
      %v547 = vpop.f32.mrb[0].mxu0
      %v548 = vadd.f32 0.0, %v547
      %v549 = vpop.f32.mrb[0].mxu0
      %550 = vdwg.mxu0
      %553 = vrot.lane.b32.xlu0 %v380, 64
      %v554 = vpop.permute.xlu0 %553
      %555 = vrot.lane.b32.xlu0 %v386, 64
      %v556 = vpop.permute.xlu0 %555
      %v557 = vsel %vm252, %v380, 0
      %v559 = vsel %vm252, %v386, 0
      %v561 = vsel %vm252, %v554, 0
      %v563 = vsel %vm252, %v556, 0
      %565 = vmatprep.subr.mxu0 0.0
      %566 = vmatpush1.xpose.msra.mxu0 %v561
      %567 = vmatprep.subr.mxu0 0.0
      %568 = vmatpush1.xpose.msra.mxu0 %v563
      %569 = vmatprep.subr.mxu0 0.0
      %570 = vmatpush1.xpose.msra.mxu0 0.0
      %571 = vmatprep.subr.mxu0 0.0
      %572 = vmatpush1.xpose.msra.mxu0 0.0
      %573 = vmatprep.subr.mxu0 0.0
      %574 = vmatpush1.xpose.msra.mxu0 0.0
      %575 = vmatprep.subr.mxu0 0.0
      %576 = vmatpush1.xpose.msra.mxu0 0.0
      %577 = vmatprep.subr.mxu0 0.0
      %578 = vmatpush1.xpose.msra.mxu0 0.0
      %579 = vmatprep.subr.mxu0 0.0
      %580 = vmatpush1.xpose.msra.mxu0 0.0
      %581 = vmatprep.subr.mxu0 0.0
      %582 = vmatpush1.xpose.msra.mxu0 0.0
      %583 = vmatprep.subr.mxu0 0.0
      %584 = vmatpush1.xpose.msra.mxu0 0.0
      %585 = vmatprep.subr.mxu0 0.0
      %586 = vmatpush1.xpose.msra.mxu0 0.0
      %587 = vmatprep.subr.mxu0 0.0
      %588 = vmatpush1.xpose.msra.mxu0 0.0
      %589 = vmatprep.subr.mxu0 0.0
      %590 = vmatpush1.xpose.msra.mxu0 0.0
      %591 = vmatprep.subr.mxu0 0.0
      %592 = vmatpush1.xpose.msra.mxu0 0.0
      %593 = vmatprep.subr.mxu0 0.0
      %594 = vmatpush1.xpose.msra.mxu0 0.0
      %595 = vmatprep.subr.mxu0 0.0
      %596 = vmatpush1.xpose.msra.mxu0 0.0
      %597 = vmatprep.subr.mxu0 0.0
      %598 = vmatpush1.xpose.msra.mxu0 0.0
      %599 = vmatprep.subr.mxu0 0.0
      %600 = vmatpush1.xpose.msra.mxu0 0.0
      %601 = vmatprep.subr.mxu0 0.0
      %602 = vmatpush1.xpose.msra.mxu0 0.0
      %603 = vmatprep.subr.mxu0 0.0
      %604 = vmatpush1.xpose.msra.mxu0 0.0
      %605 = vmatprep.subr.mxu0 0.0
      %606 = vmatpush1.xpose.msra.mxu0 0.0
      %607 = vmatprep.subr.mxu0 0.0
      %608 = vmatpush1.xpose.msra.mxu0 0.0
      %609 = vmatprep.subr.mxu0 0.0
      %610 = vmatpush1.xpose.msra.mxu0 0.0
      %611 = vmatprep.subr.mxu0 0.0
      %612 = vmatpush1.xpose.msra.mxu0 0.0
      %613 = vmatprep.subr.mxu0 0.0
      %614 = vmatpush1.xpose.msra.mxu0 0.0
      %615 = vmatprep.subr.mxu0 0.0
      %616 = vmatpush1.xpose.msra.mxu0 0.0
      %617 = vmatprep.subr.mxu0 0.0
      %618 = vmatpush1.xpose.msra.mxu0 0.0
      %619 = vmatprep.subr.mxu0 0.0
      %620 = vmatpush1.xpose.msra.mxu0 0.0
      %621 = vmatprep.subr.mxu0 0.0
      %622 = vmatpush1.xpose.msra.mxu0 0.0
      %623 = vmatprep.subr.mxu0 0.0
      %624 = vmatpush1.xpose.msra.mxu0 0.0
      %625 = vmatprep.subr.mxu0 0.0
      %626 = vmatpush1.xpose.msra.mxu0 0.0
      %627 = vmatprep.subr.mxu0 0.0
      %628 = vmatpush1.xpose.msra.mxu0 0.0
      %629 = vmatprep.mubr.f32.mxu0 0.0
      %630 = vmatmul.mubr.f32.gmra.mrb[0].mxu0 %v557
      %v631 = vpop.f32.mrb[0].mxu0
      %v632 = vadd.f32 0.0, %v631
      %v633 = vpop.f32.mrb[0].mxu0
      %634 = vmatprep.mubr.f32.mxu0 0.0
      %635 = vmatmul.mubr.f32.gmra.mrb[0].mxu0 %v559
      %v636 = vpop.f32.mrb[0].mxu0
      %v637 = vadd.f32 0.0, %v636
      %v638 = vpop.f32.mrb[0].mxu0
      %639 = vdwg.mxu0
      %642 = vrot.lane.b32.xlu0 %v392, 64
      %v643 = vpop.permute.xlu0 %642
      %644 = vrot.lane.b32.xlu0 %v398, 64
      %v645 = vpop.permute.xlu0 %644
      %v646 = vsel %vm252, %v392, 0
      %v648 = vsel %vm252, %v398, 0
      %v650 = vsel %vm252, %v643, 0
      %v652 = vsel %vm252, %v645, 0
      %654 = vmatprep.subr.mxu0 0.0
      %655 = vmatpush1.xpose.msra.mxu0 %v650
      %656 = vmatprep.subr.mxu0 0.0
      %657 = vmatpush1.xpose.msra.mxu0 %v652
      %658 = vmatprep.subr.mxu0 0.0
      %659 = vmatpush1.xpose.msra.mxu0 0.0
      %660 = vmatprep.subr.mxu0 0.0
      %661 = vmatpush1.xpose.msra.mxu0 0.0
      %662 = vmatprep.subr.mxu0 0.0
      %663 = vmatpush1.xpose.msra.mxu0 0.0
      %664 = vmatprep.subr.mxu0 0.0
      %665 = vmatpush1.xpose.msra.mxu0 0.0
      %666 = vmatprep.subr.mxu0 0.0
      %667 = vmatpush1.xpose.msra.mxu0 0.0
      %668 = vmatprep.subr.mxu0 0.0
      %669 = vmatpush1.xpose.msra.mxu0 0.0
      %670 = vmatprep.subr.mxu0 0.0
      %671 = vmatpush1.xpose.msra.mxu0 0.0
      %672 = vmatprep.subr.mxu0 0.0
      %673 = vmatpush1.xpose.msra.mxu0 0.0
      %674 = vmatprep.subr.mxu0 0.0
      %675 = vmatpush1.xpose.msra.mxu0 0.0
      %676 = vmatprep.subr.mxu0 0.0
      %677 = vmatpush1.xpose.msra.mxu0 0.0
      %678 = vmatprep.subr.mxu0 0.0
      %679 = vmatpush1.xpose.msra.mxu0 0.0
      %680 = vmatprep.subr.mxu0 0.0
      %681 = vmatpush1.xpose.msra.mxu0 0.0
      %682 = vmatprep.subr.mxu0 0.0
      %683 = vmatpush1.xpose.msra.mxu0 0.0
      %684 = vmatprep.subr.mxu0 0.0
      %685 = vmatpush1.xpose.msra.mxu0 0.0
      %686 = vmatprep.subr.mxu0 0.0
      %687 = vmatpush1.xpose.msra.mxu0 0.0
      %688 = vmatprep.subr.mxu0 0.0
      %689 = vmatpush1.xpose.msra.mxu0 0.0
      %690 = vmatprep.subr.mxu0 0.0
      %691 = vmatpush1.xpose.msra.mxu0 0.0
      %692 = vmatprep.subr.mxu0 0.0
      %693 = vmatpush1.xpose.msra.mxu0 0.0
      %694 = vmatprep.subr.mxu0 0.0
      %695 = vmatpush1.xpose.msra.mxu0 0.0
      %696 = vmatprep.subr.mxu0 0.0
      %697 = vmatpush1.xpose.msra.mxu0 0.0
      %698 = vmatprep.subr.mxu0 0.0
      %699 = vmatpush1.xpose.msra.mxu0 0.0
      %700 = vmatprep.subr.mxu0 0.0
      %701 = vmatpush1.xpose.msra.mxu0 0.0
      %702 = vmatprep.subr.mxu0 0.0
      %703 = vmatpush1.xpose.msra.mxu0 0.0
      %704 = vmatprep.subr.mxu0 0.0
      %705 = vmatpush1.xpose.msra.mxu0 0.0
      %706 = vmatprep.subr.mxu0 0.0
      %707 = vmatpush1.xpose.msra.mxu0 0.0
      %708 = vmatprep.subr.mxu0 0.0
      %709 = vmatpush1.xpose.msra.mxu0 0.0
      %710 = vmatprep.subr.mxu0 0.0
      %711 = vmatpush1.xpose.msra.mxu0 0.0
      %712 = vmatprep.subr.mxu0 0.0
      %713 = vmatpush1.xpose.msra.mxu0 0.0
      %714 = vmatprep.subr.mxu0 0.0
      %715 = vmatpush1.xpose.msra.mxu0 0.0
      %716 = vmatprep.subr.mxu0 0.0
      %717 = vmatpush1.xpose.msra.mxu0 0.0
      %718 = vmatprep.mubr.f32.mxu0 0.0
      %719 = vmatmul.mubr.f32.gmra.mrb[0].mxu0 %v646
      %v720 = vpop.f32.mrb[0].mxu0
      %v721 = vadd.f32 0.0, %v720
      %v722 = vpop.f32.mrb[0].mxu0
      %723 = vmatprep.mubr.f32.mxu0 0.0
      %724 = vmatmul.mubr.f32.gmra.mrb[0].mxu0 %v648
      %v725 = vpop.f32.mrb[0].mxu0
      %v726 = vadd.f32 0.0, %v725
      %v727 = vpop.f32.mrb[0].mxu0
      %728 = vdwg.mxu0
      %731 = vrot.lane.b32.xlu0 %v404, 64
      %v732 = vpop.permute.xlu0 %731
      %733 = vrot.lane.b32.xlu0 %v410, 64
      %v734 = vpop.permute.xlu0 %733
      %v735 = vsel %vm252, %v404, 0
      %v737 = vsel %vm252, %v410, 0
      %v739 = vsel %vm252, %v732, 0
      %v741 = vsel %vm252, %v734, 0
      %743 = vmatprep.subr.mxu0 0.0
      %744 = vmatpush1.xpose.msra.mxu0 %v739
      %745 = vmatprep.subr.mxu0 0.0
      %746 = vmatpush1.xpose.msra.mxu0 %v741
      %747 = vmatprep.subr.mxu0 0.0
      %748 = vmatpush1.xpose.msra.mxu0 0.0
      %749 = vmatprep.subr.mxu0 0.0
      %750 = vmatpush1.xpose.msra.mxu0 0.0
      %751 = vmatprep.subr.mxu0 0.0
      %752 = vmatpush1.xpose.msra.mxu0 0.0
      %753 = vmatprep.subr.mxu0 0.0
      %754 = vmatpush1.xpose.msra.mxu0 0.0
      %755 = vmatprep.subr.mxu0 0.0
      %756 = vmatpush1.xpose.msra.mxu0 0.0
      %757 = vmatprep.subr.mxu0 0.0
      %758 = vmatpush1.xpose.msra.mxu0 0.0
      %759 = vmatprep.subr.mxu0 0.0
      %760 = vmatpush1.xpose.msra.mxu0 0.0
      %761 = vmatprep.subr.mxu0 0.0
      %762 = vmatpush1.xpose.msra.mxu0 0.0
      %763 = vmatprep.subr.mxu0 0.0
      %764 = vmatpush1.xpose.msra.mxu0 0.0
      %765 = vmatprep.subr.mxu0 0.0
      %766 = vmatpush1.xpose.msra.mxu0 0.0
      %767 = vmatprep.subr.mxu0 0.0
      %768 = vmatpush1.xpose.msra.mxu0 0.0
      %769 = vmatprep.subr.mxu0 0.0
      %770 = vmatpush1.xpose.msra.mxu0 0.0
      %771 = vmatprep.subr.mxu0 0.0
      %772 = vmatpush1.xpose.msra.mxu0 0.0
      %773 = vmatprep.subr.mxu0 0.0
      %774 = vmatpush1.xpose.msra.mxu0 0.0
      %775 = vmatprep.subr.mxu0 0.0
      %776 = vmatpush1.xpose.msra.mxu0 0.0
      %777 = vmatprep.subr.mxu0 0.0
      %778 = vmatpush1.xpose.msra.mxu0 0.0
      %779 = vmatprep.subr.mxu0 0.0
      %780 = vmatpush1.xpose.msra.mxu0 0.0
      %781 = vmatprep.subr.mxu0 0.0
      %782 = vmatpush1.xpose.msra.mxu0 0.0
      %783 = vmatprep.subr.mxu0 0.0
      %784 = vmatpush1.xpose.msra.mxu0 0.0
      %785 = vmatprep.subr.mxu0 0.0
      %786 = vmatpush1.xpose.msra.mxu0 0.0
      %787 = vmatprep.subr.mxu0 0.0
      %788 = vmatpush1.xpose.msra.mxu0 0.0
      %789 = vmatprep.subr.mxu0 0.0
      %790 = vmatpush1.xpose.msra.mxu0 0.0
      %791 = vmatprep.subr.mxu0 0.0
      %792 = vmatpush1.xpose.msra.mxu0 0.0
      %793 = vmatprep.subr.mxu0 0.0
      %794 = vmatpush1.xpose.msra.mxu0 0.0
      %795 = vmatprep.subr.mxu0 0.0
      %796 = vmatpush1.xpose.msra.mxu0 0.0
      %797 = vmatprep.subr.mxu0 0.0
      %798 = vmatpush1.xpose.msra.mxu0 0.0
      %799 = vmatprep.subr.mxu0 0.0
      %800 = vmatpush1.xpose.msra.mxu0 0.0
      %801 = vmatprep.subr.mxu0 0.0
      %802 = vmatpush1.xpose.msra.mxu0 0.0
      %803 = vmatprep.subr.mxu0 0.0
      %804 = vmatpush1.xpose.msra.mxu0 0.0
      %805 = vmatprep.subr.mxu0 0.0
      %806 = vmatpush1.xpose.msra.mxu0 0.0
      %807 = vmatprep.mubr.f32.mxu0 0.0
      %808 = vmatmul.mubr.f32.gmra.mrb[0].mxu0 %v735
      %v809 = vpop.f32.mrb[0].mxu0
      %v810 = vadd.f32 0.0, %v809
      %v811 = vpop.f32.mrb[0].mxu0
      %812 = vmatprep.mubr.f32.mxu0 0.0
      %813 = vmatmul.mubr.f32.gmra.mrb[0].mxu0 %v737
      %v814 = vpop.f32.mrb[0].mxu0
      %v815 = vadd.f32 0.0, %v814
      %v816 = vpop.f32.mrb[0].mxu0
      %817 = vdwg.mxu0
      %820 = vrot.lane.b32.xlu0 %v416, 64
      %v821 = vpop.permute.xlu0 %820
      %822 = vrot.lane.b32.xlu0 %v422, 64
      %v823 = vpop.permute.xlu0 %822
      %v824 = vsel %vm252, %v416, 0
      %v826 = vsel %vm252, %v422, 0
      %v828 = vsel %vm252, %v821, 0
      %v830 = vsel %vm252, %v823, 0
      %832 = vmatprep.subr.mxu0 0.0
      %833 = vmatpush1.xpose.msra.mxu0 %v828
      %834 = vmatprep.subr.mxu0 0.0
      %835 = vmatpush1.xpose.msra.mxu0 %v830
      %836 = vmatprep.subr.mxu0 0.0
      %837 = vmatpush1.xpose.msra.mxu0 0.0
      %838 = vmatprep.subr.mxu0 0.0
      %839 = vmatpush1.xpose.msra.mxu0 0.0
      %840 = vmatprep.subr.mxu0 0.0
      %841 = vmatpush1.xpose.msra.mxu0 0.0
      %842 = vmatprep.subr.mxu0 0.0
      %843 = vmatpush1.xpose.msra.mxu0 0.0
      %844 = vmatprep.subr.mxu0 0.0
      %845 = vmatpush1.xpose.msra.mxu0 0.0
      %846 = vmatprep.subr.mxu0 0.0
      %847 = vmatpush1.xpose.msra.mxu0 0.0
      %848 = vmatprep.subr.mxu0 0.0
      %849 = vmatpush1.xpose.msra.mxu0 0.0
      %850 = vmatprep.subr.mxu0 0.0
      %851 = vmatpush1.xpose.msra.mxu0 0.0
      %852 = vmatprep.subr.mxu0 0.0
      %853 = vmatpush1.xpose.msra.mxu0 0.0
      %854 = vmatprep.subr.mxu0 0.0
      %855 = vmatpush1.xpose.msra.mxu0 0.0
      %856 = vmatprep.subr.mxu0 0.0
      %857 = vmatpush1.xpose.msra.mxu0 0.0
      %858 = vmatprep.subr.mxu0 0.0
      %859 = vmatpush1.xpose.msra.mxu0 0.0
      %860 = vmatprep.subr.mxu0 0.0
      %861 = vmatpush1.xpose.msra.mxu0 0.0
      %862 = vmatprep.subr.mxu0 0.0
      %863 = vmatpush1.xpose.msra.mxu0 0.0
      %864 = vmatprep.subr.mxu0 0.0
      %865 = vmatpush1.xpose.msra.mxu0 0.0
      %866 = vmatprep.subr.mxu0 0.0
      %867 = vmatpush1.xpose.msra.mxu0 0.0
      %868 = vmatprep.subr.mxu0 0.0
      %869 = vmatpush1.xpose.msra.mxu0 0.0
      %870 = vmatprep.subr.mxu0 0.0
      %871 = vmatpush1.xpose.msra.mxu0 0.0
      %872 = vmatprep.subr.mxu0 0.0
      %873 = vmatpush1.xpose.msra.mxu0 0.0
      %874 = vmatprep.subr.mxu0 0.0
      %875 = vmatpush1.xpose.msra.mxu0 0.0
      %876 = vmatprep.subr.mxu0 0.0
      %877 = vmatpush1.xpose.msra.mxu0 0.0
      %878 = vmatprep.subr.mxu0 0.0
      %879 = vmatpush1.xpose.msra.mxu0 0.0
      %880 = vmatprep.subr.mxu0 0.0
      %881 = vmatpush1.xpose.msra.mxu0 0.0
      %882 = vmatprep.subr.mxu0 0.0
      %883 = vmatpush1.xpose.msra.mxu0 0.0
      %884 = vmatprep.subr.mxu0 0.0
      %885 = vmatpush1.xpose.msra.mxu0 0.0
      %886 = vmatprep.subr.mxu0 0.0
      %887 = vmatpush1.xpose.msra.mxu0 0.0
      %888 = vmatprep.subr.mxu0 0.0
      %889 = vmatpush1.xpose.msra.mxu0 0.0
      %890 = vmatprep.subr.mxu0 0.0
      %891 = vmatpush1.xpose.msra.mxu0 0.0
      %892 = vmatprep.subr.mxu0 0.0
      %893 = vmatpush1.xpose.msra.mxu0 0.0
      %894 = vmatprep.subr.mxu0 0.0
      %895 = vmatpush1.xpose.msra.mxu0 0.0
      %896 = vmatprep.mubr.f32.mxu0 0.0
      %897 = vmatmul.mubr.f32.gmra.mrb[0].mxu0 %v824
      %v898 = vpop.f32.mrb[0].mxu0
      %v899 = vadd.f32 0.0, %v898
      %v900 = vpop.f32.mrb[0].mxu0
      %901 = vmatprep.mubr.f32.mxu0 0.0
      %902 = vmatmul.mubr.f32.gmra.mrb[0].mxu0 %v826
      %v903 = vpop.f32.mrb[0].mxu0
      %v904 = vadd.f32 0.0, %v903
      %v905 = vpop.f32.mrb[0].mxu0
      %906 = vdwg.mxu0
      %909 = vrot.lane.b32.xlu0 %v428, 64
      %v910 = vpop.permute.xlu0 %909
      %911 = vrot.lane.b32.xlu0 %v434, 64
      %v912 = vpop.permute.xlu0 %911
      %v913 = vsel %vm252, %v428, 0
      %v915 = vsel %vm252, %v434, 0
      %v917 = vsel %vm252, %v910, 0
      %v919 = vsel %vm252, %v912, 0
      %921 = vmatprep.subr.mxu0 0.0
      %922 = vmatpush1.xpose.msra.mxu0 %v917
      %923 = vmatprep.subr.mxu0 0.0
      %924 = vmatpush1.xpose.msra.mxu0 %v919
      %925 = vmatprep.subr.mxu0 0.0
      %926 = vmatpush1.xpose.msra.mxu0 0.0
      %927 = vmatprep.subr.mxu0 0.0
      %928 = vmatpush1.xpose.msra.mxu0 0.0
      %929 = vmatprep.subr.mxu0 0.0
      %930 = vmatpush1.xpose.msra.mxu0 0.0
      %931 = vmatprep.subr.mxu0 0.0
      %932 = vmatpush1.xpose.msra.mxu0 0.0
      %933 = vmatprep.subr.mxu0 0.0
      %934 = vmatpush1.xpose.msra.mxu0 0.0
      %935 = vmatprep.subr.mxu0 0.0
      %936 = vmatpush1.xpose.msra.mxu0 0.0
      %937 = vmatprep.subr.mxu0 0.0
      %938 = vmatpush1.xpose.msra.mxu0 0.0
      %939 = vmatprep.subr.mxu0 0.0
      %940 = vmatpush1.xpose.msra.mxu0 0.0
      %941 = vmatprep.subr.mxu0 0.0
      %942 = vmatpush1.xpose.msra.mxu0 0.0
      %943 = vmatprep.subr.mxu0 0.0
      %944 = vmatpush1.xpose.msra.mxu0 0.0
      %945 = vmatprep.subr.mxu0 0.0
      %946 = vmatpush1.xpose.msra.mxu0 0.0
      %947 = vmatprep.subr.mxu0 0.0
      %948 = vmatpush1.xpose.msra.mxu0 0.0
      %949 = vmatprep.subr.mxu0 0.0
      %950 = vmatpush1.xpose.msra.mxu0 0.0
      %951 = vmatprep.subr.mxu0 0.0
      %952 = vmatpush1.xpose.msra.mxu0 0.0
      %953 = vmatprep.subr.mxu0 0.0
      %954 = vmatpush1.xpose.msra.mxu0 0.0
      %955 = vmatprep.subr.mxu0 0.0
      %956 = vmatpush1.xpose.msra.mxu0 0.0
      %957 = vmatprep.subr.mxu0 0.0
      %958 = vmatpush1.xpose.msra.mxu0 0.0
      %959 = vmatprep.subr.mxu0 0.0
      %960 = vmatpush1.xpose.msra.mxu0 0.0
      %961 = vmatprep.subr.mxu0 0.0
      %962 = vmatpush1.xpose.msra.mxu0 0.0
      %963 = vmatprep.subr.mxu0 0.0
      %964 = vmatpush1.xpose.msra.mxu0 0.0
      %965 = vmatprep.subr.mxu0 0.0
      %966 = vmatpush1.xpose.msra.mxu0 0.0
      %967 = vmatprep.subr.mxu0 0.0
      %968 = vmatpush1.xpose.msra.mxu0 0.0
      %969 = vmatprep.subr.mxu0 0.0
      %970 = vmatpush1.xpose.msra.mxu0 0.0
      %971 = vmatprep.subr.mxu0 0.0
      %972 = vmatpush1.xpose.msra.mxu0 0.0
      %973 = vmatprep.subr.mxu0 0.0
      %974 = vmatpush1.xpose.msra.mxu0 0.0
      %975 = vmatprep.subr.mxu0 0.0
      %976 = vmatpush1.xpose.msra.mxu0 0.0
      %977 = vmatprep.subr.mxu0 0.0
      %978 = vmatpush1.xpose.msra.mxu0 0.0
      %979 = vmatprep.subr.mxu0 0.0
      %980 = vmatpush1.xpose.msra.mxu0 0.0
      %981 = vmatprep.subr.mxu0 0.0
      %982 = vmatpush1.xpose.msra.mxu0 0.0
      %983 = vmatprep.subr.mxu0 0.0
      %984 = vmatpush1.xpose.msra.mxu0 0.0
      %985 = vmatprep.mubr.f32.mxu0 0.0
      %986 = vmatmul.mubr.f32.gmra.mrb[0].mxu0 %v913
      %v987 = vpop.f32.mrb[0].mxu0
      %v988 = vadd.f32 0.0, %v987
      %v989 = vpop.f32.mrb[0].mxu0
      %990 = vmatprep.mubr.f32.mxu0 0.0
      %991 = vmatmul.mubr.f32.gmra.mrb[0].mxu0 %v915
      %v992 = vpop.f32.mrb[0].mxu0
      %v993 = vadd.f32 0.0, %v992
      %v994 = vpop.f32.mrb[0].mxu0
      %995 = vdwg.mxu0
      %998 = vrot.lane.b32.xlu0 %v440, 64
      %v999 = vpop.permute.xlu0 %998
      %1000 = vrot.lane.b32.xlu0 %v446, 64
      %v1001 = vpop.permute.xlu0 %1000
      %v1002 = vsel %vm252, %v440, 0
      %v1004 = vsel %vm252, %v446, 0
      %v1006 = vsel %vm252, %v999, 0
      %v1008 = vsel %vm252, %v1001, 0
      %1010 = vmatprep.subr.mxu0 0.0
      %1011 = vmatpush1.xpose.msra.mxu0 %v1006
      %1012 = vmatprep.subr.mxu0 0.0
      %1013 = vmatpush1.xpose.msra.mxu0 %v1008
      %1014 = vmatprep.subr.mxu0 0.0
      %1015 = vmatpush1.xpose.msra.mxu0 0.0
      %1016 = vmatprep.subr.mxu0 0.0
      %1017 = vmatpush1.xpose.msra.mxu0 0.0
      %1018 = vmatprep.subr.mxu0 0.0
      %1019 = vmatpush1.xpose.msra.mxu0 0.0
      %1020 = vmatprep.subr.mxu0 0.0
      %1021 = vmatpush1.xpose.msra.mxu0 0.0
      %1022 = vmatprep.subr.mxu0 0.0
      %1023 = vmatpush1.xpose.msra.mxu0 0.0
      %1024 = vmatprep.subr.mxu0 0.0
      %1025 = vmatpush1.xpose.msra.mxu0 0.0
      %1026 = vmatprep.subr.mxu0 0.0
      %1027 = vmatpush1.xpose.msra.mxu0 0.0
      %1028 = vmatprep.subr.mxu0 0.0
      %1029 = vmatpush1.xpose.msra.mxu0 0.0
      %1030 = vmatprep.subr.mxu0 0.0
      %1031 = vmatpush1.xpose.msra.mxu0 0.0
      %1032 = vmatprep.subr.mxu0 0.0
      %1033 = vmatpush1.xpose.msra.mxu0 0.0
      %1034 = vmatprep.subr.mxu0 0.0
      %1035 = vmatpush1.xpose.msra.mxu0 0.0
      %1036 = vmatprep.subr.mxu0 0.0
      %1037 = vmatpush1.xpose.msra.mxu0 0.0
      %1038 = vmatprep.subr.mxu0 0.0
      %1039 = vmatpush1.xpose.msra.mxu0 0.0
      %1040 = vmatprep.subr.mxu0 0.0
      %1041 = vmatpush1.xpose.msra.mxu0 0.0
      %1042 = vmatprep.subr.mxu0 0.0
      %1043 = vmatpush1.xpose.msra.mxu0 0.0
      %1044 = vmatprep.subr.mxu0 0.0
      %1045 = vmatpush1.xpose.msra.mxu0 0.0
      %1046 = vmatprep.subr.mxu0 0.0
      %1047 = vmatpush1.xpose.msra.mxu0 0.0
      %1048 = vmatprep.subr.mxu0 0.0
      %1049 = vmatpush1.xpose.msra.mxu0 0.0
      %1050 = vmatprep.subr.mxu0 0.0
      %1051 = vmatpush1.xpose.msra.mxu0 0.0
      %1052 = vmatprep.subr.mxu0 0.0
      %1053 = vmatpush1.xpose.msra.mxu0 0.0
      %1054 = vmatprep.subr.mxu0 0.0
      %1055 = vmatpush1.xpose.msra.mxu0 0.0
      %1056 = vmatprep.subr.mxu0 0.0
      %1057 = vmatpush1.xpose.msra.mxu0 0.0
      %1058 = vmatprep.subr.mxu0 0.0
      %1059 = vmatpush1.xpose.msra.mxu0 0.0
      %1060 = vmatprep.subr.mxu0 0.0
      %1061 = vmatpush1.xpose.msra.mxu0 0.0
      %1062 = vmatprep.subr.mxu0 0.0
      %1063 = vmatpush1.xpose.msra.mxu0 0.0
      %1064 = vmatprep.subr.mxu0 0.0
      %1065 = vmatpush1.xpose.msra.mxu0 0.0
      %1066 = vmatprep.subr.mxu0 0.0
      %1067 = vmatpush1.xpose.msra.mxu0 0.0
      %1068 = vmatprep.subr.mxu0 0.0
      %1069 = vmatpush1.xpose.msra.mxu0 0.0
      %1070 = vmatprep.subr.mxu0 0.0
      %1071 = vmatpush1.xpose.msra.mxu0 0.0
      %1072 = vmatprep.subr.mxu0 0.0
      %1073 = vmatpush1.xpose.msra.mxu0 0.0
      %1074 = vmatprep.mubr.f32.mxu0 0.0
      %1075 = vmatmul.mubr.f32.gmra.mrb[0].mxu0 %v1002
      %v1076 = vpop.f32.mrb[0].mxu0
      %v1077 = vadd.f32 0.0, %v1076
      %v1078 = vpop.f32.mrb[0].mxu0
      %1079 = vmatprep.mubr.f32.mxu0 0.0
      %1080 = vmatmul.mubr.f32.gmra.mrb[0].mxu0 %v1004
      %v1081 = vpop.f32.mrb[0].mxu0
      %v1082 = vadd.f32 0.0, %v1081
      %v1083 = vpop.f32.mrb[0].mxu0
      %1084 = vdwg.mxu0
      %1087 = vrot.lane.b32.xlu0 %v452, 64
      %v1088 = vpop.permute.xlu0 %1087
      %1089 = vrot.lane.b32.xlu0 %v458, 64
      %v1090 = vpop.permute.xlu0 %1089
      %v1091 = vsel %vm252, %v452, 0
      %v1093 = vsel %vm252, %v458, 0
      %v1095 = vsel %vm252, %v1088, 0
      %v1097 = vsel %vm252, %v1090, 0
      %1099 = vmatprep.subr.mxu0 0.0
      %1100 = vmatpush1.xpose.msra.mxu0 %v1095
      %1101 = vmatprep.subr.mxu0 0.0
      %1102 = vmatpush1.xpose.msra.mxu0 %v1097
      %1103 = vmatprep.subr.mxu0 0.0
      %1104 = vmatpush1.xpose.msra.mxu0 0.0
      %1105 = vmatprep.subr.mxu0 0.0
      %1106 = vmatpush1.xpose.msra.mxu0 0.0
      %1107 = vmatprep.subr.mxu0 0.0
      %1108 = vmatpush1.xpose.msra.mxu0 0.0
      %1109 = vmatprep.subr.mxu0 0.0
      %1110 = vmatpush1.xpose.msra.mxu0 0.0
      %1111 = vmatprep.subr.mxu0 0.0
      %1112 = vmatpush1.xpose.msra.mxu0 0.0
      %1113 = vmatprep.subr.mxu0 0.0
      %1114 = vmatpush1.xpose.msra.mxu0 0.0
      %1115 = vmatprep.subr.mxu0 0.0
      %1116 = vmatpush1.xpose.msra.mxu0 0.0
      %1117 = vmatprep.subr.mxu0 0.0
      %1118 = vmatpush1.xpose.msra.mxu0 0.0
      %1119 = vmatprep.subr.mxu0 0.0
      %1120 = vmatpush1.xpose.msra.mxu0 0.0
      %1121 = vmatprep.subr.mxu0 0.0
      %1122 = vmatpush1.xpose.msra.mxu0 0.0
      %1123 = vmatprep.subr.mxu0 0.0
      %1124 = vmatpush1.xpose.msra.mxu0 0.0
      %1125 = vmatprep.subr.mxu0 0.0
      %1126 = vmatpush1.xpose.msra.mxu0 0.0
      %1127 = vmatprep.subr.mxu0 0.0
      %1128 = vmatpush1.xpose.msra.mxu0 0.0
      %1129 = vmatprep.subr.mxu0 0.0
      %1130 = vmatpush1.xpose.msra.mxu0 0.0
      %1131 = vmatprep.subr.mxu0 0.0
      %1132 = vmatpush1.xpose.msra.mxu0 0.0
      %1133 = vmatprep.subr.mxu0 0.0
      %1134 = vmatpush1.xpose.msra.mxu0 0.0
      %1135 = vmatprep.subr.mxu0 0.0
      %1136 = vmatpush1.xpose.msra.mxu0 0.0
      %1137 = vmatprep.subr.mxu0 0.0
      %1138 = vmatpush1.xpose.msra.mxu0 0.0
      %1139 = vmatprep.subr.mxu0 0.0
      %1140 = vmatpush1.xpose.msra.mxu0 0.0
      %1141 = vmatprep.subr.mxu0 0.0
      %1142 = vmatpush1.xpose.msra.mxu0 0.0
      %1143 = vmatprep.subr.mxu0 0.0
      %1144 = vmatpush1.xpose.msra.mxu0 0.0
      %1145 = vmatprep.subr.mxu0 0.0
      %1146 = vmatpush1.xpose.msra.mxu0 0.0
      %1147 = vmatprep.subr.mxu0 0.0
      %1148 = vmatpush1.xpose.msra.mxu0 0.0
      %1149 = vmatprep.subr.mxu0 0.0
      %1150 = vmatpush1.xpose.msra.mxu0 0.0
      %1151 = vmatprep.subr.mxu0 0.0
      %1152 = vmatpush1.xpose.msra.mxu0 0.0
      %1153 = vmatprep.subr.mxu0 0.0
      %1154 = vmatpush1.xpose.msra.mxu0 0.0
      %1155 = vmatprep.subr.mxu0 0.0
      %1156 = vmatpush1.xpose.msra.mxu0 0.0
      %1157 = vmatprep.subr.mxu0 0.0
      %1158 = vmatpush1.xpose.msra.mxu0 0.0
      %1159 = vmatprep.subr.mxu0 0.0
      %1160 = vmatpush1.xpose.msra.mxu0 0.0
      %1161 = vmatprep.subr.mxu0 0.0
      %1162 = vmatpush1.xpose.msra.mxu0 0.0
      %1163 = vmatprep.mubr.f32.mxu0 0.0
      %1164 = vmatmul.mubr.f32.gmra.mrb[0].mxu0 %v1091
      %v1165 = vpop.f32.mrb[0].mxu0
      %v1166 = vadd.f32 0.0, %v1165
      %v1167 = vpop.f32.mrb[0].mxu0
      %1168 = vmatprep.mubr.f32.mxu0 0.0
      %1169 = vmatmul.mubr.f32.gmra.mrb[0].mxu0 %v1093
      %v1170 = vpop.f32.mrb[0].mxu0
      %v1171 = vadd.f32 0.0, %v1170
      %v1172 = vpop.f32.mrb[0].mxu0
      %1173 = vdwg.mxu0
      %v1174 = vmul.f32 %v543, 0.17677669
      %v1175 = vmul.f32 %v548, 0.17677669
      %v1176 = vmul.f32 %v632, 0.17677669
      %v1177 = vmul.f32 %v637, 0.17677669
      %v1178 = vmul.f32 %v721, 0.17677669
      %v1179 = vmul.f32 %v726, 0.17677669
      %v1180 = vmul.f32 %v810, 0.17677669
      %v1181 = vmul.f32 %v815, 0.17677669
      %v1182 = vmul.f32 %v899, 0.17677669
      %v1183 = vmul.f32 %v904, 0.17677669
      %v1184 = vmul.f32 %v988, 0.17677669
      %v1185 = vmul.f32 %v993, 0.17677669
      %v1186 = vmul.f32 %v1077, 0.17677669
      %v1187 = vmul.f32 %v1082, 0.17677669
      %v1188 = vmul.f32 %v1166, 0.17677669
      %v1189 = vmul.f32 %v1171, 0.17677669
      %vm1190 = vcmask 130048
      %v1191 = vsel %vm1190, %v1174, -inf
      %1192 = vmax.xlane.f32.xlu0 %v1191
      %v1193 = vpop.xlane.xlu0 %1192
      %v1194 = vsel %vm1190, %v1175, -inf
      %1195 = vmax.xlane.f32.xlu0 %v1194
      %v1196 = vpop.xlane.xlu0 %1195
      %v1197 = vsel %vm1190, %v1176, -inf
      %1198 = vmax.xlane.f32.xlu0 %v1197
      %v1199 = vpop.xlane.xlu0 %1198
      %v1200 = vsel %vm1190, %v1177, -inf
      %1201 = vmax.xlane.f32.xlu0 %v1200
      %v1202 = vpop.xlane.xlu0 %1201
      %v1203 = vsel %vm1190, %v1178, -inf
      %1204 = vmax.xlane.f32.xlu0 %v1203
      %v1205 = vpop.xlane.xlu0 %1204
      %v1206 = vsel %vm1190, %v1179, -inf
      %1207 = vmax.xlane.f32.xlu0 %v1206
      %v1208 = vpop.xlane.xlu0 %1207
      %v1209 = vsel %vm1190, %v1180, -inf
      %1210 = vmax.xlane.f32.xlu0 %v1209
      %v1211 = vpop.xlane.xlu0 %1210
      %v1212 = vsel %vm1190, %v1181, -inf
      %1213 = vmax.xlane.f32.xlu0 %v1212
      %v1214 = vpop.xlane.xlu0 %1213
      %v1215 = vsel %vm1190, %v1182, -inf
      %1216 = vmax.xlane.f32.xlu0 %v1215
      %v1217 = vpop.xlane.xlu0 %1216
      %v1218 = vsel %vm1190, %v1183, -inf
      %1219 = vmax.xlane.f32.xlu0 %v1218
      %v1220 = vpop.xlane.xlu0 %1219
      %v1221 = vsel %vm1190, %v1184, -inf
      %1222 = vmax.xlane.f32.xlu0 %v1221
      %v1223 = vpop.xlane.xlu0 %1222
      %v1224 = vsel %vm1190, %v1185, -inf
      %1225 = vmax.xlane.f32.xlu0 %v1224
      %v1226 = vpop.xlane.xlu0 %1225
      %v1227 = vsel %vm1190, %v1186, -inf
      %1228 = vmax.xlane.f32.xlu0 %v1227
      %v1229 = vpop.xlane.xlu0 %1228
      %v1230 = vsel %vm1190, %v1187, -inf
      %1231 = vmax.xlane.f32.xlu0 %v1230
      %v1232 = vpop.xlane.xlu0 %1231
      %v1233 = vsel %vm1190, %v1188, -inf
      %1234 = vmax.xlane.f32.xlu0 %v1233
      %v1235 = vpop.xlane.xlu0 %1234
      %v1236 = vsel %vm1190, %v1189, -inf
      %1237 = vmax.xlane.f32.xlu0 %v1236
      %v1238 = vpop.xlane.xlu0 %1237
      %v1239 = vsub.f32 %v1174, %v1193
      %v1240 = vsub.f32 %v1175, %v1196
      %v1241 = vsub.f32 %v1176, %v1199
      %v1242 = vsub.f32 %v1177, %v1202
      %v1243 = vsub.f32 %v1178, %v1205
      %v1244 = vsub.f32 %v1179, %v1208
      %v1245 = vsub.f32 %v1180, %v1211
      %v1246 = vsub.f32 %v1181, %v1214
      %v1247 = vsub.f32 %v1182, %v1217
      %v1248 = vsub.f32 %v1183, %v1220
      %v1249 = vsub.f32 %v1184, %v1223
      %v1250 = vsub.f32 %v1185, %v1226
      %v1251 = vsub.f32 %v1186, %v1229
      %v1252 = vsub.f32 %v1187, %v1232
      %v1253 = vsub.f32 %v1188, %v1235
      %v1254 = vsub.f32 %v1189, %v1238
      %v1255 = vmul.f32 %v1239, 1.442695
      %v1256 = vpow.pop %v1255
      %v1257 = vmul.f32 %v1240, 1.442695
      %v1258 = vpow.pop %v1257
      %v1259 = vmul.f32 %v1241, 1.442695
      %v1260 = vpow.pop %v1259
      %v1261 = vmul.f32 %v1242, 1.442695
      %v1262 = vpow.pop %v1261
      %v1263 = vmul.f32 %v1243, 1.442695
      %v1264 = vpow.pop %v1263
      %v1265 = vmul.f32 %v1244, 1.442695
      %v1266 = vpow.pop %v1265
      %v1267 = vmul.f32 %v1245, 1.442695
      %v1268 = vpow.pop %v1267
      %v1269 = vmul.f32 %v1246, 1.442695
      %v1270 = vpow.pop %v1269
      %v1271 = vmul.f32 %v1247, 1.442695
      %v1272 = vpow.pop %v1271
      %v1273 = vmul.f32 %v1248, 1.442695
      %v1274 = vpow.pop %v1273
      %v1275 = vmul.f32 %v1249, 1.442695
      %v1276 = vpow.pop %v1275
      %v1277 = vmul.f32 %v1250, 1.442695
      %v1278 = vpow.pop %v1277
      %v1279 = vmul.f32 %v1251, 1.442695
      %v1280 = vpow.pop %v1279
      %v1281 = vmul.f32 %v1252, 1.442695
      %v1282 = vpow.pop %v1281
      %v1283 = vmul.f32 %v1253, 1.442695
      %v1284 = vpow.pop %v1283
      %v1285 = vmul.f32 %v1254, 1.442695
      %v1286 = vpow.pop %v1285
      %v1287 = vsel %vm1190, %v1256, 0.0
      %1288 = vadd.xlane.f32.xlu0 %v1287
      %v1289 = vpop.xlane.xlu0 %1288
      %v1290 = vsel %vm1190, %v1258, 0.0
      %1291 = vadd.xlane.f32.xlu0 %v1290
      %v1292 = vpop.xlane.xlu0 %1291
      %v1293 = vsel %vm1190, %v1260, 0.0
      %1294 = vadd.xlane.f32.xlu0 %v1293
      %v1295 = vpop.xlane.xlu0 %1294
      %v1296 = vsel %vm1190, %v1262, 0.0
      %1297 = vadd.xlane.f32.xlu0 %v1296
      %v1298 = vpop.xlane.xlu0 %1297
      %v1299 = vsel %vm1190, %v1264, 0.0
      %1300 = vadd.xlane.f32.xlu0 %v1299
      %v1301 = vpop.xlane.xlu0 %1300
      %v1302 = vsel %vm1190, %v1266, 0.0
      %1303 = vadd.xlane.f32.xlu0 %v1302
      %v1304 = vpop.xlane.xlu0 %1303
      %v1305 = vsel %vm1190, %v1268, 0.0
      %1306 = vadd.xlane.f32.xlu0 %v1305
      %v1307 = vpop.xlane.xlu0 %1306
      %v1308 = vsel %vm1190, %v1270, 0.0
      %1309 = vadd.xlane.f32.xlu0 %v1308
      %v1310 = vpop.xlane.xlu0 %1309
      %v1311 = vsel %vm1190, %v1272, 0.0
      %1312 = vadd.xlane.f32.xlu0 %v1311
      %v1313 = vpop.xlane.xlu0 %1312
      %v1314 = vsel %vm1190, %v1274, 0.0
      %1315 = vadd.xlane.f32.xlu0 %v1314
      %v1316 = vpop.xlane.xlu0 %1315
      %v1317 = vsel %vm1190, %v1276, 0.0
      %1318 = vadd.xlane.f32.xlu0 %v1317
      %v1319 = vpop.xlane.xlu0 %1318
      %v1320 = vsel %vm1190, %v1278, 0.0
      %1321 = vadd.xlane.f32.xlu0 %v1320
      %v1322 = vpop.xlane.xlu0 %1321
      %v1323 = vsel %vm1190, %v1280, 0.0
      %1324 = vadd.xlane.f32.xlu0 %v1323
      %v1325 = vpop.xlane.xlu0 %1324
      %v1326 = vsel %vm1190, %v1282, 0.0
      %1327 = vadd.xlane.f32.xlu0 %v1326
      %v1328 = vpop.xlane.xlu0 %1327
      %v1329 = vsel %vm1190, %v1284, 0.0
      %1330 = vadd.xlane.f32.xlu0 %v1329
      %v1331 = vpop.xlane.xlu0 %1330
      %v1332 = vsel %vm1190, %v1286, 0.0
      %1333 = vadd.xlane.f32.xlu0 %v1332
      %v1334 = vpop.xlane.xlu0 %1333
      %v1335 = vrcp.pop %v1289
      %v1336 = vrcp.pop %v1292
      %v1337 = vrcp.pop %v1295
      %v1338 = vrcp.pop %v1298
      %v1339 = vrcp.pop %v1301
      %v1340 = vrcp.pop %v1304
      %v1341 = vrcp.pop %v1307
      %v1342 = vrcp.pop %v1310
      %v1343 = vrcp.pop %v1313
      %v1344 = vrcp.pop %v1316
      %v1345 = vrcp.pop %v1319
      %v1346 = vrcp.pop %v1322
      %v1347 = vrcp.pop %v1325
      %v1348 = vrcp.pop %v1328
      %v1349 = vrcp.pop %v1331
      %v1350 = vrcp.pop %v1334
      %v1351 = vmul.f32 %v1256, %v1335
      %v1352 = vmul.f32 %v1258, %v1336
      %v1353 = vmul.f32 %v1260, %v1337
      %v1354 = vmul.f32 %v1262, %v1338
      %v1355 = vmul.f32 %v1264, %v1339
      %v1356 = vmul.f32 %v1266, %v1340
      %v1357 = vmul.f32 %v1268, %v1341
      %v1358 = vmul.f32 %v1270, %v1342
      %v1359 = vmul.f32 %v1272, %v1343
      %v1360 = vmul.f32 %v1274, %v1344
      %v1361 = vmul.f32 %v1276, %v1345
      %v1362 = vmul.f32 %v1278, %v1346
      %v1363 = vmul.f32 %v1280, %v1347
      %v1364 = vmul.f32 %v1282, %v1348
      %v1365 = vmul.f32 %v1284, %v1349
      %v1366 = vmul.f32 %v1286, %v1350
      %v1368 = vsel %vm1190, %v1351, 0
      %v1371 = vsel %vm1190, %v1352, 0
      %1373 = vmatprep.subr.mxu0 0.0
      %1374 = vmatpush1.msra.mxu0 %v370
      %1375 = vmatprep.subr.mxu0 0.0
      %1376 = vmatpush1.msra.mxu0 %v376
      %1377 = vmatprep.subr.mxu0 0.0
      %1378 = vmatpush1.msra.mxu0 0.0
      %1379 = vmatprep.subr.mxu0 0.0
      %1380 = vmatpush1.msra.mxu0 0.0
      %1381 = vmatprep.subr.mxu0 0.0
      %1382 = vmatpush1.msra.mxu0 0.0
      %1383 = vmatprep.subr.mxu0 0.0
      %1384 = vmatpush1.msra.mxu0 0.0
      %1385 = vmatprep.subr.mxu0 0.0
      %1386 = vmatpush1.msra.mxu0 0.0
      %1387 = vmatprep.subr.mxu0 0.0
      %1388 = vmatpush1.msra.mxu0 0.0
      %1389 = vmatprep.subr.mxu0 0.0
      %1390 = vmatpush1.msra.mxu0 0.0
      %1391 = vmatprep.subr.mxu0 0.0
      %1392 = vmatpush1.msra.mxu0 0.0
      %1393 = vmatprep.subr.mxu0 0.0
      %1394 = vmatpush1.msra.mxu0 0.0
      %1395 = vmatprep.subr.mxu0 0.0
      %1396 = vmatpush1.msra.mxu0 0.0
      %1397 = vmatprep.subr.mxu0 0.0
      %1398 = vmatpush1.msra.mxu0 0.0
      %1399 = vmatprep.subr.mxu0 0.0
      %1400 = vmatpush1.msra.mxu0 0.0
      %1401 = vmatprep.subr.mxu0 0.0
      %1402 = vmatpush1.msra.mxu0 0.0
      %1403 = vmatprep.subr.mxu0 0.0
      %1404 = vmatpush1.msra.mxu0 0.0
      %1405 = vmatprep.subr.mxu0 0.0
      %1406 = vmatpush1.msra.mxu0 0.0
      %1407 = vmatprep.subr.mxu0 0.0
      %1408 = vmatpush1.msra.mxu0 0.0
      %1409 = vmatprep.subr.mxu0 0.0
      %1410 = vmatpush1.msra.mxu0 0.0
      %1411 = vmatprep.subr.mxu0 0.0
      %1412 = vmatpush1.msra.mxu0 0.0
      %1413 = vmatprep.subr.mxu0 0.0
      %1414 = vmatpush1.msra.mxu0 0.0
      %1415 = vmatprep.subr.mxu0 0.0
      %1416 = vmatpush1.msra.mxu0 0.0
      %1417 = vmatprep.subr.mxu0 0.0
      %1418 = vmatpush1.msra.mxu0 0.0
      %1419 = vmatprep.subr.mxu0 0.0
      %1420 = vmatpush1.msra.mxu0 0.0
      %1421 = vmatprep.subr.mxu0 0.0
      %1422 = vmatpush1.msra.mxu0 0.0
      %1423 = vmatprep.subr.mxu0 0.0
      %1424 = vmatpush1.msra.mxu0 0.0
      %1425 = vmatprep.subr.mxu0 0.0
      %1426 = vmatpush1.msra.mxu0 0.0
      %1427 = vmatprep.subr.mxu0 0.0
      %1428 = vmatpush1.msra.mxu0 0.0
      %1429 = vmatprep.subr.mxu0 0.0
      %1430 = vmatpush1.msra.mxu0 0.0
      %1431 = vmatprep.subr.mxu0 0.0
      %1432 = vmatpush1.msra.mxu0 0.0
      %1433 = vmatprep.subr.mxu0 0.0
      %1434 = vmatpush1.msra.mxu0 0.0
      %1435 = vmatprep.subr.mxu0 0.0
      %1436 = vmatpush1.msra.mxu0 0.0
      %1437 = vmatprep.mubr.f32.mxu0 0.0
      %1438 = vmatmul.mubr.f32.gmra.mrb[0].mxu0 %v1368
      %v1439 = vpop.f32.mrb[0].mxu0
      %v1440 = vadd.f32 0.0, %v1439
      %v1441 = vpop.f32.mrb[0].mxu0
      %1442 = vmatprep.mubr.f32.mxu0 0.0
      %1443 = vmatmul.mubr.f32.gmra.mrb[0].mxu0 %v1371
      %v1444 = vpop.f32.mrb[0].mxu0
      %v1445 = vadd.f32 0.0, %v1444
      %v1446 = vpop.f32.mrb[0].mxu0
      %1447 = vdwg.mxu0
      %v1449 = vsel %vm1190, %v1353, 0
      %v1452 = vsel %vm1190, %v1354, 0
      %1454 = vmatprep.subr.mxu0 0.0
      %1455 = vmatpush1.msra.mxu0 %v382
      %1456 = vmatprep.subr.mxu0 0.0
      %1457 = vmatpush1.msra.mxu0 %v388
      %1458 = vmatprep.subr.mxu0 0.0
      %1459 = vmatpush1.msra.mxu0 0.0
      %1460 = vmatprep.subr.mxu0 0.0
      %1461 = vmatpush1.msra.mxu0 0.0
      %1462 = vmatprep.subr.mxu0 0.0
      %1463 = vmatpush1.msra.mxu0 0.0
      %1464 = vmatprep.subr.mxu0 0.0
      %1465 = vmatpush1.msra.mxu0 0.0
      %1466 = vmatprep.subr.mxu0 0.0
      %1467 = vmatpush1.msra.mxu0 0.0
      %1468 = vmatprep.subr.mxu0 0.0
      %1469 = vmatpush1.msra.mxu0 0.0
      %1470 = vmatprep.subr.mxu0 0.0
      %1471 = vmatpush1.msra.mxu0 0.0
      %1472 = vmatprep.subr.mxu0 0.0
      %1473 = vmatpush1.msra.mxu0 0.0
      %1474 = vmatprep.subr.mxu0 0.0
      %1475 = vmatpush1.msra.mxu0 0.0
      %1476 = vmatprep.subr.mxu0 0.0
      %1477 = vmatpush1.msra.mxu0 0.0
      %1478 = vmatprep.subr.mxu0 0.0
      %1479 = vmatpush1.msra.mxu0 0.0
      %1480 = vmatprep.subr.mxu0 0.0
      %1481 = vmatpush1.msra.mxu0 0.0
      %1482 = vmatprep.subr.mxu0 0.0
      %1483 = vmatpush1.msra.mxu0 0.0
      %1484 = vmatprep.subr.mxu0 0.0
      %1485 = vmatpush1.msra.mxu0 0.0
      %1486 = vmatprep.subr.mxu0 0.0
      %1487 = vmatpush1.msra.mxu0 0.0
      %1488 = vmatprep.subr.mxu0 0.0
      %1489 = vmatpush1.msra.mxu0 0.0
      %1490 = vmatprep.subr.mxu0 0.0
      %1491 = vmatpush1.msra.mxu0 0.0
      %1492 = vmatprep.subr.mxu0 0.0
      %1493 = vmatpush1.msra.mxu0 0.0
      %1494 = vmatprep.subr.mxu0 0.0
      %1495 = vmatpush1.msra.mxu0 0.0
      %1496 = vmatprep.subr.mxu0 0.0
      %1497 = vmatpush1.msra.mxu0 0.0
      %1498 = vmatprep.subr.mxu0 0.0
      %1499 = vmatpush1.msra.mxu0 0.0
      %1500 = vmatprep.subr.mxu0 0.0
      %1501 = vmatpush1.msra.mxu0 0.0
      %1502 = vmatprep.subr.mxu0 0.0
      %1503 = vmatpush1.msra.mxu0 0.0
      %1504 = vmatprep.subr.mxu0 0.0
      %1505 = vmatpush1.msra.mxu0 0.0
      %1506 = vmatprep.subr.mxu0 0.0
      %1507 = vmatpush1.msra.mxu0 0.0
      %1508 = vmatprep.subr.mxu0 0.0
      %1509 = vmatpush1.msra.mxu0 0.0
      %1510 = vmatprep.subr.mxu0 0.0
      %1511 = vmatpush1.msra.mxu0 0.0
      %1512 = vmatprep.subr.mxu0 0.0
      %1513 = vmatpush1.msra.mxu0 0.0
      %1514 = vmatprep.subr.mxu0 0.0
      %1515 = vmatpush1.msra.mxu0 0.0
      %1516 = vmatprep.subr.mxu0 0.0
      %1517 = vmatpush1.msra.mxu0 0.0
      %1518 = vmatprep.mubr.f32.mxu0 0.0
      %1519 = vmatmul.mubr.f32.gmra.mrb[0].mxu0 %v1449
      %v1520 = vpop.f32.mrb[0].mxu0
      %v1521 = vadd.f32 0.0, %v1520
      %v1522 = vpop.f32.mrb[0].mxu0
      %1523 = vmatprep.mubr.f32.mxu0 0.0
      %1524 = vmatmul.mubr.f32.gmra.mrb[0].mxu0 %v1452
      %v1525 = vpop.f32.mrb[0].mxu0
      %v1526 = vadd.f32 0.0, %v1525
      %v1527 = vpop.f32.mrb[0].mxu0
      %1528 = vdwg.mxu0
      %v1530 = vsel %vm1190, %v1355, 0
      %v1533 = vsel %vm1190, %v1356, 0
      %1535 = vmatprep.subr.mxu0 0.0
      %1536 = vmatpush1.msra.mxu0 %v394
      %1537 = vmatprep.subr.mxu0 0.0
      %1538 = vmatpush1.msra.mxu0 %v400
      %1539 = vmatprep.subr.mxu0 0.0
      %1540 = vmatpush1.msra.mxu0 0.0
      %1541 = vmatprep.subr.mxu0 0.0
      %1542 = vmatpush1.msra.mxu0 0.0
      %1543 = vmatprep.subr.mxu0 0.0
      %1544 = vmatpush1.msra.mxu0 0.0
      %1545 = vmatprep.subr.mxu0 0.0
      %1546 = vmatpush1.msra.mxu0 0.0
      %1547 = vmatprep.subr.mxu0 0.0
      %1548 = vmatpush1.msra.mxu0 0.0
      %1549 = vmatprep.subr.mxu0 0.0
      %1550 = vmatpush1.msra.mxu0 0.0
      %1551 = vmatprep.subr.mxu0 0.0
      %1552 = vmatpush1.msra.mxu0 0.0
      %1553 = vmatprep.subr.mxu0 0.0
      %1554 = vmatpush1.msra.mxu0 0.0
      %1555 = vmatprep.subr.mxu0 0.0
      %1556 = vmatpush1.msra.mxu0 0.0
      %1557 = vmatprep.subr.mxu0 0.0
      %1558 = vmatpush1.msra.mxu0 0.0
      %1559 = vmatprep.subr.mxu0 0.0
      %1560 = vmatpush1.msra.mxu0 0.0
      %1561 = vmatprep.subr.mxu0 0.0
      %1562 = vmatpush1.msra.mxu0 0.0
      %1563 = vmatprep.subr.mxu0 0.0
      %1564 = vmatpush1.msra.mxu0 0.0
      %1565 = vmatprep.subr.mxu0 0.0
      %1566 = vmatpush1.msra.mxu0 0.0
      %1567 = vmatprep.subr.mxu0 0.0
      %1568 = vmatpush1.msra.mxu0 0.0
      %1569 = vmatprep.subr.mxu0 0.0
      %1570 = vmatpush1.msra.mxu0 0.0
      %1571 = vmatprep.subr.mxu0 0.0
      %1572 = vmatpush1.msra.mxu0 0.0
      %1573 = vmatprep.subr.mxu0 0.0
      %1574 = vmatpush1.msra.mxu0 0.0
      %1575 = vmatprep.subr.mxu0 0.0
      %1576 = vmatpush1.msra.mxu0 0.0
      %1577 = vmatprep.subr.mxu0 0.0
      %1578 = vmatpush1.msra.mxu0 0.0
      %1579 = vmatprep.subr.mxu0 0.0
      %1580 = vmatpush1.msra.mxu0 0.0
      %1581 = vmatprep.subr.mxu0 0.0
      %1582 = vmatpush1.msra.mxu0 0.0
      %1583 = vmatprep.subr.mxu0 0.0
      %1584 = vmatpush1.msra.mxu0 0.0
      %1585 = vmatprep.subr.mxu0 0.0
      %1586 = vmatpush1.msra.mxu0 0.0
      %1587 = vmatprep.subr.mxu0 0.0
      %1588 = vmatpush1.msra.mxu0 0.0
      %1589 = vmatprep.subr.mxu0 0.0
      %1590 = vmatpush1.msra.mxu0 0.0
      %1591 = vmatprep.subr.mxu0 0.0
      %1592 = vmatpush1.msra.mxu0 0.0
      %1593 = vmatprep.subr.mxu0 0.0
      %1594 = vmatpush1.msra.mxu0 0.0
      %1595 = vmatprep.subr.mxu0 0.0
      %1596 = vmatpush1.msra.mxu0 0.0
      %1597 = vmatprep.subr.mxu0 0.0
      %1598 = vmatpush1.msra.mxu0 0.0
      %1599 = vmatprep.mubr.f32.mxu0 0.0
      %1600 = vmatmul.mubr.f32.gmra.mrb[0].mxu0 %v1530
      %v1601 = vpop.f32.mrb[0].mxu0
      %v1602 = vadd.f32 0.0, %v1601
      %v1603 = vpop.f32.mrb[0].mxu0
      %1604 = vmatprep.mubr.f32.mxu0 0.0
      %1605 = vmatmul.mubr.f32.gmra.mrb[0].mxu0 %v1533
      %v1606 = vpop.f32.mrb[0].mxu0
      %v1607 = vadd.f32 0.0, %v1606
      %v1608 = vpop.f32.mrb[0].mxu0
      %1609 = vdwg.mxu0
      %v1611 = vsel %vm1190, %v1357, 0
      %v1614 = vsel %vm1190, %v1358, 0
      %1616 = vmatprep.subr.mxu0 0.0
      %1617 = vmatpush1.msra.mxu0 %v406
      %1618 = vmatprep.subr.mxu0 0.0
      %1619 = vmatpush1.msra.mxu0 %v412
      %1620 = vmatprep.subr.mxu0 0.0
      %1621 = vmatpush1.msra.mxu0 0.0
      %1622 = vmatprep.subr.mxu0 0.0
      %1623 = vmatpush1.msra.mxu0 0.0
      %1624 = vmatprep.subr.mxu0 0.0
      %1625 = vmatpush1.msra.mxu0 0.0
      %1626 = vmatprep.subr.mxu0 0.0
      %1627 = vmatpush1.msra.mxu0 0.0
      %1628 = vmatprep.subr.mxu0 0.0
      %1629 = vmatpush1.msra.mxu0 0.0
      %1630 = vmatprep.subr.mxu0 0.0
      %1631 = vmatpush1.msra.mxu0 0.0
      %1632 = vmatprep.subr.mxu0 0.0
      %1633 = vmatpush1.msra.mxu0 0.0
      %1634 = vmatprep.subr.mxu0 0.0
      %1635 = vmatpush1.msra.mxu0 0.0
      %1636 = vmatprep.subr.mxu0 0.0
      %1637 = vmatpush1.msra.mxu0 0.0
      %1638 = vmatprep.subr.mxu0 0.0
      %1639 = vmatpush1.msra.mxu0 0.0
      %1640 = vmatprep.subr.mxu0 0.0
      %1641 = vmatpush1.msra.mxu0 0.0
      %1642 = vmatprep.subr.mxu0 0.0
      %1643 = vmatpush1.msra.mxu0 0.0
      %1644 = vmatprep.subr.mxu0 0.0
      %1645 = vmatpush1.msra.mxu0 0.0
      %1646 = vmatprep.subr.mxu0 0.0
      %1647 = vmatpush1.msra.mxu0 0.0
      %1648 = vmatprep.subr.mxu0 0.0
      %1649 = vmatpush1.msra.mxu0 0.0
      %1650 = vmatprep.subr.mxu0 0.0
      %1651 = vmatpush1.msra.mxu0 0.0
      %1652 = vmatprep.subr.mxu0 0.0
      %1653 = vmatpush1.msra.mxu0 0.0
      %1654 = vmatprep.subr.mxu0 0.0
      %1655 = vmatpush1.msra.mxu0 0.0
      %1656 = vmatprep.subr.mxu0 0.0
      %1657 = vmatpush1.msra.mxu0 0.0
      %1658 = vmatprep.subr.mxu0 0.0
      %1659 = vmatpush1.msra.mxu0 0.0
      %1660 = vmatprep.subr.mxu0 0.0
      %1661 = vmatpush1.msra.mxu0 0.0
      %1662 = vmatprep.subr.mxu0 0.0
      %1663 = vmatpush1.msra.mxu0 0.0
      %1664 = vmatprep.subr.mxu0 0.0
      %1665 = vmatpush1.msra.mxu0 0.0
      %1666 = vmatprep.subr.mxu0 0.0
      %1667 = vmatpush1.msra.mxu0 0.0
      %1668 = vmatprep.subr.mxu0 0.0
      %1669 = vmatpush1.msra.mxu0 0.0
      %1670 = vmatprep.subr.mxu0 0.0
      %1671 = vmatpush1.msra.mxu0 0.0
      %1672 = vmatprep.subr.mxu0 0.0
      %1673 = vmatpush1.msra.mxu0 0.0
      %1674 = vmatprep.subr.mxu0 0.0
      %1675 = vmatpush1.msra.mxu0 0.0
      %1676 = vmatprep.subr.mxu0 0.0
      %1677 = vmatpush1.msra.mxu0 0.0
      %1678 = vmatprep.subr.mxu0 0.0
      %1679 = vmatpush1.msra.mxu0 0.0
      %1680 = vmatprep.mubr.f32.mxu0 0.0
      %1681 = vmatmul.mubr.f32.gmra.mrb[0].mxu0 %v1611
      %v1682 = vpop.f32.mrb[0].mxu0
      %v1683 = vadd.f32 0.0, %v1682
      %v1684 = vpop.f32.mrb[0].mxu0
      %1685 = vmatprep.mubr.f32.mxu0 0.0
      %1686 = vmatmul.mubr.f32.gmra.mrb[0].mxu0 %v1614
      %v1687 = vpop.f32.mrb[0].mxu0
      %v1688 = vadd.f32 0.0, %v1687
      %v1689 = vpop.f32.mrb[0].mxu0
      %1690 = vdwg.mxu0
      %v1692 = vsel %vm1190, %v1359, 0
      %v1695 = vsel %vm1190, %v1360, 0
      %1697 = vmatprep.subr.mxu0 0.0
      %1698 = vmatpush1.msra.mxu0 %v418
      %1699 = vmatprep.subr.mxu0 0.0
      %1700 = vmatpush1.msra.mxu0 %v424
      %1701 = vmatprep.subr.mxu0 0.0
      %1702 = vmatpush1.msra.mxu0 0.0
      %1703 = vmatprep.subr.mxu0 0.0
      %1704 = vmatpush1.msra.mxu0 0.0
      %1705 = vmatprep.subr.mxu0 0.0
      %1706 = vmatpush1.msra.mxu0 0.0
      %1707 = vmatprep.subr.mxu0 0.0
      %1708 = vmatpush1.msra.mxu0 0.0
      %1709 = vmatprep.subr.mxu0 0.0
      %1710 = vmatpush1.msra.mxu0 0.0
      %1711 = vmatprep.subr.mxu0 0.0
      %1712 = vmatpush1.msra.mxu0 0.0
      %1713 = vmatprep.subr.mxu0 0.0
      %1714 = vmatpush1.msra.mxu0 0.0
      %1715 = vmatprep.subr.mxu0 0.0
      %1716 = vmatpush1.msra.mxu0 0.0
      %1717 = vmatprep.subr.mxu0 0.0
      %1718 = vmatpush1.msra.mxu0 0.0
      %1719 = vmatprep.subr.mxu0 0.0
      %1720 = vmatpush1.msra.mxu0 0.0
      %1721 = vmatprep.subr.mxu0 0.0
      %1722 = vmatpush1.msra.mxu0 0.0
      %1723 = vmatprep.subr.mxu0 0.0
      %1724 = vmatpush1.msra.mxu0 0.0
      %1725 = vmatprep.subr.mxu0 0.0
      %1726 = vmatpush1.msra.mxu0 0.0
      %1727 = vmatprep.subr.mxu0 0.0
      %1728 = vmatpush1.msra.mxu0 0.0
      %1729 = vmatprep.subr.mxu0 0.0
      %1730 = vmatpush1.msra.mxu0 0.0
      %1731 = vmatprep.subr.mxu0 0.0
      %1732 = vmatpush1.msra.mxu0 0.0
      %1733 = vmatprep.subr.mxu0 0.0
      %1734 = vmatpush1.msra.mxu0 0.0
      %1735 = vmatprep.subr.mxu0 0.0
      %1736 = vmatpush1.msra.mxu0 0.0
      %1737 = vmatprep.subr.mxu0 0.0
      %1738 = vmatpush1.msra.mxu0 0.0
      %1739 = vmatprep.subr.mxu0 0.0
      %1740 = vmatpush1.msra.mxu0 0.0
      %1741 = vmatprep.subr.mxu0 0.0
      %1742 = vmatpush1.msra.mxu0 0.0
      %1743 = vmatprep.subr.mxu0 0.0
      %1744 = vmatpush1.msra.mxu0 0.0
      %1745 = vmatprep.subr.mxu0 0.0
      %1746 = vmatpush1.msra.mxu0 0.0
      %1747 = vmatprep.subr.mxu0 0.0
      %1748 = vmatpush1.msra.mxu0 0.0
      %1749 = vmatprep.subr.mxu0 0.0
      %1750 = vmatpush1.msra.mxu0 0.0
      %1751 = vmatprep.subr.mxu0 0.0
      %1752 = vmatpush1.msra.mxu0 0.0
      %1753 = vmatprep.subr.mxu0 0.0
      %1754 = vmatpush1.msra.mxu0 0.0
      %1755 = vmatprep.subr.mxu0 0.0
      %1756 = vmatpush1.msra.mxu0 0.0
      %1757 = vmatprep.subr.mxu0 0.0
      %1758 = vmatpush1.msra.mxu0 0.0
      %1759 = vmatprep.subr.mxu0 0.0
      %1760 = vmatpush1.msra.mxu0 0.0
      %1761 = vmatprep.mubr.f32.mxu0 0.0
      %1762 = vmatmul.mubr.f32.gmra.mrb[0].mxu0 %v1692
      %v1763 = vpop.f32.mrb[0].mxu0
      %v1764 = vadd.f32 0.0, %v1763
      %v1765 = vpop.f32.mrb[0].mxu0
      %1766 = vmatprep.mubr.f32.mxu0 0.0
      %1767 = vmatmul.mubr.f32.gmra.mrb[0].mxu0 %v1695
      %v1768 = vpop.f32.mrb[0].mxu0
      %v1769 = vadd.f32 0.0, %v1768
      %v1770 = vpop.f32.mrb[0].mxu0
      %1771 = vdwg.mxu0
      %v1773 = vsel %vm1190, %v1361, 0
      %v1776 = vsel %vm1190, %v1362, 0
      %1778 = vmatprep.subr.mxu0 0.0
      %1779 = vmatpush1.msra.mxu0 %v430
      %1780 = vmatprep.subr.mxu0 0.0
      %1781 = vmatpush1.msra.mxu0 %v436
      %1782 = vmatprep.subr.mxu0 0.0
      %1783 = vmatpush1.msra.mxu0 0.0
      %1784 = vmatprep.subr.mxu0 0.0
      %1785 = vmatpush1.msra.mxu0 0.0
      %1786 = vmatprep.subr.mxu0 0.0
      %1787 = vmatpush1.msra.mxu0 0.0
      %1788 = vmatprep.subr.mxu0 0.0
      %1789 = vmatpush1.msra.mxu0 0.0
      %1790 = vmatprep.subr.mxu0 0.0
      %1791 = vmatpush1.msra.mxu0 0.0
      %1792 = vmatprep.subr.mxu0 0.0
      %1793 = vmatpush1.msra.mxu0 0.0
      %1794 = vmatprep.subr.mxu0 0.0
      %1795 = vmatpush1.msra.mxu0 0.0
      %1796 = vmatprep.subr.mxu0 0.0
      %1797 = vmatpush1.msra.mxu0 0.0
      %1798 = vmatprep.subr.mxu0 0.0
      %1799 = vmatpush1.msra.mxu0 0.0
      %1800 = vmatprep.subr.mxu0 0.0
      %1801 = vmatpush1.msra.mxu0 0.0
      %1802 = vmatprep.subr.mxu0 0.0
      %1803 = vmatpush1.msra.mxu0 0.0
      %1804 = vmatprep.subr.mxu0 0.0
      %1805 = vmatpush1.msra.mxu0 0.0
      %1806 = vmatprep.subr.mxu0 0.0
      %1807 = vmatpush1.msra.mxu0 0.0
      %1808 = vmatprep.subr.mxu0 0.0
      %1809 = vmatpush1.msra.mxu0 0.0
      %1810 = vmatprep.subr.mxu0 0.0
      %1811 = vmatpush1.msra.mxu0 0.0
      %1812 = vmatprep.subr.mxu0 0.0
      %1813 = vmatpush1.msra.mxu0 0.0
      %1814 = vmatprep.subr.mxu0 0.0
      %1815 = vmatpush1.msra.mxu0 0.0
      %1816 = vmatprep.subr.mxu0 0.0
      %1817 = vmatpush1.msra.mxu0 0.0
      %1818 = vmatprep.subr.mxu0 0.0
      %1819 = vmatpush1.msra.mxu0 0.0
      %1820 = vmatprep.subr.mxu0 0.0
      %1821 = vmatpush1.msra.mxu0 0.0
      %1822 = vmatprep.subr.mxu0 0.0
      %1823 = vmatpush1.msra.mxu0 0.0
      %1824 = vmatprep.subr.mxu0 0.0
      %1825 = vmatpush1.msra.mxu0 0.0
      %1826 = vmatprep.subr.mxu0 0.0
      %1827 = vmatpush1.msra.mxu0 0.0
      %1828 = vmatprep.subr.mxu0 0.0
      %1829 = vmatpush1.msra.mxu0 0.0
      %1830 = vmatprep.subr.mxu0 0.0
      %1831 = vmatpush1.msra.mxu0 0.0
      %1832 = vmatprep.subr.mxu0 0.0
      %1833 = vmatpush1.msra.mxu0 0.0
      %1834 = vmatprep.subr.mxu0 0.0
      %1835 = vmatpush1.msra.mxu0 0.0
      %1836 = vmatprep.subr.mxu0 0.0
      %1837 = vmatpush1.msra.mxu0 0.0
      %1838 = vmatprep.subr.mxu0 0.0
      %1839 = vmatpush1.msra.mxu0 0.0
      %1840 = vmatprep.subr.mxu0 0.0
      %1841 = vmatpush1.msra.mxu0 0.0
      %1842 = vmatprep.mubr.f32.mxu0 0.0
      %1843 = vmatmul.mubr.f32.gmra.mrb[0].mxu0 %v1773
      %v1844 = vpop.f32.mrb[0].mxu0
      %v1845 = vadd.f32 0.0, %v1844
      %v1846 = vpop.f32.mrb[0].mxu0
      %1847 = vmatprep.mubr.f32.mxu0 0.0
      %1848 = vmatmul.mubr.f32.gmra.mrb[0].mxu0 %v1776
      %v1849 = vpop.f32.mrb[0].mxu0
      %v1850 = vadd.f32 0.0, %v1849
      %v1851 = vpop.f32.mrb[0].mxu0
      %1852 = vdwg.mxu0
      %v1854 = vsel %vm1190, %v1363, 0
      %v1857 = vsel %vm1190, %v1364, 0
      %1859 = vmatprep.subr.mxu0 0.0
      %1860 = vmatpush1.msra.mxu0 %v442
      %1861 = vmatprep.subr.mxu0 0.0
      %1862 = vmatpush1.msra.mxu0 %v448
      %1863 = vmatprep.subr.mxu0 0.0
      %1864 = vmatpush1.msra.mxu0 0.0
      %1865 = vmatprep.subr.mxu0 0.0
      %1866 = vmatpush1.msra.mxu0 0.0
      %1867 = vmatprep.subr.mxu0 0.0
      %1868 = vmatpush1.msra.mxu0 0.0
      %1869 = vmatprep.subr.mxu0 0.0
      %1870 = vmatpush1.msra.mxu0 0.0
      %1871 = vmatprep.subr.mxu0 0.0
      %1872 = vmatpush1.msra.mxu0 0.0
      %1873 = vmatprep.subr.mxu0 0.0
      %1874 = vmatpush1.msra.mxu0 0.0
      %1875 = vmatprep.subr.mxu0 0.0
      %1876 = vmatpush1.msra.mxu0 0.0
      %1877 = vmatprep.subr.mxu0 0.0
      %1878 = vmatpush1.msra.mxu0 0.0
      %1879 = vmatprep.subr.mxu0 0.0
      %1880 = vmatpush1.msra.mxu0 0.0
      %1881 = vmatprep.subr.mxu0 0.0
      %1882 = vmatpush1.msra.mxu0 0.0
      %1883 = vmatprep.subr.mxu0 0.0
      %1884 = vmatpush1.msra.mxu0 0.0
      %1885 = vmatprep.subr.mxu0 0.0
      %1886 = vmatpush1.msra.mxu0 0.0
      %1887 = vmatprep.subr.mxu0 0.0
      %1888 = vmatpush1.msra.mxu0 0.0
      %1889 = vmatprep.subr.mxu0 0.0
      %1890 = vmatpush1.msra.mxu0 0.0
      %1891 = vmatprep.subr.mxu0 0.0
      %1892 = vmatpush1.msra.mxu0 0.0
      %1893 = vmatprep.subr.mxu0 0.0
      %1894 = vmatpush1.msra.mxu0 0.0
      %1895 = vmatprep.subr.mxu0 0.0
      %1896 = vmatpush1.msra.mxu0 0.0
      %1897 = vmatprep.subr.mxu0 0.0
      %1898 = vmatpush1.msra.mxu0 0.0
      %1899 = vmatprep.subr.mxu0 0.0
      %1900 = vmatpush1.msra.mxu0 0.0
      %1901 = vmatprep.subr.mxu0 0.0
      %1902 = vmatpush1.msra.mxu0 0.0
      %1903 = vmatprep.subr.mxu0 0.0
      %1904 = vmatpush1.msra.mxu0 0.0
      %1905 = vmatprep.subr.mxu0 0.0
      %1906 = vmatpush1.msra.mxu0 0.0
      %1907 = vmatprep.subr.mxu0 0.0
      %1908 = vmatpush1.msra.mxu0 0.0
      %1909 = vmatprep.subr.mxu0 0.0
      %1910 = vmatpush1.msra.mxu0 0.0
      %1911 = vmatprep.subr.mxu0 0.0
      %1912 = vmatpush1.msra.mxu0 0.0
      %1913 = vmatprep.subr.mxu0 0.0
      %1914 = vmatpush1.msra.mxu0 0.0
      %1915 = vmatprep.subr.mxu0 0.0
      %1916 = vmatpush1.msra.mxu0 0.0
      %1917 = vmatprep.subr.mxu0 0.0
      %1918 = vmatpush1.msra.mxu0 0.0
      %1919 = vmatprep.subr.mxu0 0.0
      %1920 = vmatpush1.msra.mxu0 0.0
      %1921 = vmatprep.subr.mxu0 0.0
      %1922 = vmatpush1.msra.mxu0 0.0
      %1923 = vmatprep.mubr.f32.mxu0 0.0
      %1924 = vmatmul.mubr.f32.gmra.mrb[0].mxu0 %v1854
      %v1925 = vpop.f32.mrb[0].mxu0
      %v1926 = vadd.f32 0.0, %v1925
      %v1927 = vpop.f32.mrb[0].mxu0
      %1928 = vmatprep.mubr.f32.mxu0 0.0
      %1929 = vmatmul.mubr.f32.gmra.mrb[0].mxu0 %v1857
      %v1930 = vpop.f32.mrb[0].mxu0
      %v1931 = vadd.f32 0.0, %v1930
      %v1932 = vpop.f32.mrb[0].mxu0
      %1933 = vdwg.mxu0
      %v1935 = vsel %vm1190, %v1365, 0
      %v1938 = vsel %vm1190, %v1366, 0
      %1940 = vmatprep.subr.mxu0 0.0
      %1941 = vmatpush1.msra.mxu0 %v454
      %1942 = vmatprep.subr.mxu0 0.0
      %1943 = vmatpush1.msra.mxu0 %v460
      %1944 = vmatprep.subr.mxu0 0.0
      %1945 = vmatpush1.msra.mxu0 0.0
      %1946 = vmatprep.subr.mxu0 0.0
      %1947 = vmatpush1.msra.mxu0 0.0
      %1948 = vmatprep.subr.mxu0 0.0
      %1949 = vmatpush1.msra.mxu0 0.0
      %1950 = vmatprep.subr.mxu0 0.0
      %1951 = vmatpush1.msra.mxu0 0.0
      %1952 = vmatprep.subr.mxu0 0.0
      %1953 = vmatpush1.msra.mxu0 0.0
      %1954 = vmatprep.subr.mxu0 0.0
      %1955 = vmatpush1.msra.mxu0 0.0
      %1956 = vmatprep.subr.mxu0 0.0
      %1957 = vmatpush1.msra.mxu0 0.0
      %1958 = vmatprep.subr.mxu0 0.0
      %1959 = vmatpush1.msra.mxu0 0.0
      %1960 = vmatprep.subr.mxu0 0.0
      %1961 = vmatpush1.msra.mxu0 0.0
      %1962 = vmatprep.subr.mxu0 0.0
      %1963 = vmatpush1.msra.mxu0 0.0
      %1964 = vmatprep.subr.mxu0 0.0
      %1965 = vmatpush1.msra.mxu0 0.0
      %1966 = vmatprep.subr.mxu0 0.0
      %1967 = vmatpush1.msra.mxu0 0.0
      %1968 = vmatprep.subr.mxu0 0.0
      %1969 = vmatpush1.msra.mxu0 0.0
      %1970 = vmatprep.subr.mxu0 0.0
      %1971 = vmatpush1.msra.mxu0 0.0
      %1972 = vmatprep.subr.mxu0 0.0
      %1973 = vmatpush1.msra.mxu0 0.0
      %1974 = vmatprep.subr.mxu0 0.0
      %1975 = vmatpush1.msra.mxu0 0.0
      %1976 = vmatprep.subr.mxu0 0.0
      %1977 = vmatpush1.msra.mxu0 0.0
      %1978 = vmatprep.subr.mxu0 0.0
      %1979 = vmatpush1.msra.mxu0 0.0
      %1980 = vmatprep.subr.mxu0 0.0
      %1981 = vmatpush1.msra.mxu0 0.0
      %1982 = vmatprep.subr.mxu0 0.0
      %1983 = vmatpush1.msra.mxu0 0.0
      %1984 = vmatprep.subr.mxu0 0.0
      %1985 = vmatpush1.msra.mxu0 0.0
      %1986 = vmatprep.subr.mxu0 0.0
      %1987 = vmatpush1.msra.mxu0 0.0
      %1988 = vmatprep.subr.mxu0 0.0
      %1989 = vmatpush1.msra.mxu0 0.0
      %1990 = vmatprep.subr.mxu0 0.0
      %1991 = vmatpush1.msra.mxu0 0.0
      %1992 = vmatprep.subr.mxu0 0.0
      %1993 = vmatpush1.msra.mxu0 0.0
      %1994 = vmatprep.subr.mxu0 0.0
      %1995 = vmatpush1.msra.mxu0 0.0
      %1996 = vmatprep.subr.mxu0 0.0
      %1997 = vmatpush1.msra.mxu0 0.0
      %1998 = vmatprep.subr.mxu0 0.0
      %1999 = vmatpush1.msra.mxu0 0.0
      %2000 = vmatprep.subr.mxu0 0.0
      %2001 = vmatpush1.msra.mxu0 0.0
      %2002 = vmatprep.subr.mxu0 0.0
      %2003 = vmatpush1.msra.mxu0 0.0
      %2004 = vmatprep.mubr.f32.mxu0 0.0
      %2005 = vmatmul.mubr.f32.gmra.mrb[0].mxu0 %v1935
      %v2006 = vpop.f32.mrb[0].mxu0
      %v2007 = vadd.f32 0.0, %v2006
      %v2008 = vpop.f32.mrb[0].mxu0
      %2009 = vmatprep.mubr.f32.mxu0 0.0
      %2010 = vmatmul.mubr.f32.gmra.mrb[0].mxu0 %v1938
      %v2011 = vpop.f32.mrb[0].mxu0
      %v2012 = vadd.f32 0.0, %v2011
      %v2013 = vpop.f32.mrb[0].mxu0
      %2014 = vdwg.mxu0
      %2015 = vrot.lane.b32.xlu0 %v368, 96
      %v2016 = vpop.permute.xlu0 %2015
      %2017 = vrot.lane.b32.xlu0 %v374, 96
      %v2018 = vpop.permute.xlu0 %2017
      %2019 = vrot.lane.b32.xlu0 %v368, 32
      %v2020 = vpop.permute.xlu0 %2019
      %2021 = vrot.lane.b32.xlu0 %v374, 32
      %v2022 = vpop.permute.xlu0 %2021
      %v2023 = vsel %vm252, %v2016, 0
      %v2025 = vsel %vm252, %v2018, 0
      %v2027 = vsel %vm252, %v2020, 0
      %v2029 = vsel %vm252, %v2022, 0
      %2031 = vmatprep.subr.mxu0 0.0
      %2032 = vmatpush1.xpose.msra.mxu0 %v2027
      %2033 = vmatprep.subr.mxu0 0.0
      %2034 = vmatpush1.xpose.msra.mxu0 %v2029
      %2035 = vmatprep.subr.mxu0 0.0
      %2036 = vmatpush1.xpose.msra.mxu0 0.0
      %2037 = vmatprep.subr.mxu0 0.0
      %2038 = vmatpush1.xpose.msra.mxu0 0.0
      %2039 = vmatprep.subr.mxu0 0.0
      %2040 = vmatpush1.xpose.msra.mxu0 0.0
      %2041 = vmatprep.subr.mxu0 0.0
      %2042 = vmatpush1.xpose.msra.mxu0 0.0
      %2043 = vmatprep.subr.mxu0 0.0
      %2044 = vmatpush1.xpose.msra.mxu0 0.0
      %2045 = vmatprep.subr.mxu0 0.0
      %2046 = vmatpush1.xpose.msra.mxu0 0.0
      %2047 = vmatprep.subr.mxu0 0.0
      %2048 = vmatpush1.xpose.msra.mxu0 0.0
      %2049 = vmatprep.subr.mxu0 0.0
      %2050 = vmatpush1.xpose.msra.mxu0 0.0
      %2051 = vmatprep.subr.mxu0 0.0
      %2052 = vmatpush1.xpose.msra.mxu0 0.0
      %2053 = vmatprep.subr.mxu0 0.0
      %2054 = vmatpush1.xpose.msra.mxu0 0.0
      %2055 = vmatprep.subr.mxu0 0.0
      %2056 = vmatpush1.xpose.msra.mxu0 0.0
      %2057 = vmatprep.subr.mxu0 0.0
      %2058 = vmatpush1.xpose.msra.mxu0 0.0
      %2059 = vmatprep.subr.mxu0 0.0
      %2060 = vmatpush1.xpose.msra.mxu0 0.0
      %2061 = vmatprep.subr.mxu0 0.0
      %2062 = vmatpush1.xpose.msra.mxu0 0.0
      %2063 = vmatprep.subr.mxu0 0.0
      %2064 = vmatpush1.xpose.msra.mxu0 0.0
      %2065 = vmatprep.subr.mxu0 0.0
      %2066 = vmatpush1.xpose.msra.mxu0 0.0
      %2067 = vmatprep.subr.mxu0 0.0
      %2068 = vmatpush1.xpose.msra.mxu0 0.0
      %2069 = vmatprep.subr.mxu0 0.0
      %2070 = vmatpush1.xpose.msra.mxu0 0.0
      %2071 = vmatprep.subr.mxu0 0.0
      %2072 = vmatpush1.xpose.msra.mxu0 0.0
      %2073 = vmatprep.subr.mxu0 0.0
      %2074 = vmatpush1.xpose.msra.mxu0 0.0
      %2075 = vmatprep.subr.mxu0 0.0
      %2076 = vmatpush1.xpose.msra.mxu0 0.0
      %2077 = vmatprep.subr.mxu0 0.0
      %2078 = vmatpush1.xpose.msra.mxu0 0.0
      %2079 = vmatprep.subr.mxu0 0.0
      %2080 = vmatpush1.xpose.msra.mxu0 0.0
      %2081 = vmatprep.subr.mxu0 0.0
      %2082 = vmatpush1.xpose.msra.mxu0 0.0
      %2083 = vmatprep.subr.mxu0 0.0
      %2084 = vmatpush1.xpose.msra.mxu0 0.0
      %2085 = vmatprep.subr.mxu0 0.0
      %2086 = vmatpush1.xpose.msra.mxu0 0.0
      %2087 = vmatprep.subr.mxu0 0.0
      %2088 = vmatpush1.xpose.msra.mxu0 0.0
      %2089 = vmatprep.subr.mxu0 0.0
      %2090 = vmatpush1.xpose.msra.mxu0 0.0
      %2091 = vmatprep.subr.mxu0 0.0
      %2092 = vmatpush1.xpose.msra.mxu0 0.0
      %2093 = vmatprep.subr.mxu0 0.0
      %2094 = vmatpush1.xpose.msra.mxu0 0.0
      %2095 = vmatprep.mubr.f32.mxu0 0.0
      %2096 = vmatmul.mubr.f32.gmra.mrb[0].mxu0 %v2023
      %v2097 = vpop.f32.mrb[0].mxu0
      %v2098 = vadd.f32 0.0, %v2097
      %v2099 = vpop.f32.mrb[0].mxu0
      %2100 = vmatprep.mubr.f32.mxu0 0.0
      %2101 = vmatmul.mubr.f32.gmra.mrb[0].mxu0 %v2025
      %v2102 = vpop.f32.mrb[0].mxu0
      %v2103 = vadd.f32 0.0, %v2102
      %v2104 = vpop.f32.mrb[0].mxu0
      %2105 = vdwg.mxu0
      %2106 = vrot.lane.b32.xlu0 %v380, 96
      %v2107 = vpop.permute.xlu0 %2106
      %2108 = vrot.lane.b32.xlu0 %v386, 96
      %v2109 = vpop.permute.xlu0 %2108
      %2110 = vrot.lane.b32.xlu0 %v380, 32
      %v2111 = vpop.permute.xlu0 %2110
      %2112 = vrot.lane.b32.xlu0 %v386, 32
      %v2113 = vpop.permute.xlu0 %2112
      %v2114 = vsel %vm252, %v2107, 0
      %v2116 = vsel %vm252, %v2109, 0
      %v2118 = vsel %vm252, %v2111, 0
      %v2120 = vsel %vm252, %v2113, 0
      %2122 = vmatprep.subr.mxu0 0.0
      %2123 = vmatpush1.xpose.msra.mxu0 %v2118
      %2124 = vmatprep.subr.mxu0 0.0
      %2125 = vmatpush1.xpose.msra.mxu0 %v2120
      %2126 = vmatprep.subr.mxu0 0.0
      %2127 = vmatpush1.xpose.msra.mxu0 0.0
      %2128 = vmatprep.subr.mxu0 0.0
      %2129 = vmatpush1.xpose.msra.mxu0 0.0
      %2130 = vmatprep.subr.mxu0 0.0
      %2131 = vmatpush1.xpose.msra.mxu0 0.0
      %2132 = vmatprep.subr.mxu0 0.0
      %2133 = vmatpush1.xpose.msra.mxu0 0.0
      %2134 = vmatprep.subr.mxu0 0.0
      %2135 = vmatpush1.xpose.msra.mxu0 0.0
      %2136 = vmatprep.subr.mxu0 0.0
      %2137 = vmatpush1.xpose.msra.mxu0 0.0
      %2138 = vmatprep.subr.mxu0 0.0
      %2139 = vmatpush1.xpose.msra.mxu0 0.0
      %2140 = vmatprep.subr.mxu0 0.0
      %2141 = vmatpush1.xpose.msra.mxu0 0.0
      %2142 = vmatprep.subr.mxu0 0.0
      %2143 = vmatpush1.xpose.msra.mxu0 0.0
      %2144 = vmatprep.subr.mxu0 0.0
      %2145 = vmatpush1.xpose.msra.mxu0 0.0
      %2146 = vmatprep.subr.mxu0 0.0
      %2147 = vmatpush1.xpose.msra.mxu0 0.0
      %2148 = vmatprep.subr.mxu0 0.0
      %2149 = vmatpush1.xpose.msra.mxu0 0.0
      %2150 = vmatprep.subr.mxu0 0.0
      %2151 = vmatpush1.xpose.msra.mxu0 0.0
      %2152 = vmatprep.subr.mxu0 0.0
      %2153 = vmatpush1.xpose.msra.mxu0 0.0
      %2154 = vmatprep.subr.mxu0 0.0
      %2155 = vmatpush1.xpose.msra.mxu0 0.0
      %2156 = vmatprep.subr.mxu0 0.0
      %2157 = vmatpush1.xpose.msra.mxu0 0.0
      %2158 = vmatprep.subr.mxu0 0.0
      %2159 = vmatpush1.xpose.msra.mxu0 0.0
      %2160 = vmatprep.subr.mxu0 0.0
      %2161 = vmatpush1.xpose.msra.mxu0 0.0
      %2162 = vmatprep.subr.mxu0 0.0
      %2163 = vmatpush1.xpose.msra.mxu0 0.0
      %2164 = vmatprep.subr.mxu0 0.0
      %2165 = vmatpush1.xpose.msra.mxu0 0.0
      %2166 = vmatprep.subr.mxu0 0.0
      %2167 = vmatpush1.xpose.msra.mxu0 0.0
      %2168 = vmatprep.subr.mxu0 0.0
      %2169 = vmatpush1.xpose.msra.mxu0 0.0
      %2170 = vmatprep.subr.mxu0 0.0
      %2171 = vmatpush1.xpose.msra.mxu0 0.0
      %2172 = vmatprep.subr.mxu0 0.0
      %2173 = vmatpush1.xpose.msra.mxu0 0.0
      %2174 = vmatprep.subr.mxu0 0.0
      %2175 = vmatpush1.xpose.msra.mxu0 0.0
      %2176 = vmatprep.subr.mxu0 0.0
      %2177 = vmatpush1.xpose.msra.mxu0 0.0
      %2178 = vmatprep.subr.mxu0 0.0
      %2179 = vmatpush1.xpose.msra.mxu0 0.0
      %2180 = vmatprep.subr.mxu0 0.0
      %2181 = vmatpush1.xpose.msra.mxu0 0.0
      %2182 = vmatprep.subr.mxu0 0.0
      %2183 = vmatpush1.xpose.msra.mxu0 0.0
      %2184 = vmatprep.subr.mxu0 0.0
      %2185 = vmatpush1.xpose.msra.mxu0 0.0
      %2186 = vmatprep.mubr.f32.mxu0 0.0
      %2187 = vmatmul.mubr.f32.gmra.mrb[0].mxu0 %v2114
      %v2188 = vpop.f32.mrb[0].mxu0
      %v2189 = vadd.f32 0.0, %v2188
      %v2190 = vpop.f32.mrb[0].mxu0
      %2191 = vmatprep.mubr.f32.mxu0 0.0
      %2192 = vmatmul.mubr.f32.gmra.mrb[0].mxu0 %v2116
      %v2193 = vpop.f32.mrb[0].mxu0
      %v2194 = vadd.f32 0.0, %v2193
      %v2195 = vpop.f32.mrb[0].mxu0
      %2196 = vdwg.mxu0
      %2197 = vrot.lane.b32.xlu0 %v392, 96
      %v2198 = vpop.permute.xlu0 %2197
      %2199 = vrot.lane.b32.xlu0 %v398, 96
      %v2200 = vpop.permute.xlu0 %2199
      %2201 = vrot.lane.b32.xlu0 %v392, 32
      %v2202 = vpop.permute.xlu0 %2201
      %2203 = vrot.lane.b32.xlu0 %v398, 32
      %v2204 = vpop.permute.xlu0 %2203
      %v2205 = vsel %vm252, %v2198, 0
      %v2207 = vsel %vm252, %v2200, 0
      %v2209 = vsel %vm252, %v2202, 0
      %v2211 = vsel %vm252, %v2204, 0
      %2213 = vmatprep.subr.mxu0 0.0
      %2214 = vmatpush1.xpose.msra.mxu0 %v2209
      %2215 = vmatprep.subr.mxu0 0.0
      %2216 = vmatpush1.xpose.msra.mxu0 %v2211
      %2217 = vmatprep.subr.mxu0 0.0
      %2218 = vmatpush1.xpose.msra.mxu0 0.0
      %2219 = vmatprep.subr.mxu0 0.0
      %2220 = vmatpush1.xpose.msra.mxu0 0.0
      %2221 = vmatprep.subr.mxu0 0.0
      %2222 = vmatpush1.xpose.msra.mxu0 0.0
      %2223 = vmatprep.subr.mxu0 0.0
      %2224 = vmatpush1.xpose.msra.mxu0 0.0
      %2225 = vmatprep.subr.mxu0 0.0
      %2226 = vmatpush1.xpose.msra.mxu0 0.0
      %2227 = vmatprep.subr.mxu0 0.0
      %2228 = vmatpush1.xpose.msra.mxu0 0.0
      %2229 = vmatprep.subr.mxu0 0.0
      %2230 = vmatpush1.xpose.msra.mxu0 0.0
      %2231 = vmatprep.subr.mxu0 0.0
      %2232 = vmatpush1.xpose.msra.mxu0 0.0
      %2233 = vmatprep.subr.mxu0 0.0
      %2234 = vmatpush1.xpose.msra.mxu0 0.0
      %2235 = vmatprep.subr.mxu0 0.0
      %2236 = vmatpush1.xpose.msra.mxu0 0.0
      %2237 = vmatprep.subr.mxu0 0.0
      %2238 = vmatpush1.xpose.msra.mxu0 0.0
      %2239 = vmatprep.subr.mxu0 0.0
      %2240 = vmatpush1.xpose.msra.mxu0 0.0
      %2241 = vmatprep.subr.mxu0 0.0
      %2242 = vmatpush1.xpose.msra.mxu0 0.0
      %2243 = vmatprep.subr.mxu0 0.0
      %2244 = vmatpush1.xpose.msra.mxu0 0.0
      %2245 = vmatprep.subr.mxu0 0.0
      %2246 = vmatpush1.xpose.msra.mxu0 0.0
      %2247 = vmatprep.subr.mxu0 0.0
      %2248 = vmatpush1.xpose.msra.mxu0 0.0
      %2249 = vmatprep.subr.mxu0 0.0
      %2250 = vmatpush1.xpose.msra.mxu0 0.0
      %2251 = vmatprep.subr.mxu0 0.0
      %2252 = vmatpush1.xpose.msra.mxu0 0.0
      %2253 = vmatprep.subr.mxu0 0.0
      %2254 = vmatpush1.xpose.msra.mxu0 0.0
      %2255 = vmatprep.subr.mxu0 0.0
      %2256 = vmatpush1.xpose.msra.mxu0 0.0
      %2257 = vmatprep.subr.mxu0 0.0
      %2258 = vmatpush1.xpose.msra.mxu0 0.0
      %2259 = vmatprep.subr.mxu0 0.0
      %2260 = vmatpush1.xpose.msra.mxu0 0.0
      %2261 = vmatprep.subr.mxu0 0.0
      %2262 = vmatpush1.xpose.msra.mxu0 0.0
      %2263 = vmatprep.subr.mxu0 0.0
      %2264 = vmatpush1.xpose.msra.mxu0 0.0
      %2265 = vmatprep.subr.mxu0 0.0
      %2266 = vmatpush1.xpose.msra.mxu0 0.0
      %2267 = vmatprep.subr.mxu0 0.0
      %2268 = vmatpush1.xpose.msra.mxu0 0.0
      %2269 = vmatprep.subr.mxu0 0.0
      %2270 = vmatpush1.xpose.msra.mxu0 0.0
      %2271 = vmatprep.subr.mxu0 0.0
      %2272 = vmatpush1.xpose.msra.mxu0 0.0
      %2273 = vmatprep.subr.mxu0 0.0
      %2274 = vmatpush1.xpose.msra.mxu0 0.0
      %2275 = vmatprep.subr.mxu0 0.0
      %2276 = vmatpush1.xpose.msra.mxu0 0.0
      %2277 = vmatprep.mubr.f32.mxu0 0.0
      %2278 = vmatmul.mubr.f32.gmra.mrb[0].mxu0 %v2205
      %v2279 = vpop.f32.mrb[0].mxu0
      %v2280 = vadd.f32 0.0, %v2279
      %v2281 = vpop.f32.mrb[0].mxu0
      %2282 = vmatprep.mubr.f32.mxu0 0.0
      %2283 = vmatmul.mubr.f32.gmra.mrb[0].mxu0 %v2207
      %v2284 = vpop.f32.mrb[0].mxu0
      %v2285 = vadd.f32 0.0, %v2284
      %v2286 = vpop.f32.mrb[0].mxu0
      %2287 = vdwg.mxu0
      %2288 = vrot.lane.b32.xlu0 %v404, 96
      %v2289 = vpop.permute.xlu0 %2288
      %2290 = vrot.lane.b32.xlu0 %v410, 96
      %v2291 = vpop.permute.xlu0 %2290
      %2292 = vrot.lane.b32.xlu0 %v404, 32
      %v2293 = vpop.permute.xlu0 %2292
      %2294 = vrot.lane.b32.xlu0 %v410, 32
      %v2295 = vpop.permute.xlu0 %2294
      %v2296 = vsel %vm252, %v2289, 0
      %v2298 = vsel %vm252, %v2291, 0
      %v2300 = vsel %vm252, %v2293, 0
      %v2302 = vsel %vm252, %v2295, 0
      %2304 = vmatprep.subr.mxu0 0.0
      %2305 = vmatpush1.xpose.msra.mxu0 %v2300
      %2306 = vmatprep.subr.mxu0 0.0
      %2307 = vmatpush1.xpose.msra.mxu0 %v2302
      %2308 = vmatprep.subr.mxu0 0.0
      %2309 = vmatpush1.xpose.msra.mxu0 0.0
      %2310 = vmatprep.subr.mxu0 0.0
      %2311 = vmatpush1.xpose.msra.mxu0 0.0
      %2312 = vmatprep.subr.mxu0 0.0
      %2313 = vmatpush1.xpose.msra.mxu0 0.0
      %2314 = vmatprep.subr.mxu0 0.0
      %2315 = vmatpush1.xpose.msra.mxu0 0.0
      %2316 = vmatprep.subr.mxu0 0.0
      %2317 = vmatpush1.xpose.msra.mxu0 0.0
      %2318 = vmatprep.subr.mxu0 0.0
      %2319 = vmatpush1.xpose.msra.mxu0 0.0
      %2320 = vmatprep.subr.mxu0 0.0
      %2321 = vmatpush1.xpose.msra.mxu0 0.0
      %2322 = vmatprep.subr.mxu0 0.0
      %2323 = vmatpush1.xpose.msra.mxu0 0.0
      %2324 = vmatprep.subr.mxu0 0.0
      %2325 = vmatpush1.xpose.msra.mxu0 0.0
      %2326 = vmatprep.subr.mxu0 0.0
      %2327 = vmatpush1.xpose.msra.mxu0 0.0
      %2328 = vmatprep.subr.mxu0 0.0
      %2329 = vmatpush1.xpose.msra.mxu0 0.0
      %2330 = vmatprep.subr.mxu0 0.0
      %2331 = vmatpush1.xpose.msra.mxu0 0.0
      %2332 = vmatprep.subr.mxu0 0.0
      %2333 = vmatpush1.xpose.msra.mxu0 0.0
      %2334 = vmatprep.subr.mxu0 0.0
      %2335 = vmatpush1.xpose.msra.mxu0 0.0
      %2336 = vmatprep.subr.mxu0 0.0
      %2337 = vmatpush1.xpose.msra.mxu0 0.0
      %2338 = vmatprep.subr.mxu0 0.0
      %2339 = vmatpush1.xpose.msra.mxu0 0.0
      %2340 = vmatprep.subr.mxu0 0.0
      %2341 = vmatpush1.xpose.msra.mxu0 0.0
      %2342 = vmatprep.subr.mxu0 0.0
      %2343 = vmatpush1.xpose.msra.mxu0 0.0
      %2344 = vmatprep.subr.mxu0 0.0
      %2345 = vmatpush1.xpose.msra.mxu0 0.0
      %2346 = vmatprep.subr.mxu0 0.0
      %2347 = vmatpush1.xpose.msra.mxu0 0.0
      %2348 = vmatprep.subr.mxu0 0.0
      %2349 = vmatpush1.xpose.msra.mxu0 0.0
      %2350 = vmatprep.subr.mxu0 0.0
      %2351 = vmatpush1.xpose.msra.mxu0 0.0
      %2352 = vmatprep.subr.mxu0 0.0
      %2353 = vmatpush1.xpose.msra.mxu0 0.0
      %2354 = vmatprep.subr.mxu0 0.0
      %2355 = vmatpush1.xpose.msra.mxu0 0.0
      %2356 = vmatprep.subr.mxu0 0.0
      %2357 = vmatpush1.xpose.msra.mxu0 0.0
      %2358 = vmatprep.subr.mxu0 0.0
      %2359 = vmatpush1.xpose.msra.mxu0 0.0
      %2360 = vmatprep.subr.mxu0 0.0
      %2361 = vmatpush1.xpose.msra.mxu0 0.0
      %2362 = vmatprep.subr.mxu0 0.0
      %2363 = vmatpush1.xpose.msra.mxu0 0.0
      %2364 = vmatprep.subr.mxu0 0.0
      %2365 = vmatpush1.xpose.msra.mxu0 0.0
      %2366 = vmatprep.subr.mxu0 0.0
      %2367 = vmatpush1.xpose.msra.mxu0 0.0
      %2368 = vmatprep.mubr.f32.mxu0 0.0
      %2369 = vmatmul.mubr.f32.gmra.mrb[0].mxu0 %v2296
      %v2370 = vpop.f32.mrb[0].mxu0
      %v2371 = vadd.f32 0.0, %v2370
      %v2372 = vpop.f32.mrb[0].mxu0
      %2373 = vmatprep.mubr.f32.mxu0 0.0
      %2374 = vmatmul.mubr.f32.gmra.mrb[0].mxu0 %v2298
      %v2375 = vpop.f32.mrb[0].mxu0
      %v2376 = vadd.f32 0.0, %v2375
      %v2377 = vpop.f32.mrb[0].mxu0
      %2378 = vdwg.mxu0
      %2379 = vrot.lane.b32.xlu0 %v416, 96
      %v2380 = vpop.permute.xlu0 %2379
      %2381 = vrot.lane.b32.xlu0 %v422, 96
      %v2382 = vpop.permute.xlu0 %2381
      %2383 = vrot.lane.b32.xlu0 %v416, 32
      %v2384 = vpop.permute.xlu0 %2383
      %2385 = vrot.lane.b32.xlu0 %v422, 32
      %v2386 = vpop.permute.xlu0 %2385
      %v2387 = vsel %vm252, %v2380, 0
      %v2389 = vsel %vm252, %v2382, 0
      %v2391 = vsel %vm252, %v2384, 0
      %v2393 = vsel %vm252, %v2386, 0
      %2395 = vmatprep.subr.mxu0 0.0
      %2396 = vmatpush1.xpose.msra.mxu0 %v2391
      %2397 = vmatprep.subr.mxu0 0.0
      %2398 = vmatpush1.xpose.msra.mxu0 %v2393
      %2399 = vmatprep.subr.mxu0 0.0
      %2400 = vmatpush1.xpose.msra.mxu0 0.0
      %2401 = vmatprep.subr.mxu0 0.0
      %2402 = vmatpush1.xpose.msra.mxu0 0.0
      %2403 = vmatprep.subr.mxu0 0.0
      %2404 = vmatpush1.xpose.msra.mxu0 0.0
      %2405 = vmatprep.subr.mxu0 0.0
      %2406 = vmatpush1.xpose.msra.mxu0 0.0
      %2407 = vmatprep.subr.mxu0 0.0
      %2408 = vmatpush1.xpose.msra.mxu0 0.0
      %2409 = vmatprep.subr.mxu0 0.0
      %2410 = vmatpush1.xpose.msra.mxu0 0.0
      %2411 = vmatprep.subr.mxu0 0.0
      %2412 = vmatpush1.xpose.msra.mxu0 0.0
      %2413 = vmatprep.subr.mxu0 0.0
      %2414 = vmatpush1.xpose.msra.mxu0 0.0
      %2415 = vmatprep.subr.mxu0 0.0
      %2416 = vmatpush1.xpose.msra.mxu0 0.0
      %2417 = vmatprep.subr.mxu0 0.0
      %2418 = vmatpush1.xpose.msra.mxu0 0.0
      %2419 = vmatprep.subr.mxu0 0.0
      %2420 = vmatpush1.xpose.msra.mxu0 0.0
      %2421 = vmatprep.subr.mxu0 0.0
      %2422 = vmatpush1.xpose.msra.mxu0 0.0
      %2423 = vmatprep.subr.mxu0 0.0
      %2424 = vmatpush1.xpose.msra.mxu0 0.0
      %2425 = vmatprep.subr.mxu0 0.0
      %2426 = vmatpush1.xpose.msra.mxu0 0.0
      %2427 = vmatprep.subr.mxu0 0.0
      %2428 = vmatpush1.xpose.msra.mxu0 0.0
      %2429 = vmatprep.subr.mxu0 0.0
      %2430 = vmatpush1.xpose.msra.mxu0 0.0
      %2431 = vmatprep.subr.mxu0 0.0
      %2432 = vmatpush1.xpose.msra.mxu0 0.0
      %2433 = vmatprep.subr.mxu0 0.0
      %2434 = vmatpush1.xpose.msra.mxu0 0.0
      %2435 = vmatprep.subr.mxu0 0.0
      %2436 = vmatpush1.xpose.msra.mxu0 0.0
      %2437 = vmatprep.subr.mxu0 0.0
      %2438 = vmatpush1.xpose.msra.mxu0 0.0
      %2439 = vmatprep.subr.mxu0 0.0
      %2440 = vmatpush1.xpose.msra.mxu0 0.0
      %2441 = vmatprep.subr.mxu0 0.0
      %2442 = vmatpush1.xpose.msra.mxu0 0.0
      %2443 = vmatprep.subr.mxu0 0.0
      %2444 = vmatpush1.xpose.msra.mxu0 0.0
      %2445 = vmatprep.subr.mxu0 0.0
      %2446 = vmatpush1.xpose.msra.mxu0 0.0
      %2447 = vmatprep.subr.mxu0 0.0
      %2448 = vmatpush1.xpose.msra.mxu0 0.0
      %2449 = vmatprep.subr.mxu0 0.0
      %2450 = vmatpush1.xpose.msra.mxu0 0.0
      %2451 = vmatprep.subr.mxu0 0.0
      %2452 = vmatpush1.xpose.msra.mxu0 0.0
      %2453 = vmatprep.subr.mxu0 0.0
      %2454 = vmatpush1.xpose.msra.mxu0 0.0
      %2455 = vmatprep.subr.mxu0 0.0
      %2456 = vmatpush1.xpose.msra.mxu0 0.0
      %2457 = vmatprep.subr.mxu0 0.0
      %2458 = vmatpush1.xpose.msra.mxu0 0.0
      %2459 = vmatprep.mubr.f32.mxu0 0.0
      %2460 = vmatmul.mubr.f32.gmra.mrb[0].mxu0 %v2387
      %v2461 = vpop.f32.mrb[0].mxu0
      %v2462 = vadd.f32 0.0, %v2461
      %v2463 = vpop.f32.mrb[0].mxu0
      %2464 = vmatprep.mubr.f32.mxu0 0.0
      %2465 = vmatmul.mubr.f32.gmra.mrb[0].mxu0 %v2389
      %v2466 = vpop.f32.mrb[0].mxu0
      %v2467 = vadd.f32 0.0, %v2466
      %v2468 = vpop.f32.mrb[0].mxu0
      %2469 = vdwg.mxu0
      %2470 = vrot.lane.b32.xlu0 %v428, 96
      %v2471 = vpop.permute.xlu0 %2470
      %2472 = vrot.lane.b32.xlu0 %v434, 96
      %v2473 = vpop.permute.xlu0 %2472
      %2474 = vrot.lane.b32.xlu0 %v428, 32
      %v2475 = vpop.permute.xlu0 %2474
      %2476 = vrot.lane.b32.xlu0 %v434, 32
      %v2477 = vpop.permute.xlu0 %2476
      %v2478 = vsel %vm252, %v2471, 0
      %v2480 = vsel %vm252, %v2473, 0
      %v2482 = vsel %vm252, %v2475, 0
      %v2484 = vsel %vm252, %v2477, 0
      %2486 = vmatprep.subr.mxu0 0.0
      %2487 = vmatpush1.xpose.msra.mxu0 %v2482
      %2488 = vmatprep.subr.mxu0 0.0
      %2489 = vmatpush1.xpose.msra.mxu0 %v2484
      %2490 = vmatprep.subr.mxu0 0.0
      %2491 = vmatpush1.xpose.msra.mxu0 0.0
      %2492 = vmatprep.subr.mxu0 0.0
      %2493 = vmatpush1.xpose.msra.mxu0 0.0
      %2494 = vmatprep.subr.mxu0 0.0
      %2495 = vmatpush1.xpose.msra.mxu0 0.0
      %2496 = vmatprep.subr.mxu0 0.0
      %2497 = vmatpush1.xpose.msra.mxu0 0.0
      %2498 = vmatprep.subr.mxu0 0.0
      %2499 = vmatpush1.xpose.msra.mxu0 0.0
      %2500 = vmatprep.subr.mxu0 0.0
      %2501 = vmatpush1.xpose.msra.mxu0 0.0
      %2502 = vmatprep.subr.mxu0 0.0
      %2503 = vmatpush1.xpose.msra.mxu0 0.0
      %2504 = vmatprep.subr.mxu0 0.0
      %2505 = vmatpush1.xpose.msra.mxu0 0.0
      %2506 = vmatprep.subr.mxu0 0.0
      %2507 = vmatpush1.xpose.msra.mxu0 0.0
      %2508 = vmatprep.subr.mxu0 0.0
      %2509 = vmatpush1.xpose.msra.mxu0 0.0
      %2510 = vmatprep.subr.mxu0 0.0
      %2511 = vmatpush1.xpose.msra.mxu0 0.0
      %2512 = vmatprep.subr.mxu0 0.0
      %2513 = vmatpush1.xpose.msra.mxu0 0.0
      %2514 = vmatprep.subr.mxu0 0.0
      %2515 = vmatpush1.xpose.msra.mxu0 0.0
      %2516 = vmatprep.subr.mxu0 0.0
      %2517 = vmatpush1.xpose.msra.mxu0 0.0
      %2518 = vmatprep.subr.mxu0 0.0
      %2519 = vmatpush1.xpose.msra.mxu0 0.0
      %2520 = vmatprep.subr.mxu0 0.0
      %2521 = vmatpush1.xpose.msra.mxu0 0.0
      %2522 = vmatprep.subr.mxu0 0.0
      %2523 = vmatpush1.xpose.msra.mxu0 0.0
      %2524 = vmatprep.subr.mxu0 0.0
      %2525 = vmatpush1.xpose.msra.mxu0 0.0
      %2526 = vmatprep.subr.mxu0 0.0
      %2527 = vmatpush1.xpose.msra.mxu0 0.0
      %2528 = vmatprep.subr.mxu0 0.0
      %2529 = vmatpush1.xpose.msra.mxu0 0.0
      %2530 = vmatprep.subr.mxu0 0.0
      %2531 = vmatpush1.xpose.msra.mxu0 0.0
      %2532 = vmatprep.subr.mxu0 0.0
      %2533 = vmatpush1.xpose.msra.mxu0 0.0
      %2534 = vmatprep.subr.mxu0 0.0
      %2535 = vmatpush1.xpose.msra.mxu0 0.0
      %2536 = vmatprep.subr.mxu0 0.0
      %2537 = vmatpush1.xpose.msra.mxu0 0.0
      %2538 = vmatprep.subr.mxu0 0.0
      %2539 = vmatpush1.xpose.msra.mxu0 0.0
      %2540 = vmatprep.subr.mxu0 0.0
      %2541 = vmatpush1.xpose.msra.mxu0 0.0
      %2542 = vmatprep.subr.mxu0 0.0
      %2543 = vmatpush1.xpose.msra.mxu0 0.0
      %2544 = vmatprep.subr.mxu0 0.0
      %2545 = vmatpush1.xpose.msra.mxu0 0.0
      %2546 = vmatprep.subr.mxu0 0.0
      %2547 = vmatpush1.xpose.msra.mxu0 0.0
      %2548 = vmatprep.subr.mxu0 0.0
      %2549 = vmatpush1.xpose.msra.mxu0 0.0
      %2550 = vmatprep.mubr.f32.mxu0 0.0
      %2551 = vmatmul.mubr.f32.gmra.mrb[0].mxu0 %v2478
      %v2552 = vpop.f32.mrb[0].mxu0
      %v2553 = vadd.f32 0.0, %v2552
      %v2554 = vpop.f32.mrb[0].mxu0
      %2555 = vmatprep.mubr.f32.mxu0 0.0
      %2556 = vmatmul.mubr.f32.gmra.mrb[0].mxu0 %v2480
      %v2557 = vpop.f32.mrb[0].mxu0
      %v2558 = vadd.f32 0.0, %v2557
      %v2559 = vpop.f32.mrb[0].mxu0
      %2560 = vdwg.mxu0
      %2561 = vrot.lane.b32.xlu0 %v440, 96
      %v2562 = vpop.permute.xlu0 %2561
      %2563 = vrot.lane.b32.xlu0 %v446, 96
      %v2564 = vpop.permute.xlu0 %2563
      %2565 = vrot.lane.b32.xlu0 %v440, 32
      %v2566 = vpop.permute.xlu0 %2565
      %2567 = vrot.lane.b32.xlu0 %v446, 32
      %v2568 = vpop.permute.xlu0 %2567
      %v2569 = vsel %vm252, %v2562, 0
      %v2571 = vsel %vm252, %v2564, 0
      %v2573 = vsel %vm252, %v2566, 0
      %v2575 = vsel %vm252, %v2568, 0
      %2577 = vmatprep.subr.mxu0 0.0
      %2578 = vmatpush1.xpose.msra.mxu0 %v2573
      %2579 = vmatprep.subr.mxu0 0.0
      %2580 = vmatpush1.xpose.msra.mxu0 %v2575
      %2581 = vmatprep.subr.mxu0 0.0
      %2582 = vmatpush1.xpose.msra.mxu0 0.0
      %2583 = vmatprep.subr.mxu0 0.0
      %2584 = vmatpush1.xpose.msra.mxu0 0.0
      %2585 = vmatprep.subr.mxu0 0.0
      %2586 = vmatpush1.xpose.msra.mxu0 0.0
      %2587 = vmatprep.subr.mxu0 0.0
      %2588 = vmatpush1.xpose.msra.mxu0 0.0
      %2589 = vmatprep.subr.mxu0 0.0
      %2590 = vmatpush1.xpose.msra.mxu0 0.0
      %2591 = vmatprep.subr.mxu0 0.0
      %2592 = vmatpush1.xpose.msra.mxu0 0.0
      %2593 = vmatprep.subr.mxu0 0.0
      %2594 = vmatpush1.xpose.msra.mxu0 0.0
      %2595 = vmatprep.subr.mxu0 0.0
      %2596 = vmatpush1.xpose.msra.mxu0 0.0
      %2597 = vmatprep.subr.mxu0 0.0
      %2598 = vmatpush1.xpose.msra.mxu0 0.0
      %2599 = vmatprep.subr.mxu0 0.0
      %2600 = vmatpush1.xpose.msra.mxu0 0.0
      %2601 = vmatprep.subr.mxu0 0.0
      %2602 = vmatpush1.xpose.msra.mxu0 0.0
      %2603 = vmatprep.subr.mxu0 0.0
      %2604 = vmatpush1.xpose.msra.mxu0 0.0
      %2605 = vmatprep.subr.mxu0 0.0
      %2606 = vmatpush1.xpose.msra.mxu0 0.0
      %2607 = vmatprep.subr.mxu0 0.0
      %2608 = vmatpush1.xpose.msra.mxu0 0.0
      %2609 = vmatprep.subr.mxu0 0.0
      %2610 = vmatpush1.xpose.msra.mxu0 0.0
      %2611 = vmatprep.subr.mxu0 0.0
      %2612 = vmatpush1.xpose.msra.mxu0 0.0
      %2613 = vmatprep.subr.mxu0 0.0
      %2614 = vmatpush1.xpose.msra.mxu0 0.0
      %2615 = vmatprep.subr.mxu0 0.0
      %2616 = vmatpush1.xpose.msra.mxu0 0.0
      %2617 = vmatprep.subr.mxu0 0.0
      %2618 = vmatpush1.xpose.msra.mxu0 0.0
      %2619 = vmatprep.subr.mxu0 0.0
      %2620 = vmatpush1.xpose.msra.mxu0 0.0
      %2621 = vmatprep.subr.mxu0 0.0
      %2622 = vmatpush1.xpose.msra.mxu0 0.0
      %2623 = vmatprep.subr.mxu0 0.0
      %2624 = vmatpush1.xpose.msra.mxu0 0.0
      %2625 = vmatprep.subr.mxu0 0.0
      %2626 = vmatpush1.xpose.msra.mxu0 0.0
      %2627 = vmatprep.subr.mxu0 0.0
      %2628 = vmatpush1.xpose.msra.mxu0 0.0
      %2629 = vmatprep.subr.mxu0 0.0
      %2630 = vmatpush1.xpose.msra.mxu0 0.0
      %2631 = vmatprep.subr.mxu0 0.0
      %2632 = vmatpush1.xpose.msra.mxu0 0.0
      %2633 = vmatprep.subr.mxu0 0.0
      %2634 = vmatpush1.xpose.msra.mxu0 0.0
      %2635 = vmatprep.subr.mxu0 0.0
      %2636 = vmatpush1.xpose.msra.mxu0 0.0
      %2637 = vmatprep.subr.mxu0 0.0
      %2638 = vmatpush1.xpose.msra.mxu0 0.0
      %2639 = vmatprep.subr.mxu0 0.0
      %2640 = vmatpush1.xpose.msra.mxu0 0.0
      %2641 = vmatprep.mubr.f32.mxu0 0.0
      %2642 = vmatmul.mubr.f32.gmra.mrb[0].mxu0 %v2569
      %v2643 = vpop.f32.mrb[0].mxu0
      %v2644 = vadd.f32 0.0, %v2643
      %v2645 = vpop.f32.mrb[0].mxu0
      %2646 = vmatprep.mubr.f32.mxu0 0.0
      %2647 = vmatmul.mubr.f32.gmra.mrb[0].mxu0 %v2571
      %v2648 = vpop.f32.mrb[0].mxu0
      %v2649 = vadd.f32 0.0, %v2648
      %v2650 = vpop.f32.mrb[0].mxu0
      %2651 = vdwg.mxu0
      %2652 = vrot.lane.b32.xlu0 %v452, 96
      %v2653 = vpop.permute.xlu0 %2652
      %2654 = vrot.lane.b32.xlu0 %v458, 96
      %v2655 = vpop.permute.xlu0 %2654
      %2656 = vrot.lane.b32.xlu0 %v452, 32
      %v2657 = vpop.permute.xlu0 %2656
      %2658 = vrot.lane.b32.xlu0 %v458, 32
      %v2659 = vpop.permute.xlu0 %2658
      %v2660 = vsel %vm252, %v2653, 0
      %v2662 = vsel %vm252, %v2655, 0
      %v2664 = vsel %vm252, %v2657, 0
      %v2666 = vsel %vm252, %v2659, 0
      %2668 = vmatprep.subr.mxu0 0.0
      %2669 = vmatpush1.xpose.msra.mxu0 %v2664
      %2670 = vmatprep.subr.mxu0 0.0
      %2671 = vmatpush1.xpose.msra.mxu0 %v2666
      %2672 = vmatprep.subr.mxu0 0.0
      %2673 = vmatpush1.xpose.msra.mxu0 0.0
      %2674 = vmatprep.subr.mxu0 0.0
      %2675 = vmatpush1.xpose.msra.mxu0 0.0
      %2676 = vmatprep.subr.mxu0 0.0
      %2677 = vmatpush1.xpose.msra.mxu0 0.0
      %2678 = vmatprep.subr.mxu0 0.0
      %2679 = vmatpush1.xpose.msra.mxu0 0.0
      %2680 = vmatprep.subr.mxu0 0.0
      %2681 = vmatpush1.xpose.msra.mxu0 0.0
      %2682 = vmatprep.subr.mxu0 0.0
      %2683 = vmatpush1.xpose.msra.mxu0 0.0
      %2684 = vmatprep.subr.mxu0 0.0
      %2685 = vmatpush1.xpose.msra.mxu0 0.0
      %2686 = vmatprep.subr.mxu0 0.0
      %2687 = vmatpush1.xpose.msra.mxu0 0.0
      %2688 = vmatprep.subr.mxu0 0.0
      %2689 = vmatpush1.xpose.msra.mxu0 0.0
      %2690 = vmatprep.subr.mxu0 0.0
      %2691 = vmatpush1.xpose.msra.mxu0 0.0
      %2692 = vmatprep.subr.mxu0 0.0
      %2693 = vmatpush1.xpose.msra.mxu0 0.0
      %2694 = vmatprep.subr.mxu0 0.0
      %2695 = vmatpush1.xpose.msra.mxu0 0.0
      %2696 = vmatprep.subr.mxu0 0.0
      %2697 = vmatpush1.xpose.msra.mxu0 0.0
      %2698 = vmatprep.subr.mxu0 0.0
      %2699 = vmatpush1.xpose.msra.mxu0 0.0
      %2700 = vmatprep.subr.mxu0 0.0
      %2701 = vmatpush1.xpose.msra.mxu0 0.0
      %2702 = vmatprep.subr.mxu0 0.0
      %2703 = vmatpush1.xpose.msra.mxu0 0.0
      %2704 = vmatprep.subr.mxu0 0.0
      %2705 = vmatpush1.xpose.msra.mxu0 0.0
      %2706 = vmatprep.subr.mxu0 0.0
      %2707 = vmatpush1.xpose.msra.mxu0 0.0
      %2708 = vmatprep.subr.mxu0 0.0
      %2709 = vmatpush1.xpose.msra.mxu0 0.0
      %2710 = vmatprep.subr.mxu0 0.0
      %2711 = vmatpush1.xpose.msra.mxu0 0.0
      %2712 = vmatprep.subr.mxu0 0.0
      %2713 = vmatpush1.xpose.msra.mxu0 0.0
      %2714 = vmatprep.subr.mxu0 0.0
      %2715 = vmatpush1.xpose.msra.mxu0 0.0
      %2716 = vmatprep.subr.mxu0 0.0
      %2717 = vmatpush1.xpose.msra.mxu0 0.0
      %2718 = vmatprep.subr.mxu0 0.0
      %2719 = vmatpush1.xpose.msra.mxu0 0.0
      %2720 = vmatprep.subr.mxu0 0.0
      %2721 = vmatpush1.xpose.msra.mxu0 0.0
      %2722 = vmatprep.subr.mxu0 0.0
      %2723 = vmatpush1.xpose.msra.mxu0 0.0
      %2724 = vmatprep.subr.mxu0 0.0
      %2725 = vmatpush1.xpose.msra.mxu0 0.0
      %2726 = vmatprep.subr.mxu0 0.0
      %2727 = vmatpush1.xpose.msra.mxu0 0.0
      %2728 = vmatprep.subr.mxu0 0.0
      %2729 = vmatpush1.xpose.msra.mxu0 0.0
      %2730 = vmatprep.subr.mxu0 0.0
      %2731 = vmatpush1.xpose.msra.mxu0 0.0
      %2732 = vmatprep.mubr.f32.mxu0 0.0
      %2733 = vmatmul.mubr.f32.gmra.mrb[0].mxu0 %v2660
      %v2734 = vpop.f32.mrb[0].mxu0
      %v2735 = vadd.f32 0.0, %v2734
      %v2736 = vpop.f32.mrb[0].mxu0
      %2737 = vmatprep.mubr.f32.mxu0 0.0
      %2738 = vmatmul.mubr.f32.gmra.mrb[0].mxu0 %v2662
      %v2739 = vpop.f32.mrb[0].mxu0
      %v2740 = vadd.f32 0.0, %v2739
      %v2741 = vpop.f32.mrb[0].mxu0
      %2742 = vdwg.mxu0
      %v2743 = vmul.f32 %v2098, 0.17677669
      %v2744 = vmul.f32 %v2103, 0.17677669
      %v2745 = vmul.f32 %v2189, 0.17677669
      %v2746 = vmul.f32 %v2194, 0.17677669
      %v2747 = vmul.f32 %v2280, 0.17677669
      %v2748 = vmul.f32 %v2285, 0.17677669
      %v2749 = vmul.f32 %v2371, 0.17677669
      %v2750 = vmul.f32 %v2376, 0.17677669
      %v2751 = vmul.f32 %v2462, 0.17677669
      %v2752 = vmul.f32 %v2467, 0.17677669
      %v2753 = vmul.f32 %v2553, 0.17677669
      %v2754 = vmul.f32 %v2558, 0.17677669
      %v2755 = vmul.f32 %v2644, 0.17677669
      %v2756 = vmul.f32 %v2649, 0.17677669
      %v2757 = vmul.f32 %v2735, 0.17677669
      %v2758 = vmul.f32 %v2740, 0.17677669
      %v2759 = vsel %vm1190, %v2743, -inf
      %2760 = vmax.xlane.f32.xlu0 %v2759
      %v2761 = vpop.xlane.xlu0 %2760
      %v2762 = vsel %vm1190, %v2744, -inf
      %2763 = vmax.xlane.f32.xlu0 %v2762
      %v2764 = vpop.xlane.xlu0 %2763
      %v2765 = vsel %vm1190, %v2745, -inf
      %2766 = vmax.xlane.f32.xlu0 %v2765
      %v2767 = vpop.xlane.xlu0 %2766
      %v2768 = vsel %vm1190, %v2746, -inf
      %2769 = vmax.xlane.f32.xlu0 %v2768
      %v2770 = vpop.xlane.xlu0 %2769
      %v2771 = vsel %vm1190, %v2747, -inf
      %2772 = vmax.xlane.f32.xlu0 %v2771
      %v2773 = vpop.xlane.xlu0 %2772
      %v2774 = vsel %vm1190, %v2748, -inf
      %2775 = vmax.xlane.f32.xlu0 %v2774
      %v2776 = vpop.xlane.xlu0 %2775
      %v2777 = vsel %vm1190, %v2749, -inf
      %2778 = vmax.xlane.f32.xlu0 %v2777
      %v2779 = vpop.xlane.xlu0 %2778
      %v2780 = vsel %vm1190, %v2750, -inf
      %2781 = vmax.xlane.f32.xlu0 %v2780
      %v2782 = vpop.xlane.xlu0 %2781
      %v2783 = vsel %vm1190, %v2751, -inf
      %2784 = vmax.xlane.f32.xlu0 %v2783
      %v2785 = vpop.xlane.xlu0 %2784
      %v2786 = vsel %vm1190, %v2752, -inf
      %2787 = vmax.xlane.f32.xlu0 %v2786
      %v2788 = vpop.xlane.xlu0 %2787
      %v2789 = vsel %vm1190, %v2753, -inf
      %2790 = vmax.xlane.f32.xlu0 %v2789
      %v2791 = vpop.xlane.xlu0 %2790
      %v2792 = vsel %vm1190, %v2754, -inf
      %2793 = vmax.xlane.f32.xlu0 %v2792
      %v2794 = vpop.xlane.xlu0 %2793
      %v2795 = vsel %vm1190, %v2755, -inf
      %2796 = vmax.xlane.f32.xlu0 %v2795
      %v2797 = vpop.xlane.xlu0 %2796
      %v2798 = vsel %vm1190, %v2756, -inf
      %2799 = vmax.xlane.f32.xlu0 %v2798
      %v2800 = vpop.xlane.xlu0 %2799
      %v2801 = vsel %vm1190, %v2757, -inf
      %2802 = vmax.xlane.f32.xlu0 %v2801
      %v2803 = vpop.xlane.xlu0 %2802
      %v2804 = vsel %vm1190, %v2758, -inf
      %2805 = vmax.xlane.f32.xlu0 %v2804
      %v2806 = vpop.xlane.xlu0 %2805
      %v2807 = vsub.f32 %v2743, %v2761
      %v2808 = vsub.f32 %v2744, %v2764
      %v2809 = vsub.f32 %v2745, %v2767
      %v2810 = vsub.f32 %v2746, %v2770
      %v2811 = vsub.f32 %v2747, %v2773
      %v2812 = vsub.f32 %v2748, %v2776
      %v2813 = vsub.f32 %v2749, %v2779
      %v2814 = vsub.f32 %v2750, %v2782
      %v2815 = vsub.f32 %v2751, %v2785
      %v2816 = vsub.f32 %v2752, %v2788
      %v2817 = vsub.f32 %v2753, %v2791
      %v2818 = vsub.f32 %v2754, %v2794
      %v2819 = vsub.f32 %v2755, %v2797
      %v2820 = vsub.f32 %v2756, %v2800
      %v2821 = vsub.f32 %v2757, %v2803
      %v2822 = vsub.f32 %v2758, %v2806
      %v2823 = vmul.f32 %v2807, 1.442695
      %v2824 = vpow.pop %v2823
      %v2825 = vmul.f32 %v2808, 1.442695
      %v2826 = vpow.pop %v2825
      %v2827 = vmul.f32 %v2809, 1.442695
      %v2828 = vpow.pop %v2827
      %v2829 = vmul.f32 %v2810, 1.442695
      %v2830 = vpow.pop %v2829
      %v2831 = vmul.f32 %v2811, 1.442695
      %v2832 = vpow.pop %v2831
      %v2833 = vmul.f32 %v2812, 1.442695
      %v2834 = vpow.pop %v2833
      %v2835 = vmul.f32 %v2813, 1.442695
      %v2836 = vpow.pop %v2835
      %v2837 = vmul.f32 %v2814, 1.442695
      %v2838 = vpow.pop %v2837
      %v2839 = vmul.f32 %v2815, 1.442695
      %v2840 = vpow.pop %v2839
      %v2841 = vmul.f32 %v2816, 1.442695
      %v2842 = vpow.pop %v2841
      %v2843 = vmul.f32 %v2817, 1.442695
      %v2844 = vpow.pop %v2843
      %v2845 = vmul.f32 %v2818, 1.442695
      %v2846 = vpow.pop %v2845
      %v2847 = vmul.f32 %v2819, 1.442695
      %v2848 = vpow.pop %v2847
      %v2849 = vmul.f32 %v2820, 1.442695
      %v2850 = vpow.pop %v2849
      %v2851 = vmul.f32 %v2821, 1.442695
      %v2852 = vpow.pop %v2851
      %v2853 = vmul.f32 %v2822, 1.442695
      %v2854 = vpow.pop %v2853
      %v2855 = vsel %vm1190, %v2824, 0.0
      %2856 = vadd.xlane.f32.xlu0 %v2855
      %v2857 = vpop.xlane.xlu0 %2856
      %v2858 = vsel %vm1190, %v2826, 0.0
      %2859 = vadd.xlane.f32.xlu0 %v2858
      %v2860 = vpop.xlane.xlu0 %2859
      %v2861 = vsel %vm1190, %v2828, 0.0
      %2862 = vadd.xlane.f32.xlu0 %v2861
      %v2863 = vpop.xlane.xlu0 %2862
      %v2864 = vsel %vm1190, %v2830, 0.0
      %2865 = vadd.xlane.f32.xlu0 %v2864
      %v2866 = vpop.xlane.xlu0 %2865
      %v2867 = vsel %vm1190, %v2832, 0.0
      %2868 = vadd.xlane.f32.xlu0 %v2867
      %v2869 = vpop.xlane.xlu0 %2868
      %v2870 = vsel %vm1190, %v2834, 0.0
      %2871 = vadd.xlane.f32.xlu0 %v2870
      %v2872 = vpop.xlane.xlu0 %2871
      %v2873 = vsel %vm1190, %v2836, 0.0
      %2874 = vadd.xlane.f32.xlu0 %v2873
      %v2875 = vpop.xlane.xlu0 %2874
      %v2876 = vsel %vm1190, %v2838, 0.0
      %2877 = vadd.xlane.f32.xlu0 %v2876
      %v2878 = vpop.xlane.xlu0 %2877
      %v2879 = vsel %vm1190, %v2840, 0.0
      %2880 = vadd.xlane.f32.xlu0 %v2879
      %v2881 = vpop.xlane.xlu0 %2880
      %v2882 = vsel %vm1190, %v2842, 0.0
      %2883 = vadd.xlane.f32.xlu0 %v2882
      %v2884 = vpop.xlane.xlu0 %2883
      %v2885 = vsel %vm1190, %v2844, 0.0
      %2886 = vadd.xlane.f32.xlu0 %v2885
      %v2887 = vpop.xlane.xlu0 %2886
      %v2888 = vsel %vm1190, %v2846, 0.0
      %2889 = vadd.xlane.f32.xlu0 %v2888
      %v2890 = vpop.xlane.xlu0 %2889
      %v2891 = vsel %vm1190, %v2848, 0.0
      %2892 = vadd.xlane.f32.xlu0 %v2891
      %v2893 = vpop.xlane.xlu0 %2892
      %v2894 = vsel %vm1190, %v2850, 0.0
      %2895 = vadd.xlane.f32.xlu0 %v2894
      %v2896 = vpop.xlane.xlu0 %2895
      %v2897 = vsel %vm1190, %v2852, 0.0
      %2898 = vadd.xlane.f32.xlu0 %v2897
      %v2899 = vpop.xlane.xlu0 %2898
      %v2900 = vsel %vm1190, %v2854, 0.0
      %2901 = vadd.xlane.f32.xlu0 %v2900
      %v2902 = vpop.xlane.xlu0 %2901
      %v2903 = vrcp.pop %v2857
      %v2904 = vrcp.pop %v2860
      %v2905 = vrcp.pop %v2863
      %v2906 = vrcp.pop %v2866
      %v2907 = vrcp.pop %v2869
      %v2908 = vrcp.pop %v2872
      %v2909 = vrcp.pop %v2875
      %v2910 = vrcp.pop %v2878
      %v2911 = vrcp.pop %v2881
      %v2912 = vrcp.pop %v2884
      %v2913 = vrcp.pop %v2887
      %v2914 = vrcp.pop %v2890
      %v2915 = vrcp.pop %v2893
      %v2916 = vrcp.pop %v2896
      %v2917 = vrcp.pop %v2899
      %v2918 = vrcp.pop %v2902
      %v2919 = vmul.f32 %v2824, %v2903
      %v2920 = vmul.f32 %v2826, %v2904
      %v2921 = vmul.f32 %v2828, %v2905
      %v2922 = vmul.f32 %v2830, %v2906
      %v2923 = vmul.f32 %v2832, %v2907
      %v2924 = vmul.f32 %v2834, %v2908
      %v2925 = vmul.f32 %v2836, %v2909
      %v2926 = vmul.f32 %v2838, %v2910
      %v2927 = vmul.f32 %v2840, %v2911
      %v2928 = vmul.f32 %v2842, %v2912
      %v2929 = vmul.f32 %v2844, %v2913
      %v2930 = vmul.f32 %v2846, %v2914
      %v2931 = vmul.f32 %v2848, %v2915
      %v2932 = vmul.f32 %v2850, %v2916
      %v2933 = vmul.f32 %v2852, %v2917
      %v2934 = vmul.f32 %v2854, %v2918
      %2937 = vrot.lane.b32.xlu0 %v370, 96
      %v2938 = vpop.permute.xlu0 %2937
      %2939 = vrot.lane.b32.xlu0 %v376, 96
      %v2940 = vpop.permute.xlu0 %2939
      %v2944 = vsel %vm1190, %v2919, 0
      %v2947 = vsel %vm1190, %v2920, 0
      %2949 = vmatprep.subr.mxu0 0.0
      %2950 = vmatpush1.msra.mxu0 %v2938
      %2951 = vmatprep.subr.mxu0 0.0
      %2952 = vmatpush1.msra.mxu0 %v2940
      %2953 = vmatprep.subr.mxu0 0.0
      %2954 = vmatpush1.msra.mxu0 0.0
      %2955 = vmatprep.subr.mxu0 0.0
      %2956 = vmatpush1.msra.mxu0 0.0
      %2957 = vmatprep.subr.mxu0 0.0
      %2958 = vmatpush1.msra.mxu0 0.0
      %2959 = vmatprep.subr.mxu0 0.0
      %2960 = vmatpush1.msra.mxu0 0.0
      %2961 = vmatprep.subr.mxu0 0.0
      %2962 = vmatpush1.msra.mxu0 0.0
      %2963 = vmatprep.subr.mxu0 0.0
      %2964 = vmatpush1.msra.mxu0 0.0
      %2965 = vmatprep.subr.mxu0 0.0
      %2966 = vmatpush1.msra.mxu0 0.0
      %2967 = vmatprep.subr.mxu0 0.0
      %2968 = vmatpush1.msra.mxu0 0.0
      %2969 = vmatprep.subr.mxu0 0.0
      %2970 = vmatpush1.msra.mxu0 0.0
      %2971 = vmatprep.subr.mxu0 0.0
      %2972 = vmatpush1.msra.mxu0 0.0
      %2973 = vmatprep.subr.mxu0 0.0
      %2974 = vmatpush1.msra.mxu0 0.0
      %2975 = vmatprep.subr.mxu0 0.0
      %2976 = vmatpush1.msra.mxu0 0.0
      %2977 = vmatprep.subr.mxu0 0.0
      %2978 = vmatpush1.msra.mxu0 0.0
      %2979 = vmatprep.subr.mxu0 0.0
      %2980 = vmatpush1.msra.mxu0 0.0
      %2981 = vmatprep.subr.mxu0 0.0
      %2982 = vmatpush1.msra.mxu0 0.0
      %2983 = vmatprep.subr.mxu0 0.0
      %2984 = vmatpush1.msra.mxu0 0.0
      %2985 = vmatprep.subr.mxu0 0.0
      %2986 = vmatpush1.msra.mxu0 0.0
      %2987 = vmatprep.subr.mxu0 0.0
      %2988 = vmatpush1.msra.mxu0 0.0
      %2989 = vmatprep.subr.mxu0 0.0
      %2990 = vmatpush1.msra.mxu0 0.0
      %2991 = vmatprep.subr.mxu0 0.0
      %2992 = vmatpush1.msra.mxu0 0.0
      %2993 = vmatprep.subr.mxu0 0.0
      %2994 = vmatpush1.msra.mxu0 0.0
      %2995 = vmatprep.subr.mxu0 0.0
      %2996 = vmatpush1.msra.mxu0 0.0
      %2997 = vmatprep.subr.mxu0 0.0
      %2998 = vmatpush1.msra.mxu0 0.0
      %2999 = vmatprep.subr.mxu0 0.0
      %3000 = vmatpush1.msra.mxu0 0.0
      %3001 = vmatprep.subr.mxu0 0.0
      %3002 = vmatpush1.msra.mxu0 0.0
      %3003 = vmatprep.subr.mxu0 0.0
      %3004 = vmatpush1.msra.mxu0 0.0
      %3005 = vmatprep.subr.mxu0 0.0
      %3006 = vmatpush1.msra.mxu0 0.0
      %3007 = vmatprep.subr.mxu0 0.0
      %3008 = vmatpush1.msra.mxu0 0.0
      %3009 = vmatprep.subr.mxu0 0.0
      %3010 = vmatpush1.msra.mxu0 0.0
      %3011 = vmatprep.subr.mxu0 0.0
      %3012 = vmatpush1.msra.mxu0 0.0
      %3013 = vmatprep.mubr.f32.mxu0 0.0
      %3014 = vmatmul.mubr.f32.gmra.mrb[0].mxu0 %v2944
      %v3015 = vpop.f32.mrb[0].mxu0
      %v3016 = vadd.f32 0.0, %v3015
      %v3017 = vpop.f32.mrb[0].mxu0
      %3018 = vmatprep.mubr.f32.mxu0 0.0
      %3019 = vmatmul.mubr.f32.gmra.mrb[0].mxu0 %v2947
      %v3020 = vpop.f32.mrb[0].mxu0
      %v3021 = vadd.f32 0.0, %v3020
      %v3022 = vpop.f32.mrb[0].mxu0
      %3023 = vdwg.mxu0
      %3026 = vrot.lane.b32.xlu0 %v382, 96
      %v3027 = vpop.permute.xlu0 %3026
      %3028 = vrot.lane.b32.xlu0 %v388, 96
      %v3029 = vpop.permute.xlu0 %3028
      %v3033 = vsel %vm1190, %v2921, 0
      %v3036 = vsel %vm1190, %v2922, 0
      %3038 = vmatprep.subr.mxu0 0.0
      %3039 = vmatpush1.msra.mxu0 %v3027
      %3040 = vmatprep.subr.mxu0 0.0
      %3041 = vmatpush1.msra.mxu0 %v3029
      %3042 = vmatprep.subr.mxu0 0.0
      %3043 = vmatpush1.msra.mxu0 0.0
      %3044 = vmatprep.subr.mxu0 0.0
      %3045 = vmatpush1.msra.mxu0 0.0
      %3046 = vmatprep.subr.mxu0 0.0
      %3047 = vmatpush1.msra.mxu0 0.0
      %3048 = vmatprep.subr.mxu0 0.0
      %3049 = vmatpush1.msra.mxu0 0.0
      %3050 = vmatprep.subr.mxu0 0.0
      %3051 = vmatpush1.msra.mxu0 0.0
      %3052 = vmatprep.subr.mxu0 0.0
      %3053 = vmatpush1.msra.mxu0 0.0
      %3054 = vmatprep.subr.mxu0 0.0
      %3055 = vmatpush1.msra.mxu0 0.0
      %3056 = vmatprep.subr.mxu0 0.0
      %3057 = vmatpush1.msra.mxu0 0.0
      %3058 = vmatprep.subr.mxu0 0.0
      %3059 = vmatpush1.msra.mxu0 0.0
      %3060 = vmatprep.subr.mxu0 0.0
      %3061 = vmatpush1.msra.mxu0 0.0
      %3062 = vmatprep.subr.mxu0 0.0
      %3063 = vmatpush1.msra.mxu0 0.0
      %3064 = vmatprep.subr.mxu0 0.0
      %3065 = vmatpush1.msra.mxu0 0.0
      %3066 = vmatprep.subr.mxu0 0.0
      %3067 = vmatpush1.msra.mxu0 0.0
      %3068 = vmatprep.subr.mxu0 0.0
      %3069 = vmatpush1.msra.mxu0 0.0
      %3070 = vmatprep.subr.mxu0 0.0
      %3071 = vmatpush1.msra.mxu0 0.0
      %3072 = vmatprep.subr.mxu0 0.0
      %3073 = vmatpush1.msra.mxu0 0.0
      %3074 = vmatprep.subr.mxu0 0.0
      %3075 = vmatpush1.msra.mxu0 0.0
      %3076 = vmatprep.subr.mxu0 0.0
      %3077 = vmatpush1.msra.mxu0 0.0
      %3078 = vmatprep.subr.mxu0 0.0
      %3079 = vmatpush1.msra.mxu0 0.0
      %3080 = vmatprep.subr.mxu0 0.0
      %3081 = vmatpush1.msra.mxu0 0.0
      %3082 = vmatprep.subr.mxu0 0.0
      %3083 = vmatpush1.msra.mxu0 0.0
      %3084 = vmatprep.subr.mxu0 0.0
      %3085 = vmatpush1.msra.mxu0 0.0
      %3086 = vmatprep.subr.mxu0 0.0
      %3087 = vmatpush1.msra.mxu0 0.0
      %3088 = vmatprep.subr.mxu0 0.0
      %3089 = vmatpush1.msra.mxu0 0.0
      %3090 = vmatprep.subr.mxu0 0.0
      %3091 = vmatpush1.msra.mxu0 0.0
      %3092 = vmatprep.subr.mxu0 0.0
      %3093 = vmatpush1.msra.mxu0 0.0
      %3094 = vmatprep.subr.mxu0 0.0
      %3095 = vmatpush1.msra.mxu0 0.0
      %3096 = vmatprep.subr.mxu0 0.0
      %3097 = vmatpush1.msra.mxu0 0.0
      %3098 = vmatprep.subr.mxu0 0.0
      %3099 = vmatpush1.msra.mxu0 0.0
      %3100 = vmatprep.subr.mxu0 0.0
      %3101 = vmatpush1.msra.mxu0 0.0
      %3102 = vmatprep.mubr.f32.mxu0 0.0
      %3103 = vmatmul.mubr.f32.gmra.mrb[0].mxu0 %v3033
      %v3104 = vpop.f32.mrb[0].mxu0
      %v3105 = vadd.f32 0.0, %v3104
      %v3106 = vpop.f32.mrb[0].mxu0
      %3107 = vmatprep.mubr.f32.mxu0 0.0
      %3108 = vmatmul.mubr.f32.gmra.mrb[0].mxu0 %v3036
      %v3109 = vpop.f32.mrb[0].mxu0
      %v3110 = vadd.f32 0.0, %v3109
      %v3111 = vpop.f32.mrb[0].mxu0
      %3112 = vdwg.mxu0
      %3115 = vrot.lane.b32.xlu0 %v394, 96
      %v3116 = vpop.permute.xlu0 %3115
      %3117 = vrot.lane.b32.xlu0 %v400, 96
      %v3118 = vpop.permute.xlu0 %3117
      %v3122 = vsel %vm1190, %v2923, 0
      %v3125 = vsel %vm1190, %v2924, 0
      %3127 = vmatprep.subr.mxu0 0.0
      %3128 = vmatpush1.msra.mxu0 %v3116
      %3129 = vmatprep.subr.mxu0 0.0
      %3130 = vmatpush1.msra.mxu0 %v3118
      %3131 = vmatprep.subr.mxu0 0.0
      %3132 = vmatpush1.msra.mxu0 0.0
      %3133 = vmatprep.subr.mxu0 0.0
      %3134 = vmatpush1.msra.mxu0 0.0
      %3135 = vmatprep.subr.mxu0 0.0
      %3136 = vmatpush1.msra.mxu0 0.0
      %3137 = vmatprep.subr.mxu0 0.0
      %3138 = vmatpush1.msra.mxu0 0.0
      %3139 = vmatprep.subr.mxu0 0.0
      %3140 = vmatpush1.msra.mxu0 0.0
      %3141 = vmatprep.subr.mxu0 0.0
      %3142 = vmatpush1.msra.mxu0 0.0
      %3143 = vmatprep.subr.mxu0 0.0
      %3144 = vmatpush1.msra.mxu0 0.0
      %3145 = vmatprep.subr.mxu0 0.0
      %3146 = vmatpush1.msra.mxu0 0.0
      %3147 = vmatprep.subr.mxu0 0.0
      %3148 = vmatpush1.msra.mxu0 0.0
      %3149 = vmatprep.subr.mxu0 0.0
      %3150 = vmatpush1.msra.mxu0 0.0
      %3151 = vmatprep.subr.mxu0 0.0
      %3152 = vmatpush1.msra.mxu0 0.0
      %3153 = vmatprep.subr.mxu0 0.0
      %3154 = vmatpush1.msra.mxu0 0.0
      %3155 = vmatprep.subr.mxu0 0.0
      %3156 = vmatpush1.msra.mxu0 0.0
      %3157 = vmatprep.subr.mxu0 0.0
      %3158 = vmatpush1.msra.mxu0 0.0
      %3159 = vmatprep.subr.mxu0 0.0
      %3160 = vmatpush1.msra.mxu0 0.0
      %3161 = vmatprep.subr.mxu0 0.0
      %3162 = vmatpush1.msra.mxu0 0.0
      %3163 = vmatprep.subr.mxu0 0.0
      %3164 = vmatpush1.msra.mxu0 0.0
      %3165 = vmatprep.subr.mxu0 0.0
      %3166 = vmatpush1.msra.mxu0 0.0
      %3167 = vmatprep.subr.mxu0 0.0
      %3168 = vmatpush1.msra.mxu0 0.0
      %3169 = vmatprep.subr.mxu0 0.0
      %3170 = vmatpush1.msra.mxu0 0.0
      %3171 = vmatprep.subr.mxu0 0.0
      %3172 = vmatpush1.msra.mxu0 0.0
      %3173 = vmatprep.subr.mxu0 0.0
      %3174 = vmatpush1.msra.mxu0 0.0
      %3175 = vmatprep.subr.mxu0 0.0
      %3176 = vmatpush1.msra.mxu0 0.0
      %3177 = vmatprep.subr.mxu0 0.0
      %3178 = vmatpush1.msra.mxu0 0.0
      %3179 = vmatprep.subr.mxu0 0.0
      %3180 = vmatpush1.msra.mxu0 0.0
      %3181 = vmatprep.subr.mxu0 0.0
      %3182 = vmatpush1.msra.mxu0 0.0
      %3183 = vmatprep.subr.mxu0 0.0
      %3184 = vmatpush1.msra.mxu0 0.0
      %3185 = vmatprep.subr.mxu0 0.0
      %3186 = vmatpush1.msra.mxu0 0.0
      %3187 = vmatprep.subr.mxu0 0.0
      %3188 = vmatpush1.msra.mxu0 0.0
      %3189 = vmatprep.subr.mxu0 0.0
      %3190 = vmatpush1.msra.mxu0 0.0
      %3191 = vmatprep.mubr.f32.mxu0 0.0
      %3192 = vmatmul.mubr.f32.gmra.mrb[0].mxu0 %v3122
      %v3193 = vpop.f32.mrb[0].mxu0
      %v3194 = vadd.f32 0.0, %v3193
      %v3195 = vpop.f32.mrb[0].mxu0
      %3196 = vmatprep.mubr.f32.mxu0 0.0
      %3197 = vmatmul.mubr.f32.gmra.mrb[0].mxu0 %v3125
      %v3198 = vpop.f32.mrb[0].mxu0
      %v3199 = vadd.f32 0.0, %v3198
      %v3200 = vpop.f32.mrb[0].mxu0
      %3201 = vdwg.mxu0
      %3204 = vrot.lane.b32.xlu0 %v406, 96
      %v3205 = vpop.permute.xlu0 %3204
      %3206 = vrot.lane.b32.xlu0 %v412, 96
      %v3207 = vpop.permute.xlu0 %3206
      %v3211 = vsel %vm1190, %v2925, 0
      %v3214 = vsel %vm1190, %v2926, 0
      %3216 = vmatprep.subr.mxu0 0.0
      %3217 = vmatpush1.msra.mxu0 %v3205
      %3218 = vmatprep.subr.mxu0 0.0
      %3219 = vmatpush1.msra.mxu0 %v3207
      %3220 = vmatprep.subr.mxu0 0.0
      %3221 = vmatpush1.msra.mxu0 0.0
      %3222 = vmatprep.subr.mxu0 0.0
      %3223 = vmatpush1.msra.mxu0 0.0
      %3224 = vmatprep.subr.mxu0 0.0
      %3225 = vmatpush1.msra.mxu0 0.0
      %3226 = vmatprep.subr.mxu0 0.0
      %3227 = vmatpush1.msra.mxu0 0.0
      %3228 = vmatprep.subr.mxu0 0.0
      %3229 = vmatpush1.msra.mxu0 0.0
      %3230 = vmatprep.subr.mxu0 0.0
      %3231 = vmatpush1.msra.mxu0 0.0
      %3232 = vmatprep.subr.mxu0 0.0
      %3233 = vmatpush1.msra.mxu0 0.0
      %3234 = vmatprep.subr.mxu0 0.0
      %3235 = vmatpush1.msra.mxu0 0.0
      %3236 = vmatprep.subr.mxu0 0.0
      %3237 = vmatpush1.msra.mxu0 0.0
      %3238 = vmatprep.subr.mxu0 0.0
      %3239 = vmatpush1.msra.mxu0 0.0
      %3240 = vmatprep.subr.mxu0 0.0
      %3241 = vmatpush1.msra.mxu0 0.0
      %3242 = vmatprep.subr.mxu0 0.0
      %3243 = vmatpush1.msra.mxu0 0.0
      %3244 = vmatprep.subr.mxu0 0.0
      %3245 = vmatpush1.msra.mxu0 0.0
      %3246 = vmatprep.subr.mxu0 0.0
      %3247 = vmatpush1.msra.mxu0 0.0
      %3248 = vmatprep.subr.mxu0 0.0
      %3249 = vmatpush1.msra.mxu0 0.0
      %3250 = vmatprep.subr.mxu0 0.0
      %3251 = vmatpush1.msra.mxu0 0.0
      %3252 = vmatprep.subr.mxu0 0.0
      %3253 = vmatpush1.msra.mxu0 0.0
      %3254 = vmatprep.subr.mxu0 0.0
      %3255 = vmatpush1.msra.mxu0 0.0
      %3256 = vmatprep.subr.mxu0 0.0
      %3257 = vmatpush1.msra.mxu0 0.0
      %3258 = vmatprep.subr.mxu0 0.0
      %3259 = vmatpush1.msra.mxu0 0.0
      %3260 = vmatprep.subr.mxu0 0.0
      %3261 = vmatpush1.msra.mxu0 0.0
      %3262 = vmatprep.subr.mxu0 0.0
      %3263 = vmatpush1.msra.mxu0 0.0
      %3264 = vmatprep.subr.mxu0 0.0
      %3265 = vmatpush1.msra.mxu0 0.0
      %3266 = vmatprep.subr.mxu0 0.0
      %3267 = vmatpush1.msra.mxu0 0.0
      %3268 = vmatprep.subr.mxu0 0.0
      %3269 = vmatpush1.msra.mxu0 0.0
      %3270 = vmatprep.subr.mxu0 0.0
      %3271 = vmatpush1.msra.mxu0 0.0
      %3272 = vmatprep.subr.mxu0 0.0
      %3273 = vmatpush1.msra.mxu0 0.0
      %3274 = vmatprep.subr.mxu0 0.0
      %3275 = vmatpush1.msra.mxu0 0.0
      %3276 = vmatprep.subr.mxu0 0.0
      %3277 = vmatpush1.msra.mxu0 0.0
      %3278 = vmatprep.subr.mxu0 0.0
      %3279 = vmatpush1.msra.mxu0 0.0
      %3280 = vmatprep.mubr.f32.mxu0 0.0
      %3281 = vmatmul.mubr.f32.gmra.mrb[0].mxu0 %v3211
      %v3282 = vpop.f32.mrb[0].mxu0
      %v3283 = vadd.f32 0.0, %v3282
      %v3284 = vpop.f32.mrb[0].mxu0
      %3285 = vmatprep.mubr.f32.mxu0 0.0
      %3286 = vmatmul.mubr.f32.gmra.mrb[0].mxu0 %v3214
      %v3287 = vpop.f32.mrb[0].mxu0
      %v3288 = vadd.f32 0.0, %v3287
      %v3289 = vpop.f32.mrb[0].mxu0
      %3290 = vdwg.mxu0
      %3293 = vrot.lane.b32.xlu0 %v418, 96
      %v3294 = vpop.permute.xlu0 %3293
      %3295 = vrot.lane.b32.xlu0 %v424, 96
      %v3296 = vpop.permute.xlu0 %3295
      %v3300 = vsel %vm1190, %v2927, 0
      %v3303 = vsel %vm1190, %v2928, 0
      %3305 = vmatprep.subr.mxu0 0.0
      %3306 = vmatpush1.msra.mxu0 %v3294
      %3307 = vmatprep.subr.mxu0 0.0
      %3308 = vmatpush1.msra.mxu0 %v3296
      %3309 = vmatprep.subr.mxu0 0.0
      %3310 = vmatpush1.msra.mxu0 0.0
      %3311 = vmatprep.subr.mxu0 0.0
      %3312 = vmatpush1.msra.mxu0 0.0
      %3313 = vmatprep.subr.mxu0 0.0
      %3314 = vmatpush1.msra.mxu0 0.0
      %3315 = vmatprep.subr.mxu0 0.0
      %3316 = vmatpush1.msra.mxu0 0.0
      %3317 = vmatprep.subr.mxu0 0.0
      %3318 = vmatpush1.msra.mxu0 0.0
      %3319 = vmatprep.subr.mxu0 0.0
      %3320 = vmatpush1.msra.mxu0 0.0
      %3321 = vmatprep.subr.mxu0 0.0
      %3322 = vmatpush1.msra.mxu0 0.0
      %3323 = vmatprep.subr.mxu0 0.0
      %3324 = vmatpush1.msra.mxu0 0.0
      %3325 = vmatprep.subr.mxu0 0.0
      %3326 = vmatpush1.msra.mxu0 0.0
      %3327 = vmatprep.subr.mxu0 0.0
      %3328 = vmatpush1.msra.mxu0 0.0
      %3329 = vmatprep.subr.mxu0 0.0
      %3330 = vmatpush1.msra.mxu0 0.0
      %3331 = vmatprep.subr.mxu0 0.0
      %3332 = vmatpush1.msra.mxu0 0.0
      %3333 = vmatprep.subr.mxu0 0.0
      %3334 = vmatpush1.msra.mxu0 0.0
      %3335 = vmatprep.subr.mxu0 0.0
      %3336 = vmatpush1.msra.mxu0 0.0
      %3337 = vmatprep.subr.mxu0 0.0
      %3338 = vmatpush1.msra.mxu0 0.0
      %3339 = vmatprep.subr.mxu0 0.0
      %3340 = vmatpush1.msra.mxu0 0.0
      %3341 = vmatprep.subr.mxu0 0.0
      %3342 = vmatpush1.msra.mxu0 0.0
      %3343 = vmatprep.subr.mxu0 0.0
      %3344 = vmatpush1.msra.mxu0 0.0
      %3345 = vmatprep.subr.mxu0 0.0
      %3346 = vmatpush1.msra.mxu0 0.0
      %3347 = vmatprep.subr.mxu0 0.0
      %3348 = vmatpush1.msra.mxu0 0.0
      %3349 = vmatprep.subr.mxu0 0.0
      %3350 = vmatpush1.msra.mxu0 0.0
      %3351 = vmatprep.subr.mxu0 0.0
      %3352 = vmatpush1.msra.mxu0 0.0
      %3353 = vmatprep.subr.mxu0 0.0
      %3354 = vmatpush1.msra.mxu0 0.0
      %3355 = vmatprep.subr.mxu0 0.0
      %3356 = vmatpush1.msra.mxu0 0.0
      %3357 = vmatprep.subr.mxu0 0.0
      %3358 = vmatpush1.msra.mxu0 0.0
      %3359 = vmatprep.subr.mxu0 0.0
      %3360 = vmatpush1.msra.mxu0 0.0
      %3361 = vmatprep.subr.mxu0 0.0
      %3362 = vmatpush1.msra.mxu0 0.0
      %3363 = vmatprep.subr.mxu0 0.0
      %3364 = vmatpush1.msra.mxu0 0.0
      %3365 = vmatprep.subr.mxu0 0.0
      %3366 = vmatpush1.msra.mxu0 0.0
      %3367 = vmatprep.subr.mxu0 0.0
      %3368 = vmatpush1.msra.mxu0 0.0
      %3369 = vmatprep.mubr.f32.mxu0 0.0
      %3370 = vmatmul.mubr.f32.gmra.mrb[0].mxu0 %v3300
      %v3371 = vpop.f32.mrb[0].mxu0
      %v3372 = vadd.f32 0.0, %v3371
      %v3373 = vpop.f32.mrb[0].mxu0
      %3374 = vmatprep.mubr.f32.mxu0 0.0
      %3375 = vmatmul.mubr.f32.gmra.mrb[0].mxu0 %v3303
      %v3376 = vpop.f32.mrb[0].mxu0
      %v3377 = vadd.f32 0.0, %v3376
      %v3378 = vpop.f32.mrb[0].mxu0
      %3379 = vdwg.mxu0
      %3382 = vrot.lane.b32.xlu0 %v430, 96
      %v3383 = vpop.permute.xlu0 %3382
      %3384 = vrot.lane.b32.xlu0 %v436, 96
      %v3385 = vpop.permute.xlu0 %3384
      %v3389 = vsel %vm1190, %v2929, 0
      %v3392 = vsel %vm1190, %v2930, 0
      %3394 = vmatprep.subr.mxu0 0.0
      %3395 = vmatpush1.msra.mxu0 %v3383
      %3396 = vmatprep.subr.mxu0 0.0
      %3397 = vmatpush1.msra.mxu0 %v3385
      %3398 = vmatprep.subr.mxu0 0.0
      %3399 = vmatpush1.msra.mxu0 0.0
      %3400 = vmatprep.subr.mxu0 0.0
      %3401 = vmatpush1.msra.mxu0 0.0
      %3402 = vmatprep.subr.mxu0 0.0
      %3403 = vmatpush1.msra.mxu0 0.0
      %3404 = vmatprep.subr.mxu0 0.0
      %3405 = vmatpush1.msra.mxu0 0.0
      %3406 = vmatprep.subr.mxu0 0.0
      %3407 = vmatpush1.msra.mxu0 0.0
      %3408 = vmatprep.subr.mxu0 0.0
      %3409 = vmatpush1.msra.mxu0 0.0
      %3410 = vmatprep.subr.mxu0 0.0
      %3411 = vmatpush1.msra.mxu0 0.0
      %3412 = vmatprep.subr.mxu0 0.0
      %3413 = vmatpush1.msra.mxu0 0.0
      %3414 = vmatprep.subr.mxu0 0.0
      %3415 = vmatpush1.msra.mxu0 0.0
      %3416 = vmatprep.subr.mxu0 0.0
      %3417 = vmatpush1.msra.mxu0 0.0
      %3418 = vmatprep.subr.mxu0 0.0
      %3419 = vmatpush1.msra.mxu0 0.0
      %3420 = vmatprep.subr.mxu0 0.0
      %3421 = vmatpush1.msra.mxu0 0.0
      %3422 = vmatprep.subr.mxu0 0.0
      %3423 = vmatpush1.msra.mxu0 0.0
      %3424 = vmatprep.subr.mxu0 0.0
      %3425 = vmatpush1.msra.mxu0 0.0
      %3426 = vmatprep.subr.mxu0 0.0
      %3427 = vmatpush1.msra.mxu0 0.0
      %3428 = vmatprep.subr.mxu0 0.0
      %3429 = vmatpush1.msra.mxu0 0.0
      %3430 = vmatprep.subr.mxu0 0.0
      %3431 = vmatpush1.msra.mxu0 0.0
      %3432 = vmatprep.subr.mxu0 0.0
      %3433 = vmatpush1.msra.mxu0 0.0
      %3434 = vmatprep.subr.mxu0 0.0
      %3435 = vmatpush1.msra.mxu0 0.0
      %3436 = vmatprep.subr.mxu0 0.0
      %3437 = vmatpush1.msra.mxu0 0.0
      %3438 = vmatprep.subr.mxu0 0.0
      %3439 = vmatpush1.msra.mxu0 0.0
      %3440 = vmatprep.subr.mxu0 0.0
      %3441 = vmatpush1.msra.mxu0 0.0
      %3442 = vmatprep.subr.mxu0 0.0
      %3443 = vmatpush1.msra.mxu0 0.0
      %3444 = vmatprep.subr.mxu0 0.0
      %3445 = vmatpush1.msra.mxu0 0.0
      %3446 = vmatprep.subr.mxu0 0.0
      %3447 = vmatpush1.msra.mxu0 0.0
      %3448 = vmatprep.subr.mxu0 0.0
      %3449 = vmatpush1.msra.mxu0 0.0
      %3450 = vmatprep.subr.mxu0 0.0
      %3451 = vmatpush1.msra.mxu0 0.0
      %3452 = vmatprep.subr.mxu0 0.0
      %3453 = vmatpush1.msra.mxu0 0.0
      %3454 = vmatprep.subr.mxu0 0.0
      %3455 = vmatpush1.msra.mxu0 0.0
      %3456 = vmatprep.subr.mxu0 0.0
      %3457 = vmatpush1.msra.mxu0 0.0
      %3458 = vmatprep.mubr.f32.mxu0 0.0
      %3459 = vmatmul.mubr.f32.gmra.mrb[0].mxu0 %v3389
      %v3460 = vpop.f32.mrb[0].mxu0
      %v3461 = vadd.f32 0.0, %v3460
      %v3462 = vpop.f32.mrb[0].mxu0
      %3463 = vmatprep.mubr.f32.mxu0 0.0
      %3464 = vmatmul.mubr.f32.gmra.mrb[0].mxu0 %v3392
      %v3465 = vpop.f32.mrb[0].mxu0
      %v3466 = vadd.f32 0.0, %v3465
      %v3467 = vpop.f32.mrb[0].mxu0
      %3468 = vdwg.mxu0
      %3471 = vrot.lane.b32.xlu0 %v442, 96
      %v3472 = vpop.permute.xlu0 %3471
      %3473 = vrot.lane.b32.xlu0 %v448, 96
      %v3474 = vpop.permute.xlu0 %3473
      %v3478 = vsel %vm1190, %v2931, 0
      %v3481 = vsel %vm1190, %v2932, 0
      %3483 = vmatprep.subr.mxu0 0.0
      %3484 = vmatpush1.msra.mxu0 %v3472
      %3485 = vmatprep.subr.mxu0 0.0
      %3486 = vmatpush1.msra.mxu0 %v3474
      %3487 = vmatprep.subr.mxu0 0.0
      %3488 = vmatpush1.msra.mxu0 0.0
      %3489 = vmatprep.subr.mxu0 0.0
      %3490 = vmatpush1.msra.mxu0 0.0
      %3491 = vmatprep.subr.mxu0 0.0
      %3492 = vmatpush1.msra.mxu0 0.0
      %3493 = vmatprep.subr.mxu0 0.0
      %3494 = vmatpush1.msra.mxu0 0.0
      %3495 = vmatprep.subr.mxu0 0.0
      %3496 = vmatpush1.msra.mxu0 0.0
      %3497 = vmatprep.subr.mxu0 0.0
      %3498 = vmatpush1.msra.mxu0 0.0
      %3499 = vmatprep.subr.mxu0 0.0
      %3500 = vmatpush1.msra.mxu0 0.0
      %3501 = vmatprep.subr.mxu0 0.0
      %3502 = vmatpush1.msra.mxu0 0.0
      %3503 = vmatprep.subr.mxu0 0.0
      %3504 = vmatpush1.msra.mxu0 0.0
      %3505 = vmatprep.subr.mxu0 0.0
      %3506 = vmatpush1.msra.mxu0 0.0
      %3507 = vmatprep.subr.mxu0 0.0
      %3508 = vmatpush1.msra.mxu0 0.0
      %3509 = vmatprep.subr.mxu0 0.0
      %3510 = vmatpush1.msra.mxu0 0.0
      %3511 = vmatprep.subr.mxu0 0.0
      %3512 = vmatpush1.msra.mxu0 0.0
      %3513 = vmatprep.subr.mxu0 0.0
      %3514 = vmatpush1.msra.mxu0 0.0
      %3515 = vmatprep.subr.mxu0 0.0
      %3516 = vmatpush1.msra.mxu0 0.0
      %3517 = vmatprep.subr.mxu0 0.0
      %3518 = vmatpush1.msra.mxu0 0.0
      %3519 = vmatprep.subr.mxu0 0.0
      %3520 = vmatpush1.msra.mxu0 0.0
      %3521 = vmatprep.subr.mxu0 0.0
      %3522 = vmatpush1.msra.mxu0 0.0
      %3523 = vmatprep.subr.mxu0 0.0
      %3524 = vmatpush1.msra.mxu0 0.0
      %3525 = vmatprep.subr.mxu0 0.0
      %3526 = vmatpush1.msra.mxu0 0.0
      %3527 = vmatprep.subr.mxu0 0.0
      %3528 = vmatpush1.msra.mxu0 0.0
      %3529 = vmatprep.subr.mxu0 0.0
      %3530 = vmatpush1.msra.mxu0 0.0
      %3531 = vmatprep.subr.mxu0 0.0
      %3532 = vmatpush1.msra.mxu0 0.0
      %3533 = vmatprep.subr.mxu0 0.0
      %3534 = vmatpush1.msra.mxu0 0.0
      %3535 = vmatprep.subr.mxu0 0.0
      %3536 = vmatpush1.msra.mxu0 0.0
      %3537 = vmatprep.subr.mxu0 0.0
      %3538 = vmatpush1.msra.mxu0 0.0
      %3539 = vmatprep.subr.mxu0 0.0
      %3540 = vmatpush1.msra.mxu0 0.0
      %3541 = vmatprep.subr.mxu0 0.0
      %3542 = vmatpush1.msra.mxu0 0.0
      %3543 = vmatprep.subr.mxu0 0.0
      %3544 = vmatpush1.msra.mxu0 0.0
      %3545 = vmatprep.subr.mxu0 0.0
      %3546 = vmatpush1.msra.mxu0 0.0
      %3547 = vmatprep.mubr.f32.mxu0 0.0
      %3548 = vmatmul.mubr.f32.gmra.mrb[0].mxu0 %v3478
      %v3549 = vpop.f32.mrb[0].mxu0
      %v3550 = vadd.f32 0.0, %v3549
      %v3551 = vpop.f32.mrb[0].mxu0
      %3552 = vmatprep.mubr.f32.mxu0 0.0
      %3553 = vmatmul.mubr.f32.gmra.mrb[0].mxu0 %v3481
      %v3554 = vpop.f32.mrb[0].mxu0
      %v3555 = vadd.f32 0.0, %v3554
      %v3556 = vpop.f32.mrb[0].mxu0
      %3557 = vdwg.mxu0
      %3560 = vrot.lane.b32.xlu0 %v454, 96
      %v3561 = vpop.permute.xlu0 %3560
      %3562 = vrot.lane.b32.xlu0 %v460, 96
      %v3563 = vpop.permute.xlu0 %3562
      %v3567 = vsel %vm1190, %v2933, 0
      %v3570 = vsel %vm1190, %v2934, 0
      %3572 = vmatprep.subr.mxu0 0.0
      %3573 = vmatpush1.msra.mxu0 %v3561
      %3574 = vmatprep.subr.mxu0 0.0
      %3575 = vmatpush1.msra.mxu0 %v3563
      %3576 = vmatprep.subr.mxu0 0.0
      %3577 = vmatpush1.msra.mxu0 0.0
      %3578 = vmatprep.subr.mxu0 0.0
      %3579 = vmatpush1.msra.mxu0 0.0
      %3580 = vmatprep.subr.mxu0 0.0
      %3581 = vmatpush1.msra.mxu0 0.0
      %3582 = vmatprep.subr.mxu0 0.0
      %3583 = vmatpush1.msra.mxu0 0.0
      %3584 = vmatprep.subr.mxu0 0.0
      %3585 = vmatpush1.msra.mxu0 0.0
      %3586 = vmatprep.subr.mxu0 0.0
      %3587 = vmatpush1.msra.mxu0 0.0
      %3588 = vmatprep.subr.mxu0 0.0
      %3589 = vmatpush1.msra.mxu0 0.0
      %3590 = vmatprep.subr.mxu0 0.0
      %3591 = vmatpush1.msra.mxu0 0.0
      %3592 = vmatprep.subr.mxu0 0.0
      %3593 = vmatpush1.msra.mxu0 0.0
      %3594 = vmatprep.subr.mxu0 0.0
      %3595 = vmatpush1.msra.mxu0 0.0
      %3596 = vmatprep.subr.mxu0 0.0
      %3597 = vmatpush1.msra.mxu0 0.0
      %3598 = vmatprep.subr.mxu0 0.0
      %3599 = vmatpush1.msra.mxu0 0.0
      %3600 = vmatprep.subr.mxu0 0.0
      %3601 = vmatpush1.msra.mxu0 0.0
      %3602 = vmatprep.subr.mxu0 0.0
      %3603 = vmatpush1.msra.mxu0 0.0
      %3604 = vmatprep.subr.mxu0 0.0
      %3605 = vmatpush1.msra.mxu0 0.0
      %3606 = vmatprep.subr.mxu0 0.0
      %3607 = vmatpush1.msra.mxu0 0.0
      %3608 = vmatprep.subr.mxu0 0.0
      %3609 = vmatpush1.msra.mxu0 0.0
      %3610 = vmatprep.subr.mxu0 0.0
      %3611 = vmatpush1.msra.mxu0 0.0
      %3612 = vmatprep.subr.mxu0 0.0
      %3613 = vmatpush1.msra.mxu0 0.0
      %3614 = vmatprep.subr.mxu0 0.0
      %3615 = vmatpush1.msra.mxu0 0.0
      %3616 = vmatprep.subr.mxu0 0.0
      %3617 = vmatpush1.msra.mxu0 0.0
      %3618 = vmatprep.subr.mxu0 0.0
      %3619 = vmatpush1.msra.mxu0 0.0
      %3620 = vmatprep.subr.mxu0 0.0
      %3621 = vmatpush1.msra.mxu0 0.0
      %3622 = vmatprep.subr.mxu0 0.0
      %3623 = vmatpush1.msra.mxu0 0.0
      %3624 = vmatprep.subr.mxu0 0.0
      %3625 = vmatpush1.msra.mxu0 0.0
      %3626 = vmatprep.subr.mxu0 0.0
      %3627 = vmatpush1.msra.mxu0 0.0
      %3628 = vmatprep.subr.mxu0 0.0
      %3629 = vmatpush1.msra.mxu0 0.0
      %3630 = vmatprep.subr.mxu0 0.0
      %3631 = vmatpush1.msra.mxu0 0.0
      %3632 = vmatprep.subr.mxu0 0.0
      %3633 = vmatpush1.msra.mxu0 0.0
      %3634 = vmatprep.subr.mxu0 0.0
      %3635 = vmatpush1.msra.mxu0 0.0
      %3636 = vmatprep.mubr.f32.mxu0 0.0
      %3637 = vmatmul.mubr.f32.gmra.mrb[0].mxu0 %v3567
      %v3638 = vpop.f32.mrb[0].mxu0
      %v3639 = vadd.f32 0.0, %v3638
      %v3640 = vpop.f32.mrb[0].mxu0
      %3641 = vmatprep.mubr.f32.mxu0 0.0
      %3642 = vmatmul.mubr.f32.gmra.mrb[0].mxu0 %v3570
      %v3643 = vpop.f32.mrb[0].mxu0
      %v3644 = vadd.f32 0.0, %v3643
      %v3645 = vpop.f32.mrb[0].mxu0
      %3646 = vdwg.mxu0
      %3663 = vrot.lane.b32.xlu0 %v3016, 32
      %v3664 = vpop.permute.xlu0 %3663
      %3665 = vrot.lane.b32.xlu0 %v3021, 32
      %v3666 = vpop.permute.xlu0 %3665
      %3667 = vrot.lane.b32.xlu0 %v3105, 32
      %v3668 = vpop.permute.xlu0 %3667
      %3669 = vrot.lane.b32.xlu0 %v3110, 32
      %v3670 = vpop.permute.xlu0 %3669
      %3671 = vrot.lane.b32.xlu0 %v3194, 32
      %v3672 = vpop.permute.xlu0 %3671
      %3673 = vrot.lane.b32.xlu0 %v3199, 32
      %v3674 = vpop.permute.xlu0 %3673
      %3675 = vrot.lane.b32.xlu0 %v3283, 32
      %v3676 = vpop.permute.xlu0 %3675
      %3677 = vrot.lane.b32.xlu0 %v3288, 32
      %v3678 = vpop.permute.xlu0 %3677
      %3679 = vrot.lane.b32.xlu0 %v3372, 32
      %v3680 = vpop.permute.xlu0 %3679
      %3681 = vrot.lane.b32.xlu0 %v3377, 32
      %v3682 = vpop.permute.xlu0 %3681
      %3683 = vrot.lane.b32.xlu0 %v3461, 32
      %v3684 = vpop.permute.xlu0 %3683
      %3685 = vrot.lane.b32.xlu0 %v3466, 32
      %v3686 = vpop.permute.xlu0 %3685
      %3687 = vrot.lane.b32.xlu0 %v3550, 32
      %v3688 = vpop.permute.xlu0 %3687
      %3689 = vrot.lane.b32.xlu0 %v3555, 32
      %v3690 = vpop.permute.xlu0 %3689
      %3691 = vrot.lane.b32.xlu0 %v3639, 32
      %v3692 = vpop.permute.xlu0 %3691
      %3693 = vrot.lane.b32.xlu0 %v3644, 32
      %v3694 = vpop.permute.xlu0 %3693
      %v3711 = vsel %vm252, %v1440, %v3664
      %v3712 = vsel %vm252, %v1445, %v3666
      %v3713 = vsel %vm252, %v1521, %v3668
      %v3714 = vsel %vm252, %v1526, %v3670
      %v3715 = vsel %vm252, %v1602, %v3672
      %v3716 = vsel %vm252, %v1607, %v3674
      %v3717 = vsel %vm252, %v1683, %v3676
      %v3718 = vsel %vm252, %v1688, %v3678
      %v3719 = vsel %vm252, %v1764, %v3680
      %v3720 = vsel %vm252, %v1769, %v3682
      %v3721 = vsel %vm252, %v1845, %v3684
      %v3722 = vsel %vm252, %v1850, %v3686
      %v3723 = vsel %vm252, %v1926, %v3688
      %v3724 = vsel %vm252, %v1931, %v3690
      %v3725 = vsel %vm252, %v2007, %v3692
      %v3726 = vsel %vm252, %v2012, %v3694
      %v3727 = vld [vmem:[%s2] sm:$0xff]
      %v3728 = vld [vmem:[%s2 + $0x8] sm:$0xff]
      %v3729 = vld [vmem:[%s2 + $0x10] sm:$0xff]
      %v3730 = vld [vmem:[%s2 + $0x18] sm:$0xff]
      %v3731 = vld [vmem:[%s2 + $0x20] sm:$0xff]
      %v3732 = vld [vmem:[%s2 + $0x28] sm:$0xff]
      %v3733 = vld [vmem:[%s2 + $0x30] sm:$0xff]
      %v3734 = vld [vmem:[%s2 + $0x38] sm:$0xff]
      %vm3735 = vcmask 523264
      %v3737 = vsel %vm3735, %v3711, 0
      %v3740 = vsel %vm3735, %v3712, 0
      %v3743 = vsel %vm3735, %v3713, 0
      %v3746 = vsel %vm3735, %v3714, 0
      %v3749 = vsel %vm3735, %v3715, 0
      %v3752 = vsel %vm3735, %v3716, 0
      %v3755 = vsel %vm3735, %v3717, 0
      %v3758 = vsel %vm3735, %v3718, 0
      %v3761 = vsel %vm3735, %v3719, 0
      %v3764 = vsel %vm3735, %v3720, 0
      %v3767 = vsel %vm3735, %v3721, 0
      %v3770 = vsel %vm3735, %v3722, 0
      %v3773 = vsel %vm3735, %v3723, 0
      %v3776 = vsel %vm3735, %v3724, 0
      %v3779 = vsel %vm3735, %v3725, 0
      %v3782 = vsel %vm3735, %v3726, 0
      %3784 = vmatprep.subr.mxu0 0.0
      %3785 = vmatpush1.msra.mxu0 %v3727
      %3786 = vmatprep.subr.mxu0 0.0
      %3787 = vmatpush1.msra.mxu0 %v3728
      %3788 = vmatprep.subr.mxu0 0.0
      %3789 = vmatpush1.msra.mxu0 %v3729
      %3790 = vmatprep.subr.mxu0 0.0
      %3791 = vmatpush1.msra.mxu0 %v3730
      %3792 = vmatprep.subr.mxu0 0.0
      %3793 = vmatpush1.msra.mxu0 %v3731
      %3794 = vmatprep.subr.mxu0 0.0
      %3795 = vmatpush1.msra.mxu0 %v3732
      %3796 = vmatprep.subr.mxu0 0.0
      %3797 = vmatpush1.msra.mxu0 %v3733
      %3798 = vmatprep.subr.mxu0 0.0
      %3799 = vmatpush1.msra.mxu0 %v3734
      %3800 = vmatprep.subr.mxu0 0.0
      %3801 = vmatpush1.msra.mxu0 0.0
      %3802 = vmatprep.subr.mxu0 0.0
      %3803 = vmatpush1.msra.mxu0 0.0
      %3804 = vmatprep.subr.mxu0 0.0
      %3805 = vmatpush1.msra.mxu0 0.0
      %3806 = vmatprep.subr.mxu0 0.0
      %3807 = vmatpush1.msra.mxu0 0.0
      %3808 = vmatprep.subr.mxu0 0.0
      %3809 = vmatpush1.msra.mxu0 0.0
      %3810 = vmatprep.subr.mxu0 0.0
      %3811 = vmatpush1.msra.mxu0 0.0
      %3812 = vmatprep.subr.mxu0 0.0
      %3813 = vmatpush1.msra.mxu0 0.0
      %3814 = vmatprep.subr.mxu0 0.0
      %3815 = vmatpush1.msra.mxu0 0.0
      %3816 = vmatprep.subr.mxu0 0.0
      %3817 = vmatpush1.msra.mxu0 0.0
      %3818 = vmatprep.subr.mxu0 0.0
      %3819 = vmatpush1.msra.mxu0 0.0
      %3820 = vmatprep.subr.mxu0 0.0
      %3821 = vmatpush1.msra.mxu0 0.0
      %3822 = vmatprep.subr.mxu0 0.0
      %3823 = vmatpush1.msra.mxu0 0.0
      %3824 = vmatprep.subr.mxu0 0.0
      %3825 = vmatpush1.msra.mxu0 0.0
      %3826 = vmatprep.subr.mxu0 0.0
      %3827 = vmatpush1.msra.mxu0 0.0
      %3828 = vmatprep.subr.mxu0 0.0
      %3829 = vmatpush1.msra.mxu0 0.0
      %3830 = vmatprep.subr.mxu0 0.0
      %3831 = vmatpush1.msra.mxu0 0.0
      %3832 = vmatprep.subr.mxu0 0.0
      %3833 = vmatpush1.msra.mxu0 0.0
      %3834 = vmatprep.subr.mxu0 0.0
      %3835 = vmatpush1.msra.mxu0 0.0
      %3836 = vmatprep.subr.mxu0 0.0
      %3837 = vmatpush1.msra.mxu0 0.0
      %3838 = vmatprep.subr.mxu0 0.0
      %3839 = vmatpush1.msra.mxu0 0.0
      %3840 = vmatprep.subr.mxu0 0.0
      %3841 = vmatpush1.msra.mxu0 0.0
      %3842 = vmatprep.subr.mxu0 0.0
      %3843 = vmatpush1.msra.mxu0 0.0
      %3844 = vmatprep.subr.mxu0 0.0
      %3845 = vmatpush1.msra.mxu0 0.0
      %3846 = vmatprep.subr.mxu0 0.0
      %3847 = vmatpush1.msra.mxu0 0.0
      %3848 = vmatprep.mubr.f32.mxu0 0.0
      %3849 = vmatmul.mubr.f32.gmra.mrb[0].mxu0 %v3737
      %v3850 = vpop.f32.mrb[0].mxu0
      %v3851 = vadd.f32 0.0, %v3850
      %v3852 = vpop.f32.mrb[0].mxu0
      %3853 = vmatprep.mubr.f32.mxu0 0.0
      %3854 = vmatmul.mubr.f32.gmra.mrb[0].mxu0 %v3740
      %v3855 = vpop.f32.mrb[0].mxu0
      %v3856 = vadd.f32 0.0, %v3855
      %v3857 = vpop.f32.mrb[0].mxu0
      %3858 = vmatprep.mubr.f32.mxu0 0.0
      %3859 = vmatmul.mubr.f32.gmra.mrb[0].mxu0 %v3743
      %v3860 = vpop.f32.mrb[0].mxu0
      %v3861 = vadd.f32 0.0, %v3860
      %v3862 = vpop.f32.mrb[0].mxu0
      %3863 = vmatprep.mubr.f32.mxu0 0.0
      %3864 = vmatmul.mubr.f32.gmra.mrb[0].mxu0 %v3746
      %v3865 = vpop.f32.mrb[0].mxu0
      %v3866 = vadd.f32 0.0, %v3865
      %v3867 = vpop.f32.mrb[0].mxu0
      %3868 = vmatprep.mubr.f32.mxu0 0.0
      %3869 = vmatmul.mubr.f32.gmra.mrb[0].mxu0 %v3749
      %v3870 = vpop.f32.mrb[0].mxu0
      %v3871 = vadd.f32 0.0, %v3870
      %v3872 = vpop.f32.mrb[0].mxu0
      %3873 = vmatprep.mubr.f32.mxu0 0.0
      %3874 = vmatmul.mubr.f32.gmra.mrb[0].mxu0 %v3752
      %v3875 = vpop.f32.mrb[0].mxu0
      %v3876 = vadd.f32 0.0, %v3875
      %v3877 = vpop.f32.mrb[0].mxu0
      %3878 = vmatprep.mubr.f32.mxu0 0.0
      %3879 = vmatmul.mubr.f32.gmra.mrb[0].mxu0 %v3755
      %v3880 = vpop.f32.mrb[0].mxu0
      %v3881 = vadd.f32 0.0, %v3880
      %v3882 = vpop.f32.mrb[0].mxu0
      %3883 = vmatprep.mubr.f32.mxu0 0.0
      %3884 = vmatmul.mubr.f32.gmra.mrb[0].mxu0 %v3758
      %v3885 = vpop.f32.mrb[0].mxu0
      %v3886 = vadd.f32 0.0, %v3885
      %v3887 = vpop.f32.mrb[0].mxu0
      %3888 = vmatprep.mubr.f32.mxu0 0.0
      %3889 = vmatmul.mubr.f32.gmra.mrb[0].mxu0 %v3761
      %v3890 = vpop.f32.mrb[0].mxu0
      %v3891 = vadd.f32 0.0, %v3890
      %v3892 = vpop.f32.mrb[0].mxu0
      %3893 = vmatprep.mubr.f32.mxu0 0.0
      %3894 = vmatmul.mubr.f32.gmra.mrb[0].mxu0 %v3764
      %v3895 = vpop.f32.mrb[0].mxu0
      %v3896 = vadd.f32 0.0, %v3895
      %v3897 = vpop.f32.mrb[0].mxu0
      %3898 = vmatprep.mubr.f32.mxu0 0.0
      %3899 = vmatmul.mubr.f32.gmra.mrb[0].mxu0 %v3767
      %v3900 = vpop.f32.mrb[0].mxu0
      %v3901 = vadd.f32 0.0, %v3900
      %v3902 = vpop.f32.mrb[0].mxu0
      %3903 = vmatprep.mubr.f32.mxu0 0.0
      %3904 = vmatmul.mubr.f32.gmra.mrb[0].mxu0 %v3770
      %v3905 = vpop.f32.mrb[0].mxu0
      %v3906 = vadd.f32 0.0, %v3905
      %v3907 = vpop.f32.mrb[0].mxu0
      %3908 = vmatprep.mubr.f32.mxu0 0.0
      %3909 = vmatmul.mubr.f32.gmra.mrb[0].mxu0 %v3773
      %v3910 = vpop.f32.mrb[0].mxu0
      %v3911 = vadd.f32 0.0, %v3910
      %v3912 = vpop.f32.mrb[0].mxu0
      %3913 = vmatprep.mubr.f32.mxu0 0.0
      %3914 = vmatmul.mubr.f32.gmra.mrb[0].mxu0 %v3776
      %v3915 = vpop.f32.mrb[0].mxu0
      %v3916 = vadd.f32 0.0, %v3915
      %v3917 = vpop.f32.mrb[0].mxu0
      %3918 = vmatprep.mubr.f32.mxu0 0.0
      %3919 = vmatmul.mubr.f32.gmra.mrb[0].mxu0 %v3779
      %v3920 = vpop.f32.mrb[0].mxu0
      %v3921 = vadd.f32 0.0, %v3920
      %v3922 = vpop.f32.mrb[0].mxu0
      %3923 = vmatprep.mubr.f32.mxu0 0.0
      %3924 = vmatmul.mubr.f32.gmra.mrb[0].mxu0 %v3782
      %v3925 = vpop.f32.mrb[0].mxu0
      %v3926 = vadd.f32 0.0, %v3925
      %v3927 = vpop.f32.mrb[0].mxu0
      %3928 = vdwg.mxu0
      %v3929 = vld [vmem:[%s4] sm:$0x1]
      %v3930 = vld [vmem:[%s4 + $0x1] sm:$0x1]
      %v3931 = vld [vmem:[%s4 + $0x2] sm:$0x1]
      %v3932 = vld [vmem:[%s4 + $0x3] sm:$0x1]
      %v3933 = vld [vmem:[%s4 + $0x4] sm:$0x1]
      %v3934 = vld [vmem:[%s4 + $0x5] sm:$0x1]
      %v3935 = vadd.f32 %v228, %v3851
      %v3936 = vadd.f32 %v229, %v3856
      %v3937 = vadd.f32 %v230, %v3861
      %v3938 = vadd.f32 %v231, %v3866
      %v3939 = vadd.f32 %v232, %v3871
      %v3940 = vadd.f32 %v233, %v3876
      %v3941 = vadd.f32 %v234, %v3881
      %v3942 = vadd.f32 %v235, %v3886
      %v3943 = vadd.f32 %v236, %v3891
      %v3944 = vadd.f32 %v237, %v3896
      %v3945 = vadd.f32 %v238, %v3901
      %v3946 = vadd.f32 %v239, %v3906
      %v3947 = vadd.f32 %v240, %v3911
      %v3948 = vadd.f32 %v241, %v3916
      %v3949 = vadd.f32 %v242, %v3921
      %v3950 = vadd.f32 %v243, %v3926
      %v3951 = vsel %vm252, %v3935, 0.0
      %3952 = vadd.xlane.f32.xlu0 %v3951
      %v3953 = vpop.xlane.xlu0 %3952
      %v3954 = vsel %vm252, %v3936, 0.0
      %3955 = vadd.xlane.f32.xlu0 %v3954
      %v3956 = vpop.xlane.xlu0 %3955
      %v3957 = vsel %vm252, %v3937, 0.0
      %3958 = vadd.xlane.f32.xlu0 %v3957
      %v3959 = vpop.xlane.xlu0 %3958
      %v3960 = vsel %vm252, %v3938, 0.0
      %3961 = vadd.xlane.f32.xlu0 %v3960
      %v3962 = vpop.xlane.xlu0 %3961
      %v3963 = vsel %vm252, %v3939, 0.0
      %3964 = vadd.xlane.f32.xlu0 %v3963
      %v3965 = vpop.xlane.xlu0 %3964
      %v3966 = vsel %vm252, %v3940, 0.0
      %3967 = vadd.xlane.f32.xlu0 %v3966
      %v3968 = vpop.xlane.xlu0 %3967
      %v3969 = vsel %vm252, %v3941, 0.0
      %3970 = vadd.xlane.f32.xlu0 %v3969
      %v3971 = vpop.xlane.xlu0 %3970
      %v3972 = vsel %vm252, %v3942, 0.0
      %3973 = vadd.xlane.f32.xlu0 %v3972
      %v3974 = vpop.xlane.xlu0 %3973
      %v3975 = vsel %vm252, %v3943, 0.0
      %3976 = vadd.xlane.f32.xlu0 %v3975
      %v3977 = vpop.xlane.xlu0 %3976
      %v3978 = vsel %vm252, %v3944, 0.0
      %3979 = vadd.xlane.f32.xlu0 %v3978
      %v3980 = vpop.xlane.xlu0 %3979
      %v3981 = vsel %vm252, %v3945, 0.0
      %3982 = vadd.xlane.f32.xlu0 %v3981
      %v3983 = vpop.xlane.xlu0 %3982
      %v3984 = vsel %vm252, %v3946, 0.0
      %3985 = vadd.xlane.f32.xlu0 %v3984
      %v3986 = vpop.xlane.xlu0 %3985
      %v3987 = vsel %vm252, %v3947, 0.0
      %3988 = vadd.xlane.f32.xlu0 %v3987
      %v3989 = vpop.xlane.xlu0 %3988
      %v3990 = vsel %vm252, %v3948, 0.0
      %3991 = vadd.xlane.f32.xlu0 %v3990
      %v3992 = vpop.xlane.xlu0 %3991
      %v3993 = vsel %vm252, %v3949, 0.0
      %3994 = vadd.xlane.f32.xlu0 %v3993
      %v3995 = vpop.xlane.xlu0 %3994
      %v3996 = vsel %vm252, %v3950, 0.0
      %3997 = vadd.xlane.f32.xlu0 %v3996
      %v3998 = vpop.xlane.xlu0 %3997
      %v3999 = vrcp.pop 32.0
      %v4000 = vmul.f32 %v3953, %v3999
      %v4001 = vmul.f32 %v3956, %v3999
      %v4002 = vmul.f32 %v3959, %v3999
      %v4003 = vmul.f32 %v3962, %v3999
      %v4004 = vmul.f32 %v3965, %v3999
      %v4005 = vmul.f32 %v3968, %v3999
      %v4006 = vmul.f32 %v3971, %v3999
      %v4007 = vmul.f32 %v3974, %v3999
      %v4008 = vmul.f32 %v3977, %v3999
      %v4009 = vmul.f32 %v3980, %v3999
      %v4010 = vmul.f32 %v3983, %v3999
      %v4011 = vmul.f32 %v3986, %v3999
      %v4012 = vmul.f32 %v3989, %v3999
      %v4013 = vmul.f32 %v3992, %v3999
      %v4014 = vmul.f32 %v3995, %v3999
      %v4015 = vmul.f32 %v3998, %v3999
      %v4016 = vsub.f32 %v3935, %v4000
      %v4017 = vsub.f32 %v3936, %v4001
      %v4018 = vsub.f32 %v3937, %v4002
      %v4019 = vsub.f32 %v3938, %v4003
      %v4020 = vsub.f32 %v3939, %v4004
      %v4021 = vsub.f32 %v3940, %v4005
      %v4022 = vsub.f32 %v3941, %v4006
      %v4023 = vsub.f32 %v3942, %v4007
      %v4024 = vsub.f32 %v3943, %v4008
      %v4025 = vsub.f32 %v3944, %v4009
      %v4026 = vsub.f32 %v3945, %v4010
      %v4027 = vsub.f32 %v3946, %v4011
      %v4028 = vsub.f32 %v3947, %v4012
      %v4029 = vsub.f32 %v3948, %v4013
      %v4030 = vsub.f32 %v3949, %v4014
      %v4031 = vsub.f32 %v3950, %v4015
      %v4032 = vmul.f32 %v4016, %v4016
      %v4033 = vmul.f32 %v4017, %v4017
      %v4034 = vmul.f32 %v4018, %v4018
      %v4035 = vmul.f32 %v4019, %v4019
      %v4036 = vmul.f32 %v4020, %v4020
      %v4037 = vmul.f32 %v4021, %v4021
      %v4038 = vmul.f32 %v4022, %v4022
      %v4039 = vmul.f32 %v4023, %v4023
      %v4040 = vmul.f32 %v4024, %v4024
      %v4041 = vmul.f32 %v4025, %v4025
      %v4042 = vmul.f32 %v4026, %v4026
      %v4043 = vmul.f32 %v4027, %v4027
      %v4044 = vmul.f32 %v4028, %v4028
      %v4045 = vmul.f32 %v4029, %v4029
      %v4046 = vmul.f32 %v4030, %v4030
      %v4047 = vmul.f32 %v4031, %v4031
      %v4048 = vsel %vm252, %v4032, 0.0
      %4049 = vadd.xlane.f32.xlu0 %v4048
      %v4050 = vpop.xlane.xlu0 %4049
      %v4051 = vsel %vm252, %v4033, 0.0
      %4052 = vadd.xlane.f32.xlu0 %v4051
      %v4053 = vpop.xlane.xlu0 %4052
      %v4054 = vsel %vm252, %v4034, 0.0
      %4055 = vadd.xlane.f32.xlu0 %v4054
      %v4056 = vpop.xlane.xlu0 %4055
      %v4057 = vsel %vm252, %v4035, 0.0
      %4058 = vadd.xlane.f32.xlu0 %v4057
      %v4059 = vpop.xlane.xlu0 %4058
      %v4060 = vsel %vm252, %v4036, 0.0
      %4061 = vadd.xlane.f32.xlu0 %v4060
      %v4062 = vpop.xlane.xlu0 %4061
      %v4063 = vsel %vm252, %v4037, 0.0
      %4064 = vadd.xlane.f32.xlu0 %v4063
      %v4065 = vpop.xlane.xlu0 %4064
      %v4066 = vsel %vm252, %v4038, 0.0
      %4067 = vadd.xlane.f32.xlu0 %v4066
      %v4068 = vpop.xlane.xlu0 %4067
      %v4069 = vsel %vm252, %v4039, 0.0
      %4070 = vadd.xlane.f32.xlu0 %v4069
      %v4071 = vpop.xlane.xlu0 %4070
      %v4072 = vsel %vm252, %v4040, 0.0
      %4073 = vadd.xlane.f32.xlu0 %v4072
      %v4074 = vpop.xlane.xlu0 %4073
      %v4075 = vsel %vm252, %v4041, 0.0
      %4076 = vadd.xlane.f32.xlu0 %v4075
      %v4077 = vpop.xlane.xlu0 %4076
      %v4078 = vsel %vm252, %v4042, 0.0
      %4079 = vadd.xlane.f32.xlu0 %v4078
      %v4080 = vpop.xlane.xlu0 %4079
      %v4081 = vsel %vm252, %v4043, 0.0
      %4082 = vadd.xlane.f32.xlu0 %v4081
      %v4083 = vpop.xlane.xlu0 %4082
      %v4084 = vsel %vm252, %v4044, 0.0
      %4085 = vadd.xlane.f32.xlu0 %v4084
      %v4086 = vpop.xlane.xlu0 %4085
      %v4087 = vsel %vm252, %v4045, 0.0
      %4088 = vadd.xlane.f32.xlu0 %v4087
      %v4089 = vpop.xlane.xlu0 %4088
      %v4090 = vsel %vm252, %v4046, 0.0
      %4091 = vadd.xlane.f32.xlu0 %v4090
      %v4092 = vpop.xlane.xlu0 %4091
      %v4093 = vsel %vm252, %v4047, 0.0
      %4094 = vadd.xlane.f32.xlu0 %v4093
      %v4095 = vpop.xlane.xlu0 %4094
      %v4096 = vmul.f32 %v4050, %v3999
      %v4097 = vmul.f32 %v4053, %v3999
      %v4098 = vmul.f32 %v4056, %v3999
      %v4099 = vmul.f32 %v4059, %v3999
      %v4100 = vmul.f32 %v4062, %v3999
      %v4101 = vmul.f32 %v4065, %v3999
      %v4102 = vmul.f32 %v4068, %v3999
      %v4103 = vmul.f32 %v4071, %v3999
      %v4104 = vmul.f32 %v4074, %v3999
      %v4105 = vmul.f32 %v4077, %v3999
      %v4106 = vmul.f32 %v4080, %v3999
      %v4107 = vmul.f32 %v4083, %v3999
      %v4108 = vmul.f32 %v4086, %v3999
      %v4109 = vmul.f32 %v4089, %v3999
      %v4110 = vmul.f32 %v4092, %v3999
      %v4111 = vmul.f32 %v4095, %v3999
      %v4112 = vadd.f32 %v4096, 1e-05
      %v4113 = vadd.f32 %v4097, 1e-05
      %v4114 = vadd.f32 %v4098, 1e-05
      %v4115 = vadd.f32 %v4099, 1e-05
      %v4116 = vadd.f32 %v4100, 1e-05
      %v4117 = vadd.f32 %v4101, 1e-05
      %v4118 = vadd.f32 %v4102, 1e-05
      %v4119 = vadd.f32 %v4103, 1e-05
      %v4120 = vadd.f32 %v4104, 1e-05
      %v4121 = vadd.f32 %v4105, 1e-05
      %v4122 = vadd.f32 %v4106, 1e-05
      %v4123 = vadd.f32 %v4107, 1e-05
      %v4124 = vadd.f32 %v4108, 1e-05
      %v4125 = vadd.f32 %v4109, 1e-05
      %v4126 = vadd.f32 %v4110, 1e-05
      %v4127 = vadd.f32 %v4111, 1e-05
      %v4128 = vrsqrt.pop %v4112
      %v4129 = vrsqrt.pop %v4113
      %v4130 = vrsqrt.pop %v4114
      %v4131 = vrsqrt.pop %v4115
      %v4132 = vrsqrt.pop %v4116
      %v4133 = vrsqrt.pop %v4117
      %v4134 = vrsqrt.pop %v4118
      %v4135 = vrsqrt.pop %v4119
      %v4136 = vrsqrt.pop %v4120
      %v4137 = vrsqrt.pop %v4121
      %v4138 = vrsqrt.pop %v4122
      %v4139 = vrsqrt.pop %v4123
      %v4140 = vrsqrt.pop %v4124
      %v4141 = vrsqrt.pop %v4125
      %v4142 = vrsqrt.pop %v4126
      %v4143 = vrsqrt.pop %v4127
      %v4144 = vmul.f32 %v4016, %v4128
      %v4145 = vmul.f32 %v4017, %v4129
      %v4146 = vmul.f32 %v4018, %v4130
      %v4147 = vmul.f32 %v4019, %v4131
      %v4148 = vmul.f32 %v4020, %v4132
      %v4149 = vmul.f32 %v4021, %v4133
      %v4150 = vmul.f32 %v4022, %v4134
      %v4151 = vmul.f32 %v4023, %v4135
      %v4152 = vmul.f32 %v4024, %v4136
      %v4153 = vmul.f32 %v4025, %v4137
      %v4154 = vmul.f32 %v4026, %v4138
      %v4155 = vmul.f32 %v4027, %v4139
      %v4156 = vmul.f32 %v4028, %v4140
      %v4157 = vmul.f32 %v4029, %v4141
      %v4158 = vmul.f32 %v4030, %v4142
      %v4159 = vmul.f32 %v4031, %v4143
      %v4160 = vlaneseq
      %v4161 = vshrl.u32 %v4160, 7
      %v4162 = vsub.s32 0, %v4161
      %v4163 = vrot.slane %v3931, %v4162
      %v4164 = vmul.f32 %v4144, %v4163
      %v4165 = vmul.f32 %v4145, %v4163
      %v4166 = vmul.f32 %v4146, %v4163
      %v4167 = vmul.f32 %v4147, %v4163
      %v4168 = vmul.f32 %v4148, %v4163
      %v4169 = vmul.f32 %v4149, %v4163
      %v4170 = vmul.f32 %v4150, %v4163
      %v4171 = vmul.f32 %v4151, %v4163
      %v4172 = vmul.f32 %v4152, %v4163
      %v4173 = vmul.f32 %v4153, %v4163
      %v4174 = vmul.f32 %v4154, %v4163
      %v4175 = vmul.f32 %v4155, %v4163
      %v4176 = vmul.f32 %v4156, %v4163
      %v4177 = vmul.f32 %v4157, %v4163
      %v4178 = vmul.f32 %v4158, %v4163
      %v4179 = vmul.f32 %v4159, %v4163
      %v4180 = vlaneseq
      %v4181 = vshrl.u32 %v4180, 7
      %v4182 = vsub.s32 0, %v4181
      %v4183 = vrot.slane %v3932, %v4182
      %v4184 = vadd.f32 %v4164, %v4183
      %v4185 = vadd.f32 %v4165, %v4183
      %v4186 = vadd.f32 %v4166, %v4183
      %v4187 = vadd.f32 %v4167, %v4183
      %v4188 = vadd.f32 %v4168, %v4183
      %v4189 = vadd.f32 %v4169, %v4183
      %v4190 = vadd.f32 %v4170, %v4183
      %v4191 = vadd.f32 %v4171, %v4183
      %v4192 = vadd.f32 %v4172, %v4183
      %v4193 = vadd.f32 %v4173, %v4183
      %v4194 = vadd.f32 %v4174, %v4183
      %v4195 = vadd.f32 %v4175, %v4183
      %v4196 = vadd.f32 %v4176, %v4183
      %v4197 = vadd.f32 %v4177, %v4183
      %v4198 = vadd.f32 %v4178, %v4183
      %v4199 = vadd.f32 %v4179, %v4183
      %v4200 = vld [vmem:[%s3] sm:$0xff]
      %v4201 = vld [vmem:[%s3 + $0x8] sm:$0xff]
      %v4202 = vld [vmem:[%s3 + $0x10] sm:$0xff]
      %v4203 = vld [vmem:[%s3 + $0x18] sm:$0xff]
      %v4204 = vlaneseq
      %v4205 = vshrl.u32 %v4204, 7
      %v4206 = vsub.s32 0, %v4205
      %v4207 = vrot.slane %v3929, %v4206
      %v4209 = vsel %vm252, %v4184, 0
      %v4212 = vsel %vm252, %v4185, 0
      %v4215 = vsel %vm252, %v4186, 0
      %v4218 = vsel %vm252, %v4187, 0
      %v4221 = vsel %vm252, %v4188, 0
      %v4224 = vsel %vm252, %v4189, 0
      %v4227 = vsel %vm252, %v4190, 0
      %v4230 = vsel %vm252, %v4191, 0
      %v4233 = vsel %vm252, %v4192, 0
      %v4236 = vsel %vm252, %v4193, 0
      %v4239 = vsel %vm252, %v4194, 0
      %v4242 = vsel %vm252, %v4195, 0
      %v4245 = vsel %vm252, %v4196, 0
      %v4248 = vsel %vm252, %v4197, 0
      %v4251 = vsel %vm252, %v4198, 0
      %v4254 = vsel %vm252, %v4199, 0
      %4256 = vmatprep.subr.mxu0 0.0
      %4257 = vmatpush1.msra.mxu0 %v4200
      %4258 = vmatprep.subr.mxu0 0.0
      %4259 = vmatpush1.msra.mxu0 %v4201
      %4260 = vmatprep.subr.mxu0 0.0
      %4261 = vmatpush1.msra.mxu0 %v4202
      %4262 = vmatprep.subr.mxu0 0.0
      %4263 = vmatpush1.msra.mxu0 %v4203
      %4264 = vmatprep.subr.mxu0 0.0
      %4265 = vmatpush1.msra.mxu0 0.0
      %4266 = vmatprep.subr.mxu0 0.0
      %4267 = vmatpush1.msra.mxu0 0.0
      %4268 = vmatprep.subr.mxu0 0.0
      %4269 = vmatpush1.msra.mxu0 0.0
      %4270 = vmatprep.subr.mxu0 0.0
      %4271 = vmatpush1.msra.mxu0 0.0
      %4272 = vmatprep.subr.mxu0 0.0
      %4273 = vmatpush1.msra.mxu0 0.0
      %4274 = vmatprep.subr.mxu0 0.0
      %4275 = vmatpush1.msra.mxu0 0.0
      %4276 = vmatprep.subr.mxu0 0.0
      %4277 = vmatpush1.msra.mxu0 0.0
      %4278 = vmatprep.subr.mxu0 0.0
      %4279 = vmatpush1.msra.mxu0 0.0
      %4280 = vmatprep.subr.mxu0 0.0
      %4281 = vmatpush1.msra.mxu0 0.0
      %4282 = vmatprep.subr.mxu0 0.0
      %4283 = vmatpush1.msra.mxu0 0.0
      %4284 = vmatprep.subr.mxu0 0.0
      %4285 = vmatpush1.msra.mxu0 0.0
      %4286 = vmatprep.subr.mxu0 0.0
      %4287 = vmatpush1.msra.mxu0 0.0
      %4288 = vmatprep.subr.mxu0 0.0
      %4289 = vmatpush1.msra.mxu0 0.0
      %4290 = vmatprep.subr.mxu0 0.0
      %4291 = vmatpush1.msra.mxu0 0.0
      %4292 = vmatprep.subr.mxu0 0.0
      %4293 = vmatpush1.msra.mxu0 0.0
      %4294 = vmatprep.subr.mxu0 0.0
      %4295 = vmatpush1.msra.mxu0 0.0
      %4296 = vmatprep.subr.mxu0 0.0
      %4297 = vmatpush1.msra.mxu0 0.0
      %4298 = vmatprep.subr.mxu0 0.0
      %4299 = vmatpush1.msra.mxu0 0.0
      %4300 = vmatprep.subr.mxu0 0.0
      %4301 = vmatpush1.msra.mxu0 0.0
      %4302 = vmatprep.subr.mxu0 0.0
      %4303 = vmatpush1.msra.mxu0 0.0
      %4304 = vmatprep.subr.mxu0 0.0
      %4305 = vmatpush1.msra.mxu0 0.0
      %4306 = vmatprep.subr.mxu0 0.0
      %4307 = vmatpush1.msra.mxu0 0.0
      %4308 = vmatprep.subr.mxu0 0.0
      %4309 = vmatpush1.msra.mxu0 0.0
      %4310 = vmatprep.subr.mxu0 0.0
      %4311 = vmatpush1.msra.mxu0 0.0
      %4312 = vmatprep.subr.mxu0 0.0
      %4313 = vmatpush1.msra.mxu0 0.0
      %4314 = vmatprep.subr.mxu0 0.0
      %4315 = vmatpush1.msra.mxu0 0.0
      %4316 = vmatprep.subr.mxu0 0.0
      %4317 = vmatpush1.msra.mxu0 0.0
      %4318 = vmatprep.subr.mxu0 0.0
      %4319 = vmatpush1.msra.mxu0 0.0
      %4320 = vmatprep.mubr.f32.mxu0 0.0
      %4321 = vmatmul.mubr.f32.gmra.mrb[0].mxu0 %v4209
      %v4322 = vpop.f32.mrb[0].mxu0
      %v4323 = vadd.f32 %v4207, %v4322
      %v4324 = vpop.f32.mrb[0].mxu0
      %4325 = vmatprep.mubr.f32.mxu0 0.0
      %4326 = vmatmul.mubr.f32.gmra.mrb[0].mxu0 %v4212
      %v4327 = vpop.f32.mrb[0].mxu0
      %v4328 = vadd.f32 %v4207, %v4327
      %v4329 = vpop.f32.mrb[0].mxu0
      %4330 = vmatprep.mubr.f32.mxu0 0.0
      %4331 = vmatmul.mubr.f32.gmra.mrb[0].mxu0 %v4215
      %v4332 = vpop.f32.mrb[0].mxu0
      %v4333 = vadd.f32 %v4207, %v4332
      %v4334 = vpop.f32.mrb[0].mxu0
      %4335 = vmatprep.mubr.f32.mxu0 0.0
      %4336 = vmatmul.mubr.f32.gmra.mrb[0].mxu0 %v4218
      %v4337 = vpop.f32.mrb[0].mxu0
      %v4338 = vadd.f32 %v4207, %v4337
      %v4339 = vpop.f32.mrb[0].mxu0
      %4340 = vmatprep.mubr.f32.mxu0 0.0
      %4341 = vmatmul.mubr.f32.gmra.mrb[0].mxu0 %v4221
      %v4342 = vpop.f32.mrb[0].mxu0
      %v4343 = vadd.f32 %v4207, %v4342
      %v4344 = vpop.f32.mrb[0].mxu0
      %4345 = vmatprep.mubr.f32.mxu0 0.0
      %4346 = vmatmul.mubr.f32.gmra.mrb[0].mxu0 %v4224
      %v4347 = vpop.f32.mrb[0].mxu0
      %v4348 = vadd.f32 %v4207, %v4347
      %v4349 = vpop.f32.mrb[0].mxu0
      %4350 = vmatprep.mubr.f32.mxu0 0.0
      %4351 = vmatmul.mubr.f32.gmra.mrb[0].mxu0 %v4227
      %v4352 = vpop.f32.mrb[0].mxu0
      %v4353 = vadd.f32 %v4207, %v4352
      %v4354 = vpop.f32.mrb[0].mxu0
      %4355 = vmatprep.mubr.f32.mxu0 0.0
      %4356 = vmatmul.mubr.f32.gmra.mrb[0].mxu0 %v4230
      %v4357 = vpop.f32.mrb[0].mxu0
      %v4358 = vadd.f32 %v4207, %v4357
      %v4359 = vpop.f32.mrb[0].mxu0
      %4360 = vmatprep.mubr.f32.mxu0 0.0
      %4361 = vmatmul.mubr.f32.gmra.mrb[0].mxu0 %v4233
      %v4362 = vpop.f32.mrb[0].mxu0
      %v4363 = vadd.f32 %v4207, %v4362
      %v4364 = vpop.f32.mrb[0].mxu0
      %4365 = vmatprep.mubr.f32.mxu0 0.0
      %4366 = vmatmul.mubr.f32.gmra.mrb[0].mxu0 %v4236
      %v4367 = vpop.f32.mrb[0].mxu0
      %v4368 = vadd.f32 %v4207, %v4367
      %v4369 = vpop.f32.mrb[0].mxu0
      %4370 = vmatprep.mubr.f32.mxu0 0.0
      %4371 = vmatmul.mubr.f32.gmra.mrb[0].mxu0 %v4239
      %v4372 = vpop.f32.mrb[0].mxu0
      %v4373 = vadd.f32 %v4207, %v4372
      %v4374 = vpop.f32.mrb[0].mxu0
      %4375 = vmatprep.mubr.f32.mxu0 0.0
      %4376 = vmatmul.mubr.f32.gmra.mrb[0].mxu0 %v4242
      %v4377 = vpop.f32.mrb[0].mxu0
      %v4378 = vadd.f32 %v4207, %v4377
      %v4379 = vpop.f32.mrb[0].mxu0
      %4380 = vmatprep.mubr.f32.mxu0 0.0
      %4381 = vmatmul.mubr.f32.gmra.mrb[0].mxu0 %v4245
      %v4382 = vpop.f32.mrb[0].mxu0
      %v4383 = vadd.f32 %v4207, %v4382
      %v4384 = vpop.f32.mrb[0].mxu0
      %4385 = vmatprep.mubr.f32.mxu0 0.0
      %4386 = vmatmul.mubr.f32.gmra.mrb[0].mxu0 %v4248
      %v4387 = vpop.f32.mrb[0].mxu0
      %v4388 = vadd.f32 %v4207, %v4387
      %v4389 = vpop.f32.mrb[0].mxu0
      %4390 = vmatprep.mubr.f32.mxu0 0.0
      %4391 = vmatmul.mubr.f32.gmra.mrb[0].mxu0 %v4251
      %v4392 = vpop.f32.mrb[0].mxu0
      %v4393 = vadd.f32 %v4207, %v4392
      %v4394 = vpop.f32.mrb[0].mxu0
      %4395 = vmatprep.mubr.f32.mxu0 0.0
      %4396 = vmatmul.mubr.f32.gmra.mrb[0].mxu0 %v4254
      %v4397 = vpop.f32.mrb[0].mxu0
      %v4398 = vadd.f32 %v4207, %v4397
      %v4399 = vpop.f32.mrb[0].mxu0
      %4400 = vdwg.mxu0
      %vm4401 = vcmp.gt.f32.partialorder %v4323, 0.0
      %vm4402 = vcmp.gt.f32.partialorder %v4328, 0.0
      %vm4403 = vcmp.gt.f32.partialorder %v4333, 0.0
      %vm4404 = vcmp.gt.f32.partialorder %v4338, 0.0
      %vm4405 = vcmp.gt.f32.partialorder %v4343, 0.0
      %vm4406 = vcmp.gt.f32.partialorder %v4348, 0.0
      %vm4407 = vcmp.gt.f32.partialorder %v4353, 0.0
      %vm4408 = vcmp.gt.f32.partialorder %v4358, 0.0
      %vm4409 = vcmp.gt.f32.partialorder %v4363, 0.0
      %vm4410 = vcmp.gt.f32.partialorder %v4368, 0.0
      %vm4411 = vcmp.gt.f32.partialorder %v4373, 0.0
      %vm4412 = vcmp.gt.f32.partialorder %v4378, 0.0
      %vm4413 = vcmp.gt.f32.partialorder %v4383, 0.0
      %vm4414 = vcmp.gt.f32.partialorder %v4388, 0.0
      %vm4415 = vcmp.gt.f32.partialorder %v4393, 0.0
      %vm4416 = vcmp.gt.f32.partialorder %v4398, 0.0
      %v4417 = vmul.f32 %v4323, 1.442695
      %v4418 = vpow.pop %v4417
      %v4419 = vmul.f32 %v4328, 1.442695
      %v4420 = vpow.pop %v4419
      %v4421 = vmul.f32 %v4333, 1.442695
      %v4422 = vpow.pop %v4421
      %v4423 = vmul.f32 %v4338, 1.442695
      %v4424 = vpow.pop %v4423
      %v4425 = vmul.f32 %v4343, 1.442695
      %v4426 = vpow.pop %v4425
      %v4427 = vmul.f32 %v4348, 1.442695
      %v4428 = vpow.pop %v4427
      %v4429 = vmul.f32 %v4353, 1.442695
      %v4430 = vpow.pop %v4429
      %v4431 = vmul.f32 %v4358, 1.442695
      %v4432 = vpow.pop %v4431
      %v4433 = vmul.f32 %v4363, 1.442695
      %v4434 = vpow.pop %v4433
      %v4435 = vmul.f32 %v4368, 1.442695
      %v4436 = vpow.pop %v4435
      %v4437 = vmul.f32 %v4373, 1.442695
      %v4438 = vpow.pop %v4437
      %v4439 = vmul.f32 %v4378, 1.442695
      %v4440 = vpow.pop %v4439
      %v4441 = vmul.f32 %v4383, 1.442695
      %v4442 = vpow.pop %v4441
      %v4443 = vmul.f32 %v4388, 1.442695
      %v4444 = vpow.pop %v4443
      %v4445 = vmul.f32 %v4393, 1.442695
      %v4446 = vpow.pop %v4445
      %v4447 = vmul.f32 %v4398, 1.442695
      %v4448 = vpow.pop %v4447
      %v4449 = vsub.f32 %v4418, 1.0
      %v4450 = vsub.f32 %v4420, 1.0
      %v4451 = vsub.f32 %v4422, 1.0
      %v4452 = vsub.f32 %v4424, 1.0
      %v4453 = vsub.f32 %v4426, 1.0
      %v4454 = vsub.f32 %v4428, 1.0
      %v4455 = vsub.f32 %v4430, 1.0
      %v4456 = vsub.f32 %v4432, 1.0
      %v4457 = vsub.f32 %v4434, 1.0
      %v4458 = vsub.f32 %v4436, 1.0
      %v4459 = vsub.f32 %v4438, 1.0
      %v4460 = vsub.f32 %v4440, 1.0
      %v4461 = vsub.f32 %v4442, 1.0
      %v4462 = vsub.f32 %v4444, 1.0
      %v4463 = vsub.f32 %v4446, 1.0
      %v4464 = vsub.f32 %v4448, 1.0
      %v4465 = vsel %vm4401, %v4323, %v4449
      %v4466 = vsel %vm4402, %v4328, %v4450
      %v4467 = vsel %vm4403, %v4333, %v4451
      %v4468 = vsel %vm4404, %v4338, %v4452
      %v4469 = vsel %vm4405, %v4343, %v4453
      %v4470 = vsel %vm4406, %v4348, %v4454
      %v4471 = vsel %vm4407, %v4353, %v4455
      %v4472 = vsel %vm4408, %v4358, %v4456
      %v4473 = vsel %vm4409, %v4363, %v4457
      %v4474 = vsel %vm4410, %v4368, %v4458
      %v4475 = vsel %vm4411, %v4373, %v4459
      %v4476 = vsel %vm4412, %v4378, %v4460
      %v4477 = vsel %vm4413, %v4383, %v4461
      %v4478 = vsel %vm4414, %v4388, %v4462
      %v4479 = vsel %vm4415, %v4393, %v4463
      %v4480 = vsel %vm4416, %v4398, %v4464
      %s4481 = scalar_lea.vmem %s3, 32
      %v4482 = vld [vmem:[%s4481] sm:$0xff]
      %v4483 = vld [vmem:[%s4481 + $0x8] sm:$0xff]
      %v4484 = vld [vmem:[%s4481 + $0x10] sm:$0xff]
      %v4485 = vld [vmem:[%s4481 + $0x18] sm:$0xff]
      %v4486 = vlaneseq
      %v4487 = vshrl.u32 %v4486, 7
      %v4488 = vsub.s32 0, %v4487
      %v4489 = vrot.slane %v3930, %v4488
      %v4491 = vsel %vm252, %v4465, 0
      %v4494 = vsel %vm252, %v4466, 0
      %v4497 = vsel %vm252, %v4467, 0
      %v4500 = vsel %vm252, %v4468, 0
      %v4503 = vsel %vm252, %v4469, 0
      %v4506 = vsel %vm252, %v4470, 0
      %v4509 = vsel %vm252, %v4471, 0
      %v4512 = vsel %vm252, %v4472, 0
      %v4515 = vsel %vm252, %v4473, 0
      %v4518 = vsel %vm252, %v4474, 0
      %v4521 = vsel %vm252, %v4475, 0
      %v4524 = vsel %vm252, %v4476, 0
      %v4527 = vsel %vm252, %v4477, 0
      %v4530 = vsel %vm252, %v4478, 0
      %v4533 = vsel %vm252, %v4479, 0
      %v4536 = vsel %vm252, %v4480, 0
      %4538 = vmatprep.subr.mxu0 0.0
      %4539 = vmatpush1.msra.mxu0 %v4482
      %4540 = vmatprep.subr.mxu0 0.0
      %4541 = vmatpush1.msra.mxu0 %v4483
      %4542 = vmatprep.subr.mxu0 0.0
      %4543 = vmatpush1.msra.mxu0 %v4484
      %4544 = vmatprep.subr.mxu0 0.0
      %4545 = vmatpush1.msra.mxu0 %v4485
      %4546 = vmatprep.subr.mxu0 0.0
      %4547 = vmatpush1.msra.mxu0 0.0
      %4548 = vmatprep.subr.mxu0 0.0
      %4549 = vmatpush1.msra.mxu0 0.0
      %4550 = vmatprep.subr.mxu0 0.0
      %4551 = vmatpush1.msra.mxu0 0.0
      %4552 = vmatprep.subr.mxu0 0.0
      %4553 = vmatpush1.msra.mxu0 0.0
      %4554 = vmatprep.subr.mxu0 0.0
      %4555 = vmatpush1.msra.mxu0 0.0
      %4556 = vmatprep.subr.mxu0 0.0
      %4557 = vmatpush1.msra.mxu0 0.0
      %4558 = vmatprep.subr.mxu0 0.0
      %4559 = vmatpush1.msra.mxu0 0.0
      %4560 = vmatprep.subr.mxu0 0.0
      %4561 = vmatpush1.msra.mxu0 0.0
      %4562 = vmatprep.subr.mxu0 0.0
      %4563 = vmatpush1.msra.mxu0 0.0
      %4564 = vmatprep.subr.mxu0 0.0
      %4565 = vmatpush1.msra.mxu0 0.0
      %4566 = vmatprep.subr.mxu0 0.0
      %4567 = vmatpush1.msra.mxu0 0.0
      %4568 = vmatprep.subr.mxu0 0.0
      %4569 = vmatpush1.msra.mxu0 0.0
      %4570 = vmatprep.subr.mxu0 0.0
      %4571 = vmatpush1.msra.mxu0 0.0
      %4572 = vmatprep.subr.mxu0 0.0
      %4573 = vmatpush1.msra.mxu0 0.0
      %4574 = vmatprep.subr.mxu0 0.0
      %4575 = vmatpush1.msra.mxu0 0.0
      %4576 = vmatprep.subr.mxu0 0.0
      %4577 = vmatpush1.msra.mxu0 0.0
      %4578 = vmatprep.subr.mxu0 0.0
      %4579 = vmatpush1.msra.mxu0 0.0
      %4580 = vmatprep.subr.mxu0 0.0
      %4581 = vmatpush1.msra.mxu0 0.0
      %4582 = vmatprep.subr.mxu0 0.0
      %4583 = vmatpush1.msra.mxu0 0.0
      %4584 = vmatprep.subr.mxu0 0.0
      %4585 = vmatpush1.msra.mxu0 0.0
      %4586 = vmatprep.subr.mxu0 0.0
      %4587 = vmatpush1.msra.mxu0 0.0
      %4588 = vmatprep.subr.mxu0 0.0
      %4589 = vmatpush1.msra.mxu0 0.0
      %4590 = vmatprep.subr.mxu0 0.0
      %4591 = vmatpush1.msra.mxu0 0.0
      %4592 = vmatprep.subr.mxu0 0.0
      %4593 = vmatpush1.msra.mxu0 0.0
      %4594 = vmatprep.subr.mxu0 0.0
      %4595 = vmatpush1.msra.mxu0 0.0
      %4596 = vmatprep.subr.mxu0 0.0
      %4597 = vmatpush1.msra.mxu0 0.0
      %4598 = vmatprep.subr.mxu0 0.0
      %4599 = vmatpush1.msra.mxu0 0.0
      %4600 = vmatprep.subr.mxu0 0.0
      %4601 = vmatpush1.msra.mxu0 0.0
      %4602 = vmatprep.mubr.f32.mxu0 0.0
      %4603 = vmatmul.mubr.f32.gmra.mrb[0].mxu0 %v4491
      %v4604 = vpop.f32.mrb[0].mxu0
      %v4605 = vadd.f32 %v4489, %v4604
      %v4606 = vpop.f32.mrb[0].mxu0
      %4607 = vmatprep.mubr.f32.mxu0 0.0
      %4608 = vmatmul.mubr.f32.gmra.mrb[0].mxu0 %v4494
      %v4609 = vpop.f32.mrb[0].mxu0
      %v4610 = vadd.f32 %v4489, %v4609
      %v4611 = vpop.f32.mrb[0].mxu0
      %4612 = vmatprep.mubr.f32.mxu0 0.0
      %4613 = vmatmul.mubr.f32.gmra.mrb[0].mxu0 %v4497
      %v4614 = vpop.f32.mrb[0].mxu0
      %v4615 = vadd.f32 %v4489, %v4614
      %v4616 = vpop.f32.mrb[0].mxu0
      %4617 = vmatprep.mubr.f32.mxu0 0.0
      %4618 = vmatmul.mubr.f32.gmra.mrb[0].mxu0 %v4500
      %v4619 = vpop.f32.mrb[0].mxu0
      %v4620 = vadd.f32 %v4489, %v4619
      %v4621 = vpop.f32.mrb[0].mxu0
      %4622 = vmatprep.mubr.f32.mxu0 0.0
      %4623 = vmatmul.mubr.f32.gmra.mrb[0].mxu0 %v4503
      %v4624 = vpop.f32.mrb[0].mxu0
      %v4625 = vadd.f32 %v4489, %v4624
      %v4626 = vpop.f32.mrb[0].mxu0
      %4627 = vmatprep.mubr.f32.mxu0 0.0
      %4628 = vmatmul.mubr.f32.gmra.mrb[0].mxu0 %v4506
      %v4629 = vpop.f32.mrb[0].mxu0
      %v4630 = vadd.f32 %v4489, %v4629
      %v4631 = vpop.f32.mrb[0].mxu0
      %4632 = vmatprep.mubr.f32.mxu0 0.0
      %4633 = vmatmul.mubr.f32.gmra.mrb[0].mxu0 %v4509
      %v4634 = vpop.f32.mrb[0].mxu0
      %v4635 = vadd.f32 %v4489, %v4634
      %v4636 = vpop.f32.mrb[0].mxu0
      %4637 = vmatprep.mubr.f32.mxu0 0.0
      %4638 = vmatmul.mubr.f32.gmra.mrb[0].mxu0 %v4512
      %v4639 = vpop.f32.mrb[0].mxu0
      %v4640 = vadd.f32 %v4489, %v4639
      %v4641 = vpop.f32.mrb[0].mxu0
      %4642 = vmatprep.mubr.f32.mxu0 0.0
      %4643 = vmatmul.mubr.f32.gmra.mrb[0].mxu0 %v4515
      %v4644 = vpop.f32.mrb[0].mxu0
      %v4645 = vadd.f32 %v4489, %v4644
      %v4646 = vpop.f32.mrb[0].mxu0
      %4647 = vmatprep.mubr.f32.mxu0 0.0
      %4648 = vmatmul.mubr.f32.gmra.mrb[0].mxu0 %v4518
      %v4649 = vpop.f32.mrb[0].mxu0
      %v4650 = vadd.f32 %v4489, %v4649
      %v4651 = vpop.f32.mrb[0].mxu0
      %4652 = vmatprep.mubr.f32.mxu0 0.0
      %4653 = vmatmul.mubr.f32.gmra.mrb[0].mxu0 %v4521
      %v4654 = vpop.f32.mrb[0].mxu0
      %v4655 = vadd.f32 %v4489, %v4654
      %v4656 = vpop.f32.mrb[0].mxu0
      %4657 = vmatprep.mubr.f32.mxu0 0.0
      %4658 = vmatmul.mubr.f32.gmra.mrb[0].mxu0 %v4524
      %v4659 = vpop.f32.mrb[0].mxu0
      %v4660 = vadd.f32 %v4489, %v4659
      %v4661 = vpop.f32.mrb[0].mxu0
      %4662 = vmatprep.mubr.f32.mxu0 0.0
      %4663 = vmatmul.mubr.f32.gmra.mrb[0].mxu0 %v4527
      %v4664 = vpop.f32.mrb[0].mxu0
      %v4665 = vadd.f32 %v4489, %v4664
      %v4666 = vpop.f32.mrb[0].mxu0
      %4667 = vmatprep.mubr.f32.mxu0 0.0
      %4668 = vmatmul.mubr.f32.gmra.mrb[0].mxu0 %v4530
      %v4669 = vpop.f32.mrb[0].mxu0
      %v4670 = vadd.f32 %v4489, %v4669
      %v4671 = vpop.f32.mrb[0].mxu0
      %4672 = vmatprep.mubr.f32.mxu0 0.0
      %4673 = vmatmul.mubr.f32.gmra.mrb[0].mxu0 %v4533
      %v4674 = vpop.f32.mrb[0].mxu0
      %v4675 = vadd.f32 %v4489, %v4674
      %v4676 = vpop.f32.mrb[0].mxu0
      %4677 = vmatprep.mubr.f32.mxu0 0.0
      %4678 = vmatmul.mubr.f32.gmra.mrb[0].mxu0 %v4536
      %v4679 = vpop.f32.mrb[0].mxu0
      %v4680 = vadd.f32 %v4489, %v4679
      %v4681 = vpop.f32.mrb[0].mxu0
      %4682 = vdwg.mxu0
      %v4683 = vadd.f32 %v4184, %v4605
      %v4684 = vadd.f32 %v4185, %v4610
      %v4685 = vadd.f32 %v4186, %v4615
      %v4686 = vadd.f32 %v4187, %v4620
      %v4687 = vadd.f32 %v4188, %v4625
      %v4688 = vadd.f32 %v4189, %v4630
      %v4689 = vadd.f32 %v4190, %v4635
      %v4690 = vadd.f32 %v4191, %v4640
      %v4691 = vadd.f32 %v4192, %v4645
      %v4692 = vadd.f32 %v4193, %v4650
      %v4693 = vadd.f32 %v4194, %v4655
      %v4694 = vadd.f32 %v4195, %v4660
      %v4695 = vadd.f32 %v4196, %v4665
      %v4696 = vadd.f32 %v4197, %v4670
      %v4697 = vadd.f32 %v4198, %v4675
      %v4698 = vadd.f32 %v4199, %v4680
      %v4699 = vsel %vm252, %v4683, 0.0
      %4700 = vadd.xlane.f32.xlu0 %v4699
      %v4701 = vpop.xlane.xlu0 %4700
      %v4702 = vsel %vm252, %v4684, 0.0
      %4703 = vadd.xlane.f32.xlu0 %v4702
      %v4704 = vpop.xlane.xlu0 %4703
      %v4705 = vsel %vm252, %v4685, 0.0
      %4706 = vadd.xlane.f32.xlu0 %v4705
      %v4707 = vpop.xlane.xlu0 %4706
      %v4708 = vsel %vm252, %v4686, 0.0
      %4709 = vadd.xlane.f32.xlu0 %v4708
      %v4710 = vpop.xlane.xlu0 %4709
      %v4711 = vsel %vm252, %v4687, 0.0
      %4712 = vadd.xlane.f32.xlu0 %v4711
      %v4713 = vpop.xlane.xlu0 %4712
      %v4714 = vsel %vm252, %v4688, 0.0
      %4715 = vadd.xlane.f32.xlu0 %v4714
      %v4716 = vpop.xlane.xlu0 %4715
      %v4717 = vsel %vm252, %v4689, 0.0
      %4718 = vadd.xlane.f32.xlu0 %v4717
      %v4719 = vpop.xlane.xlu0 %4718
      %v4720 = vsel %vm252, %v4690, 0.0
      %4721 = vadd.xlane.f32.xlu0 %v4720
      %v4722 = vpop.xlane.xlu0 %4721
      %v4723 = vsel %vm252, %v4691, 0.0
      %4724 = vadd.xlane.f32.xlu0 %v4723
      %v4725 = vpop.xlane.xlu0 %4724
      %v4726 = vsel %vm252, %v4692, 0.0
      %4727 = vadd.xlane.f32.xlu0 %v4726
      %v4728 = vpop.xlane.xlu0 %4727
      %v4729 = vsel %vm252, %v4693, 0.0
      %4730 = vadd.xlane.f32.xlu0 %v4729
      %v4731 = vpop.xlane.xlu0 %4730
      %v4732 = vsel %vm252, %v4694, 0.0
      %4733 = vadd.xlane.f32.xlu0 %v4732
      %v4734 = vpop.xlane.xlu0 %4733
      %v4735 = vsel %vm252, %v4695, 0.0
      %4736 = vadd.xlane.f32.xlu0 %v4735
      %v4737 = vpop.xlane.xlu0 %4736
      %v4738 = vsel %vm252, %v4696, 0.0
      %4739 = vadd.xlane.f32.xlu0 %v4738
      %v4740 = vpop.xlane.xlu0 %4739
      %v4741 = vsel %vm252, %v4697, 0.0
      %4742 = vadd.xlane.f32.xlu0 %v4741
      %v4743 = vpop.xlane.xlu0 %4742
      %v4744 = vsel %vm252, %v4698, 0.0
      %4745 = vadd.xlane.f32.xlu0 %v4744
      %v4746 = vpop.xlane.xlu0 %4745
      %v4747 = vmul.f32 %v4701, %v3999
      %v4748 = vmul.f32 %v4704, %v3999
      %v4749 = vmul.f32 %v4707, %v3999
      %v4750 = vmul.f32 %v4710, %v3999
      %v4751 = vmul.f32 %v4713, %v3999
      %v4752 = vmul.f32 %v4716, %v3999
      %v4753 = vmul.f32 %v4719, %v3999
      %v4754 = vmul.f32 %v4722, %v3999
      %v4755 = vmul.f32 %v4725, %v3999
      %v4756 = vmul.f32 %v4728, %v3999
      %v4757 = vmul.f32 %v4731, %v3999
      %v4758 = vmul.f32 %v4734, %v3999
      %v4759 = vmul.f32 %v4737, %v3999
      %v4760 = vmul.f32 %v4740, %v3999
      %v4761 = vmul.f32 %v4743, %v3999
      %v4762 = vmul.f32 %v4746, %v3999
      %v4763 = vsub.f32 %v4683, %v4747
      %v4764 = vsub.f32 %v4684, %v4748
      %v4765 = vsub.f32 %v4685, %v4749
      %v4766 = vsub.f32 %v4686, %v4750
      %v4767 = vsub.f32 %v4687, %v4751
      %v4768 = vsub.f32 %v4688, %v4752
      %v4769 = vsub.f32 %v4689, %v4753
      %v4770 = vsub.f32 %v4690, %v4754
      %v4771 = vsub.f32 %v4691, %v4755
      %v4772 = vsub.f32 %v4692, %v4756
      %v4773 = vsub.f32 %v4693, %v4757
      %v4774 = vsub.f32 %v4694, %v4758
      %v4775 = vsub.f32 %v4695, %v4759
      %v4776 = vsub.f32 %v4696, %v4760
      %v4777 = vsub.f32 %v4697, %v4761
      %v4778 = vsub.f32 %v4698, %v4762
      %v4779 = vmul.f32 %v4763, %v4763
      %v4780 = vmul.f32 %v4764, %v4764
      %v4781 = vmul.f32 %v4765, %v4765
      %v4782 = vmul.f32 %v4766, %v4766
      %v4783 = vmul.f32 %v4767, %v4767
      %v4784 = vmul.f32 %v4768, %v4768
      %v4785 = vmul.f32 %v4769, %v4769
      %v4786 = vmul.f32 %v4770, %v4770
      %v4787 = vmul.f32 %v4771, %v4771
      %v4788 = vmul.f32 %v4772, %v4772
      %v4789 = vmul.f32 %v4773, %v4773
      %v4790 = vmul.f32 %v4774, %v4774
      %v4791 = vmul.f32 %v4775, %v4775
      %v4792 = vmul.f32 %v4776, %v4776
      %v4793 = vmul.f32 %v4777, %v4777
      %v4794 = vmul.f32 %v4778, %v4778
      %v4795 = vsel %vm252, %v4779, 0.0
      %4796 = vadd.xlane.f32.xlu0 %v4795
      %v4797 = vpop.xlane.xlu0 %4796
      %v4798 = vsel %vm252, %v4780, 0.0
      %4799 = vadd.xlane.f32.xlu0 %v4798
      %v4800 = vpop.xlane.xlu0 %4799
      %v4801 = vsel %vm252, %v4781, 0.0
      %4802 = vadd.xlane.f32.xlu0 %v4801
      %v4803 = vpop.xlane.xlu0 %4802
      %v4804 = vsel %vm252, %v4782, 0.0
      %4805 = vadd.xlane.f32.xlu0 %v4804
      %v4806 = vpop.xlane.xlu0 %4805
      %v4807 = vsel %vm252, %v4783, 0.0
      %4808 = vadd.xlane.f32.xlu0 %v4807
      %v4809 = vpop.xlane.xlu0 %4808
      %v4810 = vsel %vm252, %v4784, 0.0
      %4811 = vadd.xlane.f32.xlu0 %v4810
      %v4812 = vpop.xlane.xlu0 %4811
      %v4813 = vsel %vm252, %v4785, 0.0
      %4814 = vadd.xlane.f32.xlu0 %v4813
      %v4815 = vpop.xlane.xlu0 %4814
      %v4816 = vsel %vm252, %v4786, 0.0
      %4817 = vadd.xlane.f32.xlu0 %v4816
      %v4818 = vpop.xlane.xlu0 %4817
      %v4819 = vsel %vm252, %v4787, 0.0
      %4820 = vadd.xlane.f32.xlu0 %v4819
      %v4821 = vpop.xlane.xlu0 %4820
      %v4822 = vsel %vm252, %v4788, 0.0
      %4823 = vadd.xlane.f32.xlu0 %v4822
      %v4824 = vpop.xlane.xlu0 %4823
      %v4825 = vsel %vm252, %v4789, 0.0
      %4826 = vadd.xlane.f32.xlu0 %v4825
      %v4827 = vpop.xlane.xlu0 %4826
      %v4828 = vsel %vm252, %v4790, 0.0
      %4829 = vadd.xlane.f32.xlu0 %v4828
      %v4830 = vpop.xlane.xlu0 %4829
      %v4831 = vsel %vm252, %v4791, 0.0
      %4832 = vadd.xlane.f32.xlu0 %v4831
      %v4833 = vpop.xlane.xlu0 %4832
      %v4834 = vsel %vm252, %v4792, 0.0
      %4835 = vadd.xlane.f32.xlu0 %v4834
      %v4836 = vpop.xlane.xlu0 %4835
      %v4837 = vsel %vm252, %v4793, 0.0
      %4838 = vadd.xlane.f32.xlu0 %v4837
      %v4839 = vpop.xlane.xlu0 %4838
      %v4840 = vsel %vm252, %v4794, 0.0
      %4841 = vadd.xlane.f32.xlu0 %v4840
      %v4842 = vpop.xlane.xlu0 %4841
      %v4843 = vmul.f32 %v4797, %v3999
      %v4844 = vmul.f32 %v4800, %v3999
      %v4845 = vmul.f32 %v4803, %v3999
      %v4846 = vmul.f32 %v4806, %v3999
      %v4847 = vmul.f32 %v4809, %v3999
      %v4848 = vmul.f32 %v4812, %v3999
      %v4849 = vmul.f32 %v4815, %v3999
      %v4850 = vmul.f32 %v4818, %v3999
      %v4851 = vmul.f32 %v4821, %v3999
      %v4852 = vmul.f32 %v4824, %v3999
      %v4853 = vmul.f32 %v4827, %v3999
      %v4854 = vmul.f32 %v4830, %v3999
      %v4855 = vmul.f32 %v4833, %v3999
      %v4856 = vmul.f32 %v4836, %v3999
      %v4857 = vmul.f32 %v4839, %v3999
      %v4858 = vmul.f32 %v4842, %v3999
      %v4859 = vadd.f32 %v4843, 1e-05
      %v4860 = vadd.f32 %v4844, 1e-05
      %v4861 = vadd.f32 %v4845, 1e-05
      %v4862 = vadd.f32 %v4846, 1e-05
      %v4863 = vadd.f32 %v4847, 1e-05
      %v4864 = vadd.f32 %v4848, 1e-05
      %v4865 = vadd.f32 %v4849, 1e-05
      %v4866 = vadd.f32 %v4850, 1e-05
      %v4867 = vadd.f32 %v4851, 1e-05
      %v4868 = vadd.f32 %v4852, 1e-05
      %v4869 = vadd.f32 %v4853, 1e-05
      %v4870 = vadd.f32 %v4854, 1e-05
      %v4871 = vadd.f32 %v4855, 1e-05
      %v4872 = vadd.f32 %v4856, 1e-05
      %v4873 = vadd.f32 %v4857, 1e-05
      %v4874 = vadd.f32 %v4858, 1e-05
      %v4875 = vrsqrt.pop %v4859
      %v4876 = vrsqrt.pop %v4860
      %v4877 = vrsqrt.pop %v4861
      %v4878 = vrsqrt.pop %v4862
      %v4879 = vrsqrt.pop %v4863
      %v4880 = vrsqrt.pop %v4864
      %v4881 = vrsqrt.pop %v4865
      %v4882 = vrsqrt.pop %v4866
      %v4883 = vrsqrt.pop %v4867
      %v4884 = vrsqrt.pop %v4868
      %v4885 = vrsqrt.pop %v4869
      %v4886 = vrsqrt.pop %v4870
      %v4887 = vrsqrt.pop %v4871
      %v4888 = vrsqrt.pop %v4872
      %v4889 = vrsqrt.pop %v4873
      %v4890 = vrsqrt.pop %v4874
      %v4891 = vmul.f32 %v4763, %v4875
      %v4892 = vmul.f32 %v4764, %v4876
      %v4893 = vmul.f32 %v4765, %v4877
      %v4894 = vmul.f32 %v4766, %v4878
      %v4895 = vmul.f32 %v4767, %v4879
      %v4896 = vmul.f32 %v4768, %v4880
      %v4897 = vmul.f32 %v4769, %v4881
      %v4898 = vmul.f32 %v4770, %v4882
      %v4899 = vmul.f32 %v4771, %v4883
      %v4900 = vmul.f32 %v4772, %v4884
      %v4901 = vmul.f32 %v4773, %v4885
      %v4902 = vmul.f32 %v4774, %v4886
      %v4903 = vmul.f32 %v4775, %v4887
      %v4904 = vmul.f32 %v4776, %v4888
      %v4905 = vmul.f32 %v4777, %v4889
      %v4906 = vmul.f32 %v4778, %v4890
      %v4907 = vlaneseq
      %v4908 = vshrl.u32 %v4907, 7
      %v4909 = vsub.s32 0, %v4908
      %v4910 = vrot.slane %v3933, %v4909
      %v4911 = vmul.f32 %v4891, %v4910
      %v4912 = vmul.f32 %v4892, %v4910
      %v4913 = vmul.f32 %v4893, %v4910
      %v4914 = vmul.f32 %v4894, %v4910
      %v4915 = vmul.f32 %v4895, %v4910
      %v4916 = vmul.f32 %v4896, %v4910
      %v4917 = vmul.f32 %v4897, %v4910
      %v4918 = vmul.f32 %v4898, %v4910
      %v4919 = vmul.f32 %v4899, %v4910
      %v4920 = vmul.f32 %v4900, %v4910
      %v4921 = vmul.f32 %v4901, %v4910
      %v4922 = vmul.f32 %v4902, %v4910
      %v4923 = vmul.f32 %v4903, %v4910
      %v4924 = vmul.f32 %v4904, %v4910
      %v4925 = vmul.f32 %v4905, %v4910
      %v4926 = vmul.f32 %v4906, %v4910
      %v4927 = vlaneseq
      %v4928 = vshrl.u32 %v4927, 7
      %v4929 = vsub.s32 0, %v4928
      %v4930 = vrot.slane %v3934, %v4929
      %v4931 = vadd.f32 %v4911, %v4930
      %v4932 = vadd.f32 %v4912, %v4930
      %v4933 = vadd.f32 %v4913, %v4930
      %v4934 = vadd.f32 %v4914, %v4930
      %v4935 = vadd.f32 %v4915, %v4930
      %v4936 = vadd.f32 %v4916, %v4930
      %v4937 = vadd.f32 %v4917, %v4930
      %v4938 = vadd.f32 %v4918, %v4930
      %v4939 = vadd.f32 %v4919, %v4930
      %v4940 = vadd.f32 %v4920, %v4930
      %v4941 = vadd.f32 %v4921, %v4930
      %v4942 = vadd.f32 %v4922, %v4930
      %v4943 = vadd.f32 %v4923, %v4930
      %v4944 = vadd.f32 %v4924, %v4930
      %v4945 = vadd.f32 %v4925, %v4930
      %v4946 = vadd.f32 %v4926, %v4930
      %4947 = vst.msk [vmem:[%s226] sm:$0xff] %vm252, %v4931
      %4948 = vst.msk [vmem:[%s226 + $0x8] sm:$0xff] %vm252, %v4932
      %4949 = vst.msk [vmem:[%s226 + $0x10] sm:$0xff] %vm252, %v4933
      %4950 = vst.msk [vmem:[%s226 + $0x18] sm:$0xff] %vm252, %v4934
      %4951 = vst.msk [vmem:[%s226 + $0x20] sm:$0xff] %vm252, %v4935
      %4952 = vst.msk [vmem:[%s226 + $0x28] sm:$0xff] %vm252, %v4936
      %4953 = vst.msk [vmem:[%s226 + $0x30] sm:$0xff] %vm252, %v4937
      %4954 = vst.msk [vmem:[%s226 + $0x38] sm:$0xff] %vm252, %v4938
      %4955 = vst.msk [vmem:[%s226 + $0x40] sm:$0xff] %vm252, %v4939
      %4956 = vst.msk [vmem:[%s226 + $0x48] sm:$0xff] %vm252, %v4940
      %4957 = vst.msk [vmem:[%s226 + $0x50] sm:$0xff] %vm252, %v4941
      %4958 = vst.msk [vmem:[%s226 + $0x58] sm:$0xff] %vm252, %v4942
      %4959 = vst.msk [vmem:[%s226 + $0x60] sm:$0xff] %vm252, %v4943
      %4960 = vst.msk [vmem:[%s226 + $0x68] sm:$0xff] %vm252, %v4944
      %4961 = vst.msk [vmem:[%s226 + $0x70] sm:$0xff] %vm252, %v4945
      %4962 = vst.msk [vmem:[%s226 + $0x78] sm:$0xff] %vm252, %v4946
      %s4963 = smul.u32 16, %s16
      %p4964 = scmp.lt.s32.totalorder %s4963, 31
      %s4965 = scalar_select %p4964, %s4963, 31
      %s4966 = smul.addr %s4965, 8
      %s4967 = scalar_lea.vmem %s5, %s4966
      // Predicated region
      $region41: #{tpu_custom_call.1} parent=39 // pred_check
        %p4968 = pneg %p144
      $region42: #{tpu_custom_call.1} parent=39 // pred_check_branch
        %4970 = sbr.rel (%p4968) target = $region44
      $region43: #{tpu_custom_call.1} parent=39 // pred_region
        %s4971 = smul.u32 16, %s16
      $region44: #{tpu_custom_call.1} parent=39 // pred_fallthru
        _
    $region40: #{tpu_custom_call.1} parent=5 // pred_fallthru
      _
    %p4972 = scmp.le.s32.totalorder 2, %s11
    // Predicated region
    $region45: #{tpu_custom_call.1} parent=5 // pred_check
      %p4973 = pneg %p4972
    $region46: #{tpu_custom_call.1} parent=5 // pred_check_branch
      %4975 = sbr.rel (%p4973) target = $region48
    $region47: #{tpu_custom_call.1} parent=5 // pred_region
      %s4976 = ssub.s32 %s11, 2
      // Predicated region
      $region49: #{tpu_custom_call.1} parent=47 // pred_check
        %p4977 = pneg %p150
      $region50: #{tpu_custom_call.1} parent=47 // pred_check_branch
        %4979 = sbr.rel (%p4977) target = $region52
      $region51: #{tpu_custom_call.1} parent=47 // pred_region
        %s4980 = smul.u32 16, %s17
        %p4981 = scmp.lt.s32.totalorder %s4980, 31
        %s4982 = scalar_select %p4981, %s4980, 31
        %s4983 = smul.addr %s4982, 8
        %s4984 = scalar_lea.vmem %s5, %s4983
      $region52: #{tpu_custom_call.1} parent=47 // pred_fallthru
        _
    $region48: #{tpu_custom_call.1} parent=5 // pred_fallthru
      _
  $region6: #{tpu_custom_call.1} parent=0 // loop_footer
    %s15 = sadd.s32 1, %s11
  $region7: #{tpu_custom_call.1} parent=0 // loop_footer_branch
    %10 = sbr.rel target = $region3
  $region8: #{tpu_custom_call.1} parent=0 // loop_exit
    _

</llo_original>
